<compile_context>
chip_gen: v7x
topology: tpu7x:2x2x1
jax: 0.10.0
libtpu: 0.0.40
codegen_flags: <defaults>
</compile_context>

<pallas_src>
import functools

import jax
import jax.numpy as jnp
from jax.experimental import pallas as pl
from jax.experimental.pallas import tpu as pltpu


_NEG_INF = -1e30  # large finite negative (safe init for the running max)


# --------------------------------------------------------------------------
# helpers
# --------------------------------------------------------------------------
def _pick_tile(n, candidates=(512, 256, 128)):
    """Largest candidate tile that evenly divides n, else the full extent."""
    for t in candidates:
        if n % t == 0:
            return t
    return n


def _vmem_limit_bytes():
    # Use ~3/4 of physical VMEM (v5e/v6e: 128 MiB, v7x: 64 MiB) so large-N
    # configs can pick bigger tiles; harmless at small shapes.
    try:
        cap = pltpu.get_tpu_info().vmem_capacity_bytes
    except Exception:
        cap = 64 * 1024 * 1024
    return int(min(max(cap * 3 // 4, 32 * 1024 * 1024), 128 * 1024 * 1024))


def _compiler_params(dim_sems, aggressive):
    kwargs = dict(dimension_semantics=dim_sems)
    if aggressive:
        kwargs["vmem_limit_bytes"] = _vmem_limit_bytes()
    return pltpu.CompilerParams(**kwargs)


# --------------------------------------------------------------------------
# kernel 1: LayerNorm + per-head QKV projection
# --------------------------------------------------------------------------
def _ln_qkv_kernel(x_ref, g_ref, b_ref, wq_ref, wk_ref, wv_ref,
                   q_ref, k_ref, v_ref, *, heads, eps):
    # x_ref: (1, Tn, D) ; g/b: (1, D) ; w*_ref: (H, D, dh) bf16
    # q/k/v_ref: (1, H, Tn, dh) bf16
    x = x_ref[0].astype(jnp.float32)                       # (Tn, D)
    mean = jnp.mean(x, axis=-1, keepdims=True)
    xc = x - mean
    var = jnp.mean(xc * xc, axis=-1, keepdims=True)
    xn = xc * jax.lax.rsqrt(var + eps)
    xn = xn * g_ref[...] + b_ref[...]                      # affine LN, f32
    xn = xn.astype(jnp.bfloat16)                           # bf16 MXU operand

    # Static head loop; every head result is stored immediately into its own
    # contiguous output slab -> no concat, bounded live ranges.
    for h in range(heads):
        q_ref[0, h] = jnp.dot(xn, wq_ref[h],
                              preferred_element_type=jnp.float32
                              ).astype(q_ref.dtype)
        k_ref[0, h] = jnp.dot(xn, wk_ref[h],
                              preferred_element_type=jnp.float32
                              ).astype(k_ref.dtype)
        v_ref[0, h] = jnp.dot(xn, wv_ref[h],
                              preferred_element_type=jnp.float32
                              ).astype(v_ref.dtype)


# --------------------------------------------------------------------------
# kernel 2: flash attention (online softmax, KV streamed along grid axis 3)
# --------------------------------------------------------------------------
def _flash_attn_kernel(q_ref, k_ref, v_ref, o_ref, m_sc, l_sc, acc_sc):
    kv_i = pl.program_id(3)

    @pl.when(kv_i == 0)
    def _init():
        m_sc[...] = jnp.full(m_sc.shape, _NEG_INF, jnp.float32)
        l_sc[...] = jnp.zeros(l_sc.shape, jnp.float32)
        acc_sc[...] = jnp.zeros(acc_sc.shape, jnp.float32)

    q = q_ref[0, 0]                                        # (Tq, dh) bf16 (scale folded into W_q)
    k = k_ref[0, 0]                                        # (Tk, dh) bf16
    v = v_ref[0, 0]                                        # (Tk, dh) bf16

    # s = q @ k^T  (bf16 in, f32 accumulate on MXU).
    # NOTE: dh-wide contraction under-fills the MXU for small dim_head; this
    # is inherent to the per-head formulation.
    s = jax.lax.dot_general(q, k, (((1,), (1,)), ((), ())),
                            preferred_element_type=jnp.float32)   # (Tq, Tk)

    m_prev = m_sc[...]
    m_new = jnp.maximum(m_prev, jnp.max(s, axis=-1, keepdims=True))
    alpha = jnp.exp(m_prev - m_new)                        # (Tq, 1) f32
    p = jnp.exp(s - m_new)                                 # (Tq, Tk) f32
    l_sc[...] = alpha * l_sc[...] + jnp.sum(p, axis=-1, keepdims=True)
    acc_sc[...] = alpha * acc_sc[...] + jnp.dot(
        p.astype(jnp.bfloat16), v, preferred_element_type=jnp.float32)
    m_sc[...] = m_new

    @pl.when(kv_i == pl.num_programs(3) - 1)
    def _finalize():
        inv_l = pl.reciprocal(l_sc[...], approx=True)      # EUP vrcp
        o_ref[0, 0] = (acc_sc[...] * inv_l).astype(o_ref.dtype)


# --------------------------------------------------------------------------
# kernel 3: output projection, accumulated over heads (no transpose/concat)
# --------------------------------------------------------------------------
def _out_proj_kernel(a_ref, w_ref, o_ref, *, heads):
    # a_ref: (1, H, Tn, dh) bf16 ; w_ref: (H, dh, D) bf16 ; o_ref: (1, Tn, D)
    tn = a_ref.shape[2]
    d = o_ref.shape[2]
    acc = jnp.zeros((tn, d), jnp.float32)
    for h in range(heads):
        acc = acc + jnp.dot(a_ref[0, h], w_ref[h],
                            preferred_element_type=jnp.float32)
    o_ref[0] = acc.astype(o_ref.dtype)


# --------------------------------------------------------------------------
# wrapper
# --------------------------------------------------------------------------
def _attention_pallas_impl(x, gamma, beta, w_qkv, w_out, *, heads, dim_head,
                           eps, aggressive):
    B, N, D = x.shape
    inner = heads * dim_head
    assert w_qkv.shape == (D, 3 * inner)
    assert w_out.shape == (inner, D)
    scale = dim_head ** -0.5

    # ---- host-side one-time weight prep: head-major layout, bf16 ----
    w_q, w_k, w_v = jnp.split(w_qkv, 3, axis=-1)           # (D, inner) each

    def to_heads(w):                                       # (D, inner) -> (H, D, dh)
        return w.reshape(D, heads, dim_head).transpose(1, 0, 2)

    wq_h = (to_heads(w_q) * scale).astype(jnp.bfloat16)    # fold 1/sqrt(dh) into W_q
    wk_h = to_heads(w_k).astype(jnp.bfloat16)
    wv_h = to_heads(w_v).astype(jnp.bfloat16)
    wo_h = w_out.reshape(heads, dim_head, D).astype(jnp.bfloat16)

    gamma2 = gamma.reshape(1, D).astype(jnp.float32)
    beta2 = beta.reshape(1, D).astype(jnp.float32)

    # ---- tiling over the sequence dimension ----
    tn = _pick_tile(N)                       # LN/QKV & out-proj row tile
    tq = _pick_tile(N, (256, 128))           # flash q-row tile
    tk = _pick_tile(N, (512, 256, 128))      # flash kv tile
    n_tn, n_tq, n_tk = N // tn, N // tq, N // tk

    def const_spec(shape):
        # Grid-invariant operands: single-buffer when supported.
        if aggressive:
            return pl.BlockSpec(shape, lambda *idx: (0,) * len(shape),
                                pipeline_mode=pl.Buffered(1))
        return pl.BlockSpec(shape, lambda *idx: (0,) * len(shape))

    bf16_bytes = 2

    # ---------------- kernel 1: LN + QKV ----------------
    qkv_shape = jax.ShapeDtypeStruct((B, heads, N, dim_head), jnp.bfloat16)
    ln_qkv = pl.pallas_call(
        functools.partial(_ln_qkv_kernel, heads=heads, eps=eps),
        out_shape=(qkv_shape, qkv_shape, qkv_shape),
        grid_spec=pltpu.PrefetchScalarGridSpec(
            num_scalar_prefetch=0,
            grid=(B, n_tn),
            in_specs=[
                pl.BlockSpec((1, tn, D), lambda b, ni: (b, ni, 0)),    # x
                const_spec((1, D)),                                    # gamma
                const_spec((1, D)),                                    # beta
                const_spec((heads, D, dim_head)),                      # W_q (scaled)
                const_spec((heads, D, dim_head)),                      # W_k
                const_spec((heads, D, dim_head)),                      # W_v
            ],
            out_specs=(
                pl.BlockSpec((1, heads, tn, dim_head), lambda b, ni: (b, 0, ni, 0)),
                pl.BlockSpec((1, heads, tn, dim_head), lambda b, ni: (b, 0, ni, 0)),
                pl.BlockSpec((1, heads, tn, dim_head), lambda b, ni: (b, 0, ni, 0)),
            ),
        ),
        compiler_params=_compiler_params(("parallel", "parallel"), aggressive),
        cost_estimate=(pl.CostEstimate(
            flops=2 * B * N * D * 3 * inner,
            transcendentals=B * N,
            bytes_accessed=(x.size * x.dtype.itemsize
                            + 3 * heads * D * dim_head * bf16_bytes
                            + 3 * B * heads * N * dim_head * bf16_bytes))
                       if aggressive else None),
    )
    q, k, v = ln_qkv(x, gamma2, beta2, wq_h, wk_h, wv_h)

    # ---------------- kernel 2: flash attention ----------------
    flash = pl.pallas_call(
        _flash_attn_kernel,
        out_shape=jax.ShapeDtypeStruct((B, heads, N, dim_head), jnp.bfloat16),
        grid_spec=pltpu.PrefetchScalarGridSpec(
            num_scalar_prefetch=0,
            grid=(B, heads, n_tq, n_tk),
            in_specs=[
                pl.BlockSpec((1, 1, tq, dim_head),
                             lambda b, h, qi, ki: (b, h, qi, 0)),      # q
                pl.BlockSpec((1, 1, tk, dim_head),
                             lambda b, h, qi, ki: (b, h, ki, 0)),      # k
                pl.BlockSpec((1, 1, tk, dim_head),
                             lambda b, h, qi, ki: (b, h, ki, 0)),      # v
            ],
            out_specs=pl.BlockSpec((1, 1, tq, dim_head),
                                   lambda b, h, qi, ki: (b, h, qi, 0)),
            scratch_shapes=[
                pltpu.VMEM((tq, 1), jnp.float32),          # running max
                pltpu.VMEM((tq, 1), jnp.float32),          # running sum
                pltpu.VMEM((tq, dim_head), jnp.float32),   # output accumulator
            ],
        ),
        compiler_params=_compiler_params(
            ("parallel", "parallel", "parallel", "arbitrary"), aggressive),
        cost_estimate=(pl.CostEstimate(
            flops=4 * B * heads * N * N * dim_head,
            transcendentals=B * heads * N * N,
            bytes_accessed=2 * B * heads * N * dim_head * bf16_bytes * (1 + n_tq))
                       if aggressive else None),
    )
    attn_out = flash(q, k, v)

    # ---------------- kernel 3: output projection ----------------
    out_proj = pl.pallas_call(
        functools.partial(_out_proj_kernel, heads=heads),
        out_shape=jax.ShapeDtypeStruct((B, N, D), x.dtype),
        grid_spec=pltpu.PrefetchScalarGridSpec(
            num_scalar_prefetch=0,
            grid=(B, n_tn),
            in_specs=[
                pl.BlockSpec((1, heads, tn, dim_head),
                             lambda b, ni: (b, 0, ni, 0)),             # attn out
                const_spec((heads, dim_head, D)),                      # W_out (head-major)
            ],
            out_specs=pl.BlockSpec((1, tn, D), lambda b, ni: (b, ni, 0)),
        ),
        compiler_params=_compiler_params(("parallel", "parallel"), aggressive),
        cost_estimate=(pl.CostEstimate(
            flops=2 * B * N * inner * D,
            transcendentals=0,
            bytes_accessed=(B * heads * N * dim_head * bf16_bytes
                            + inner * D * bf16_bytes
                            + B * N * D * x.dtype.itemsize))
                       if aggressive else None),
    )
    return out_proj(attn_out, wo_h)


def attention_pallas(x, gamma, beta, w_qkv, w_out, *, heads, dim_head, eps=1e-5):
    kwargs = dict(heads=heads, dim_head=dim_head, eps=eps)
    try:
        return _attention_pallas_impl(x, gamma, beta, w_qkv, w_out,
                                      aggressive=True, **kwargs)
    except Exception:
        # Conservative fallback: identical math, but without the optional
        # knobs (single-buffered const specs / vmem limit / cost estimates)
        # in case this JAX build rejects any of them.
        return _attention_pallas_impl(x, gamma, beta, w_qkv, w_out,
                                      aggressive=False, **kwargs)


# --------------------------------------------------------------------------
# pure-JAX reference mirroring the PyTorch forward (f32)
# --------------------------------------------------------------------------
def attention_reference(x, gamma, beta, w_qkv, w_out, *, heads, dim_head,
                        eps=1e-5):
    x = x.astype(jnp.float32)
    mean = jnp.mean(x, axis=-1, keepdims=True)
    var = jnp.mean((x - mean) ** 2, axis=-1, keepdims=True)
    xn = (x - mean) / jnp.sqrt(var + eps) * gamma + beta
    qkv = xn @ w_qkv
    inner = heads * dim_head
    q, k, v = qkv[..., :inner], qkv[..., inner:2 * inner], qkv[..., 2 * inner:]
    B, N, _ = x.shape

    def split(t):
        return t.reshape(B, N, heads, dim_head).transpose(0, 2, 1, 3)

    q, k, v = split(q), split(k), split(v)
    dots = jnp.einsum('bhnd,bhmd->bhnm', q, k) * (dim_head ** -0.5)
    attn = jax.nn.softmax(dots, axis=-1)
    out = jnp.einsum('bhnm,bhmd->bhnd', attn, v)
    out = out.transpose(0, 2, 1, 3).reshape(B, N, inner)
    return out @ w_out


if __name__ == "__main__":
    # Small shapes consistent with the module (dim_head matches the default).
    B, N, dim = 2, 8, 32
    heads, dim_head = 4, 64
    inner = heads * dim_head

    key = jax.random.PRNGKey(0)
    kx, kq, ko = jax.random.split(key, 3)

    x = jax.random.normal(kx, (B, N, dim), dtype=jnp.float32)
    gamma = jnp.ones((dim,), jnp.float32)
    beta = jnp.zeros((dim,), jnp.float32)
    w_qkv = jax.random.normal(kq, (dim, 3 * inner), jnp.float32) * (dim ** -0.5)
    w_out = jax.random.normal(ko, (inner, dim), jnp.float32) * (inner ** -0.5)

    out = attention_pallas(x, gamma, beta, w_qkv, w_out,
                           heads=heads, dim_head=dim_head)
    out = jax.block_until_ready(out)

    ref = attention_reference(x, gamma, beta, w_qkv, w_out,
                              heads=heads, dim_head=dim_head)
    assert out.shape == (B, N, dim)
    # bf16 MXU operands (f32 accumulation) -> compare with a loose tolerance.
    rel_err = jnp.linalg.norm(out.astype(jnp.float32) - ref) / (
        jnp.linalg.norm(ref) + 1e-12)
    assert rel_err < 3e-2, f"mismatch vs reference: rel_err={rel_err}"

    print("KERNEL_OK")
</pallas_src>

<mosaic_0001>
module attributes {stable_mosaic.version = 11 : i64} {
  func.func @_ln_qkv_kernel(%arg0: i32, %arg1: i32, %arg2: memref<1x8x32xf32, #tpu.memory_space<vmem>>, %arg3: memref<1x32xf32, #tpu.memory_space<vmem>>, %arg4: memref<1x32xf32, #tpu.memory_space<vmem>>, %arg5: memref<4x32x64xbf16, #tpu.memory_space<vmem>>, %arg6: memref<4x32x64xbf16, #tpu.memory_space<vmem>>, %arg7: memref<4x32x64xbf16, #tpu.memory_space<vmem>>, %arg8: memref<1x4x8x64xbf16, #tpu.memory_space<vmem>>, %arg9: memref<1x4x8x64xbf16, #tpu.memory_space<vmem>>, %arg10: memref<1x4x8x64xbf16, #tpu.memory_space<vmem>>) attributes {dimension_semantics = [#tpu.dimension_semantics<parallel>, #tpu.dimension_semantics<parallel>], iteration_bounds = array<i64: 2, 1>, scalar_prefetch = 0 : i64, scratch_operands = 0 : i64, tpu.core_type = #tpu.core_type<tc>, window_params = [{transform_indices = @transform_0, window_bounds = array<i64: 1, 8, 32>}, {pipeline_mode = #tpu.pipeline_mode<synchronous>, transform_indices = @transform_1, window_bounds = array<i64: 1, 32>}, {pipeline_mode = #tpu.pipeline_mode<synchronous>, transform_indices = @transform_2, window_bounds = array<i64: 1, 32>}, {pipeline_mode = #tpu.pipeline_mode<synchronous>, transform_indices = @transform_3, window_bounds = array<i64: 4, 32, 64>}, {pipeline_mode = #tpu.pipeline_mode<synchronous>, transform_indices = @transform_4, window_bounds = array<i64: 4, 32, 64>}, {pipeline_mode = #tpu.pipeline_mode<synchronous>, transform_indices = @transform_5, window_bounds = array<i64: 4, 32, 64>}, {transform_indices = @transform_6, window_bounds = array<i64: 1, 4, 8, 64>}, {transform_indices = @transform_7, window_bounds = array<i64: 1, 4, 8, 64>}, {transform_indices = @transform_8, window_bounds = array<i64: 1, 4, 8, 64>}]} {
    %c0 = arith.constant 0 : index
    %c0_0 = arith.constant 0 : index
    %c0_1 = arith.constant 0 : index
    %0 = vector.load %arg2[%c0, %c0_0, %c0_1] : memref<1x8x32xf32, #tpu.memory_space<vmem>>, vector<1x8x32xf32>
    %1 = vector.shape_cast %0 : vector<1x8x32xf32> to vector<8x32xf32>
    %cst = arith.constant dense<0.000000e+00> : vector<8xf32>
    %2 = vector.multi_reduction <add>, %1, %cst [1] : vector<8x32xf32> to vector<8xf32>
    %3 = vector.shape_cast %2 : vector<8xf32> to vector<8x1xf32>
    %cst_2 = arith.constant 3.200000e+01 : f32
    %4 = vector.broadcast %cst_2 : f32 to vector<8x1xf32>
    %5 = arith.divf %3, %4 : vector<8x1xf32>
    %6 = vector.broadcast %5 : vector<8x1xf32> to vector<8x32xf32>
    %7 = arith.subf %1, %6 : vector<8x32xf32>
    %8 = arith.mulf %7, %7 : vector<8x32xf32>
    %cst_3 = arith.constant dense<0.000000e+00> : vector<8xf32>
    %9 = vector.multi_reduction <add>, %8, %cst_3 [1] : vector<8x32xf32> to vector<8xf32>
    %10 = vector.shape_cast %9 : vector<8xf32> to vector<8x1xf32>
    %cst_4 = arith.constant 3.200000e+01 : f32
    %11 = vector.broadcast %cst_4 : f32 to vector<8x1xf32>
    %12 = arith.divf %10, %11 : vector<8x1xf32>
    %cst_5 = arith.constant 9.99999974E-6 : f32
    %13 = vector.broadcast %cst_5 : f32 to vector<8x1xf32>
    %14 = arith.addf %12, %13 : vector<8x1xf32>
    %15 = math.rsqrt %14 : vector<8x1xf32>
    %16 = vector.broadcast %15 : vector<8x1xf32> to vector<8x32xf32>
    %17 = arith.mulf %7, %16 : vector<8x32xf32>
    %c0_6 = arith.constant 0 : index
    %c0_7 = arith.constant 0 : index
    %18 = vector.load %arg3[%c0_6, %c0_7] : memref<1x32xf32, #tpu.memory_space<vmem>>, vector<1x32xf32>
    %19 = vector.broadcast %18 : vector<1x32xf32> to vector<8x32xf32>
    %20 = arith.mulf %17, %19 : vector<8x32xf32>
    %c0_8 = arith.constant 0 : index
    %c0_9 = arith.constant 0 : index
    %21 = vector.load %arg4[%c0_8, %c0_9] : memref<1x32xf32, #tpu.memory_space<vmem>>, vector<1x32xf32>
    %22 = vector.broadcast %21 : vector<1x32xf32> to vector<8x32xf32>
    %23 = arith.addf %20, %22 : vector<8x32xf32>
    %24 = arith.truncf %23 : vector<8x32xf32> to vector<8x32xbf16>
    %c0_10 = arith.constant 0 : index
    %c0_11 = arith.constant 0 : index
    %c0_12 = arith.constant 0 : index
    %25 = vector.load %arg5[%c0_10, %c0_11, %c0_12] : memref<4x32x64xbf16, #tpu.memory_space<vmem>>, vector<1x32x64xbf16>
    %26 = vector.shape_cast %25 : vector<1x32x64xbf16> to vector<32x64xbf16>
    %cst_13 = arith.constant dense<0.000000e+00> : vector<8x64xf32>
    %27 = tpu.matmul %24, %26, %cst_13 {dimension_numbers = #tpu.dot_dimension_numbers<[1], [0], [0], [1], [0, 0, 1, 1], [], []>} : vector<8x32xbf16>, vector<32x64xbf16>, vector<8x64xf32> -> vector<8x64xf32>
    %28 = arith.truncf %27 : vector<8x64xf32> to vector<8x64xbf16>
    %c0_14 = arith.constant 0 : index
    %c0_15 = arith.constant 0 : index
    %c0_16 = arith.constant 0 : index
    %c0_17 = arith.constant 0 : index
    %29 = vector.load %arg8[%c0_14, %c0_15, %c0_16, %c0_17] : memref<1x4x8x64xbf16, #tpu.memory_space<vmem>>, vector<1x1x8x64xbf16>
    %30 = vector.shape_cast %29 : vector<1x1x8x64xbf16> to vector<8x64xbf16>
    %31 = vector.shape_cast %28 : vector<8x64xbf16> to vector<1x1x8x64xbf16>
    tpu.vector_store %arg8[%c0_14, %c0_15, %c0_16, %c0_17], %31 {strides = array<i32>} : memref<1x4x8x64xbf16, #tpu.memory_space<vmem>>, vector<1x1x8x64xbf16>,
    %c0_18 = arith.constant 0 : index
    %c0_19 = arith.constant 0 : index
    %c0_20 = arith.constant 0 : index
    %32 = vector.load %arg6[%c0_18, %c0_19, %c0_20] : memref<4x32x64xbf16, #tpu.memory_space<vmem>>, vector<1x32x64xbf16>
    %33 = vector.shape_cast %32 : vector<1x32x64xbf16> to vector<32x64xbf16>
    %cst_21 = arith.constant dense<0.000000e+00> : vector<8x64xf32>
    %34 = tpu.matmul %24, %33, %cst_21 {dimension_numbers = #tpu.dot_dimension_numbers<[1], [0], [0], [1], [0, 0, 1, 1], [], []>} : vector<8x32xbf16>, vector<32x64xbf16>, vector<8x64xf32> -> vector<8x64xf32>
    %35 = arith.truncf %34 : vector<8x64xf32> to vector<8x64xbf16>
    %c0_22 = arith.constant 0 : index
    %c0_23 = arith.constant 0 : index
    %c0_24 = arith.constant 0 : index
    %c0_25 = arith.constant 0 : index
    %36 = vector.load %arg9[%c0_22, %c0_23, %c0_24, %c0_25] : memref<1x4x8x64xbf16, #tpu.memory_space<vmem>>, vector<1x1x8x64xbf16>
    %37 = vector.shape_cast %36 : vector<1x1x8x64xbf16> to vector<8x64xbf16>
    %38 = vector.shape_cast %35 : vector<8x64xbf16> to vector<1x1x8x64xbf16>
    tpu.vector_store %arg9[%c0_22, %c0_23, %c0_24, %c0_25], %38 {strides = array<i32>} : memref<1x4x8x64xbf16, #tpu.memory_space<vmem>>, vector<1x1x8x64xbf16>,
    %c0_26 = arith.constant 0 : index
    %c0_27 = arith.constant 0 : index
    %c0_28 = arith.constant 0 : index
    %39 = vector.load %arg7[%c0_26, %c0_27, %c0_28] : memref<4x32x64xbf16, #tpu.memory_space<vmem>>, vector<1x32x64xbf16>
    %40 = vector.shape_cast %39 : vector<1x32x64xbf16> to vector<32x64xbf16>
    %cst_29 = arith.constant dense<0.000000e+00> : vector<8x64xf32>
    %41 = tpu.matmul %24, %40, %cst_29 {dimension_numbers = #tpu.dot_dimension_numbers<[1], [0], [0], [1], [0, 0, 1, 1], [], []>} : vector<8x32xbf16>, vector<32x64xbf16>, vector<8x64xf32> -> vector<8x64xf32>
    %42 = arith.truncf %41 : vector<8x64xf32> to vector<8x64xbf16>
    %c0_30 = arith.constant 0 : index
    %c0_31 = arith.constant 0 : index
    %c0_32 = arith.constant 0 : index
    %c0_33 = arith.constant 0 : index
    %43 = vector.load %arg10[%c0_30, %c0_31, %c0_32, %c0_33] : memref<1x4x8x64xbf16, #tpu.memory_space<vmem>>, vector<1x1x8x64xbf16>
    %44 = vector.shape_cast %43 : vector<1x1x8x64xbf16> to vector<8x64xbf16>
    %45 = vector.shape_cast %42 : vector<8x64xbf16> to vector<1x1x8x64xbf16>
    tpu.vector_store %arg10[%c0_30, %c0_31, %c0_32, %c0_33], %45 {strides = array<i32>} : memref<1x4x8x64xbf16, #tpu.memory_space<vmem>>, vector<1x1x8x64xbf16>,
    %c1 = arith.constant 1 : index
    %c0_34 = arith.constant 0 : index
    %c0_35 = arith.constant 0 : index
    %46 = vector.load %arg5[%c1, %c0_34, %c0_35] : memref<4x32x64xbf16, #tpu.memory_space<vmem>>, vector<1x32x64xbf16>
    %47 = vector.shape_cast %46 : vector<1x32x64xbf16> to vector<32x64xbf16>
    %cst_36 = arith.constant dense<0.000000e+00> : vector<8x64xf32>
    %48 = tpu.matmul %24, %47, %cst_36 {dimension_numbers = #tpu.dot_dimension_numbers<[1], [0], [0], [1], [0, 0, 1, 1], [], []>} : vector<8x32xbf16>, vector<32x64xbf16>, vector<8x64xf32> -> vector<8x64xf32>
    %49 = arith.truncf %48 : vector<8x64xf32> to vector<8x64xbf16>
    %c0_37 = arith.constant 0 : index
    %c1_38 = arith.constant 1 : index
    %c0_39 = arith.constant 0 : index
    %c0_40 = arith.constant 0 : index
    %50 = vector.load %arg8[%c0_37, %c1_38, %c0_39, %c0_40] : memref<1x4x8x64xbf16, #tpu.memory_space<vmem>>, vector<1x1x8x64xbf16>
    %51 = vector.shape_cast %50 : vector<1x1x8x64xbf16> to vector<8x64xbf16>
    %52 = vector.shape_cast %49 : vector<8x64xbf16> to vector<1x1x8x64xbf16>
    tpu.vector_store %arg8[%c0_37, %c1_38, %c0_39, %c0_40], %52 {strides = array<i32>} : memref<1x4x8x64xbf16, #tpu.memory_space<vmem>>, vector<1x1x8x64xbf16>,
    %c1_41 = arith.constant 1 : index
    %c0_42 = arith.constant 0 : index
    %c0_43 = arith.constant 0 : index
    %53 = vector.load %arg6[%c1_41, %c0_42, %c0_43] : memref<4x32x64xbf16, #tpu.memory_space<vmem>>, vector<1x32x64xbf16>
    %54 = vector.shape_cast %53 : vector<1x32x64xbf16> to vector<32x64xbf16>
    %cst_44 = arith.constant dense<0.000000e+00> : vector<8x64xf32>
    %55 = tpu.matmul %24, %54, %cst_44 {dimension_numbers = #tpu.dot_dimension_numbers<[1], [0], [0], [1], [0, 0, 1, 1], [], []>} : vector<8x32xbf16>, vector<32x64xbf16>, vector<8x64xf32> -> vector<8x64xf32>
    %56 = arith.truncf %55 : vector<8x64xf32> to vector<8x64xbf16>
    %c0_45 = arith.constant 0 : index
    %c1_46 = arith.constant 1 : index
    %c0_47 = arith.constant 0 : index
    %c0_48 = arith.constant 0 : index
    %57 = vector.load %arg9[%c0_45, %c1_46, %c0_47, %c0_48] : memref<1x4x8x64xbf16, #tpu.memory_space<vmem>>, vector<1x1x8x64xbf16>
    %58 = vector.shape_cast %57 : vector<1x1x8x64xbf16> to vector<8x64xbf16>
    %59 = vector.shape_cast %56 : vector<8x64xbf16> to vector<1x1x8x64xbf16>
    tpu.vector_store %arg9[%c0_45, %c1_46, %c0_47, %c0_48], %59 {strides = array<i32>} : memref<1x4x8x64xbf16, #tpu.memory_space<vmem>>, vector<1x1x8x64xbf16>,
    %c1_49 = arith.constant 1 : index
    %c0_50 = arith.constant 0 : index
    %c0_51 = arith.constant 0 : index
    %60 = vector.load %arg7[%c1_49, %c0_50, %c0_51] : memref<4x32x64xbf16, #tpu.memory_space<vmem>>, vector<1x32x64xbf16>
    %61 = vector.shape_cast %60 : vector<1x32x64xbf16> to vector<32x64xbf16>
    %cst_52 = arith.constant dense<0.000000e+00> : vector<8x64xf32>
    %62 = tpu.matmul %24, %61, %cst_52 {dimension_numbers = #tpu.dot_dimension_numbers<[1], [0], [0], [1], [0, 0, 1, 1], [], []>} : vector<8x32xbf16>, vector<32x64xbf16>, vector<8x64xf32> -> vector<8x64xf32>
    %63 = arith.truncf %62 : vector<8x64xf32> to vector<8x64xbf16>
    %c0_53 = arith.constant 0 : index
    %c1_54 = arith.constant 1 : index
    %c0_55 = arith.constant 0 : index
    %c0_56 = arith.constant 0 : index
    %64 = vector.load %arg10[%c0_53, %c1_54, %c0_55, %c0_56] : memref<1x4x8x64xbf16, #tpu.memory_space<vmem>>, vector<1x1x8x64xbf16>
    %65 = vector.shape_cast %64 : vector<1x1x8x64xbf16> to vector<8x64xbf16>
    %66 = vector.shape_cast %63 : vector<8x64xbf16> to vector<1x1x8x64xbf16>
    tpu.vector_store %arg10[%c0_53, %c1_54, %c0_55, %c0_56], %66 {strides = array<i32>} : memref<1x4x8x64xbf16, #tpu.memory_space<vmem>>, vector<1x1x8x64xbf16>,
    %c2 = arith.constant 2 : index
    %c0_57 = arith.constant 0 : index
    %c0_58 = arith.constant 0 : index
    %67 = vector.load %arg5[%c2, %c0_57, %c0_58] : memref<4x32x64xbf16, #tpu.memory_space<vmem>>, vector<1x32x64xbf16>
    %68 = vector.shape_cast %67 : vector<1x32x64xbf16> to vector<32x64xbf16>
    %cst_59 = arith.constant dense<0.000000e+00> : vector<8x64xf32>
    %69 = tpu.matmul %24, %68, %cst_59 {dimension_numbers = #tpu.dot_dimension_numbers<[1], [0], [0], [1], [0, 0, 1, 1], [], []>} : vector<8x32xbf16>, vector<32x64xbf16>, vector<8x64xf32> -> vector<8x64xf32>
    %70 = arith.truncf %69 : vector<8x64xf32> to vector<8x64xbf16>
    %c0_60 = arith.constant 0 : index
    %c2_61 = arith.constant 2 : index
    %c0_62 = arith.constant 0 : index
    %c0_63 = arith.constant 0 : index
    %71 = vector.load %arg8[%c0_60, %c2_61, %c0_62, %c0_63] : memref<1x4x8x64xbf16, #tpu.memory_space<vmem>>, vector<1x1x8x64xbf16>
    %72 = vector.shape_cast %71 : vector<1x1x8x64xbf16> to vector<8x64xbf16>
    %73 = vector.shape_cast %70 : vector<8x64xbf16> to vector<1x1x8x64xbf16>
    tpu.vector_store %arg8[%c0_60, %c2_61, %c0_62, %c0_63], %73 {strides = array<i32>} : memref<1x4x8x64xbf16, #tpu.memory_space<vmem>>, vector<1x1x8x64xbf16>,
    %c2_64 = arith.constant 2 : index
    %c0_65 = arith.constant 0 : index
    %c0_66 = arith.constant 0 : index
    %74 = vector.load %arg6[%c2_64, %c0_65, %c0_66] : memref<4x32x64xbf16, #tpu.memory_space<vmem>>, vector<1x32x64xbf16>
    %75 = vector.shape_cast %74 : vector<1x32x64xbf16> to vector<32x64xbf16>
    %cst_67 = arith.constant dense<0.000000e+00> : vector<8x64xf32>
    %76 = tpu.matmul %24, %75, %cst_67 {dimension_numbers = #tpu.dot_dimension_numbers<[1], [0], [0], [1], [0, 0, 1, 1], [], []>} : vector<8x32xbf16>, vector<32x64xbf16>, vector<8x64xf32> -> vector<8x64xf32>
    %77 = arith.truncf %76 : vector<8x64xf32> to vector<8x64xbf16>
    %c0_68 = arith.constant 0 : index
    %c2_69 = arith.constant 2 : index
    %c0_70 = arith.constant 0 : index
    %c0_71 = arith.constant 0 : index
    %78 = vector.load %arg9[%c0_68, %c2_69, %c0_70, %c0_71] : memref<1x4x8x64xbf16, #tpu.memory_space<vmem>>, vector<1x1x8x64xbf16>
    %79 = vector.shape_cast %78 : vector<1x1x8x64xbf16> to vector<8x64xbf16>
    %80 = vector.shape_cast %77 : vector<8x64xbf16> to vector<1x1x8x64xbf16>
    tpu.vector_store %arg9[%c0_68, %c2_69, %c0_70, %c0_71], %80 {strides = array<i32>} : memref<1x4x8x64xbf16, #tpu.memory_space<vmem>>, vector<1x1x8x64xbf16>,
    %c2_72 = arith.constant 2 : index
    %c0_73 = arith.constant 0 : index
    %c0_74 = arith.constant 0 : index
    %81 = vector.load %arg7[%c2_72, %c0_73, %c0_74] : memref<4x32x64xbf16, #tpu.memory_space<vmem>>, vector<1x32x64xbf16>
    %82 = vector.shape_cast %81 : vector<1x32x64xbf16> to vector<32x64xbf16>
    %cst_75 = arith.constant dense<0.000000e+00> : vector<8x64xf32>
    %83 = tpu.matmul %24, %82, %cst_75 {dimension_numbers = #tpu.dot_dimension_numbers<[1], [0], [0], [1], [0, 0, 1, 1], [], []>} : vector<8x32xbf16>, vector<32x64xbf16>, vector<8x64xf32> -> vector<8x64xf32>
    %84 = arith.truncf %83 : vector<8x64xf32> to vector<8x64xbf16>
    %c0_76 = arith.constant 0 : index
    %c2_77 = arith.constant 2 : index
    %c0_78 = arith.constant 0 : index
    %c0_79 = arith.constant 0 : index
    %85 = vector.load %arg10[%c0_76, %c2_77, %c0_78, %c0_79] : memref<1x4x8x64xbf16, #tpu.memory_space<vmem>>, vector<1x1x8x64xbf16>
    %86 = vector.shape_cast %85 : vector<1x1x8x64xbf16> to vector<8x64xbf16>
    %87 = vector.shape_cast %84 : vector<8x64xbf16> to vector<1x1x8x64xbf16>
    tpu.vector_store %arg10[%c0_76, %c2_77, %c0_78, %c0_79], %87 {strides = array<i32>} : memref<1x4x8x64xbf16, #tpu.memory_space<vmem>>, vector<1x1x8x64xbf16>,
    %c3 = arith.constant 3 : index
    %c0_80 = arith.constant 0 : index
    %c0_81 = arith.constant 0 : index
    %88 = vector.load %arg5[%c3, %c0_80, %c0_81] : memref<4x32x64xbf16, #tpu.memory_space<vmem>>, vector<1x32x64xbf16>
    %89 = vector.shape_cast %88 : vector<1x32x64xbf16> to vector<32x64xbf16>
    %cst_82 = arith.constant dense<0.000000e+00> : vector<8x64xf32>
    %90 = tpu.matmul %24, %89, %cst_82 {dimension_numbers = #tpu.dot_dimension_numbers<[1], [0], [0], [1], [0, 0, 1, 1], [], []>} : vector<8x32xbf16>, vector<32x64xbf16>, vector<8x64xf32> -> vector<8x64xf32>
    %91 = arith.truncf %90 : vector<8x64xf32> to vector<8x64xbf16>
    %c0_83 = arith.constant 0 : index
    %c3_84 = arith.constant 3 : index
    %c0_85 = arith.constant 0 : index
    %c0_86 = arith.constant 0 : index
    %92 = vector.load %arg8[%c0_83, %c3_84, %c0_85, %c0_86] : memref<1x4x8x64xbf16, #tpu.memory_space<vmem>>, vector<1x1x8x64xbf16>
    %93 = vector.shape_cast %92 : vector<1x1x8x64xbf16> to vector<8x64xbf16>
    %94 = vector.shape_cast %91 : vector<8x64xbf16> to vector<1x1x8x64xbf16>
    tpu.vector_store %arg8[%c0_83, %c3_84, %c0_85, %c0_86], %94 {strides = array<i32>} : memref<1x4x8x64xbf16, #tpu.memory_space<vmem>>, vector<1x1x8x64xbf16>,
    %c3_87 = arith.constant 3 : index
    %c0_88 = arith.constant 0 : index
    %c0_89 = arith.constant 0 : index
    %95 = vector.load %arg6[%c3_87, %c0_88, %c0_89] : memref<4x32x64xbf16, #tpu.memory_space<vmem>>, vector<1x32x64xbf16>
    %96 = vector.shape_cast %95 : vector<1x32x64xbf16> to vector<32x64xbf16>
    %cst_90 = arith.constant dense<0.000000e+00> : vector<8x64xf32>
    %97 = tpu.matmul %24, %96, %cst_90 {dimension_numbers = #tpu.dot_dimension_numbers<[1], [0], [0], [1], [0, 0, 1, 1], [], []>} : vector<8x32xbf16>, vector<32x64xbf16>, vector<8x64xf32> -> vector<8x64xf32>
    %98 = arith.truncf %97 : vector<8x64xf32> to vector<8x64xbf16>
    %c0_91 = arith.constant 0 : index
    %c3_92 = arith.constant 3 : index
    %c0_93 = arith.constant 0 : index
    %c0_94 = arith.constant 0 : index
    %99 = vector.load %arg9[%c0_91, %c3_92, %c0_93, %c0_94] : memref<1x4x8x64xbf16, #tpu.memory_space<vmem>>, vector<1x1x8x64xbf16>
    %100 = vector.shape_cast %99 : vector<1x1x8x64xbf16> to vector<8x64xbf16>
    %101 = vector.shape_cast %98 : vector<8x64xbf16> to vector<1x1x8x64xbf16>
    tpu.vector_store %arg9[%c0_91, %c3_92, %c0_93, %c0_94], %101 {strides = array<i32>} : memref<1x4x8x64xbf16, #tpu.memory_space<vmem>>, vector<1x1x8x64xbf16>,
    %c3_95 = arith.constant 3 : index
    %c0_96 = arith.constant 0 : index
    %c0_97 = arith.constant 0 : index
    %102 = vector.load %arg7[%c3_95, %c0_96, %c0_97] : memref<4x32x64xbf16, #tpu.memory_space<vmem>>, vector<1x32x64xbf16>
    %103 = vector.shape_cast %102 : vector<1x32x64xbf16> to vector<32x64xbf16>
    %cst_98 = arith.constant dense<0.000000e+00> : vector<8x64xf32>
    %104 = tpu.matmul %24, %103, %cst_98 {dimension_numbers = #tpu.dot_dimension_numbers<[1], [0], [0], [1], [0, 0, 1, 1], [], []>} : vector<8x32xbf16>, vector<32x64xbf16>, vector<8x64xf32> -> vector<8x64xf32>
    %105 = arith.truncf %104 : vector<8x64xf32> to vector<8x64xbf16>
    %c0_99 = arith.constant 0 : index
    %c3_100 = arith.constant 3 : index
    %c0_101 = arith.constant 0 : index
    %c0_102 = arith.constant 0 : index
    %106 = vector.load %arg10[%c0_99, %c3_100, %c0_101, %c0_102] : memref<1x4x8x64xbf16, #tpu.memory_space<vmem>>, vector<1x1x8x64xbf16>
    %107 = vector.shape_cast %106 : vector<1x1x8x64xbf16> to vector<8x64xbf16>
    %108 = vector.shape_cast %105 : vector<8x64xbf16> to vector<1x1x8x64xbf16>
    tpu.vector_store %arg10[%c0_99, %c3_100, %c0_101, %c0_102], %108 {strides = array<i32>} : memref<1x4x8x64xbf16, #tpu.memory_space<vmem>>, vector<1x1x8x64xbf16>,
    return
  }
  func.func @transform_0(%arg0: i32, %arg1: i32) -> (i32, i32, i32) {
    %c0_i32 = arith.constant 0 : i32
    %c0_i32_0 = arith.constant 0 : i32
    return %arg0, %arg1, %c0_i32 : i32, i32, i32
  }
  func.func @transform_1(%arg0: i32, %arg1: i32) -> (i32, i32) {
    %c0_i32 = arith.constant 0 : i32
    %c0_i32_0 = arith.constant 0 : i32
    %c0_i32_1 = arith.constant 0 : i32
    return %c0_i32, %c0_i32_0 : i32, i32
  }
  func.func @transform_2(%arg0: i32, %arg1: i32) -> (i32, i32) {
    %c0_i32 = arith.constant 0 : i32
    %c0_i32_0 = arith.constant 0 : i32
    %c0_i32_1 = arith.constant 0 : i32
    return %c0_i32, %c0_i32_0 : i32, i32
  }
  func.func @transform_3(%arg0: i32, %arg1: i32) -> (i32, i32, i32) {
    %c0_i32 = arith.constant 0 : i32
    %c0_i32_0 = arith.constant 0 : i32
    %c0_i32_1 = arith.constant 0 : i32
    %c0_i32_2 = arith.constant 0 : i32
    return %c0_i32, %c0_i32_0, %c0_i32_1 : i32, i32, i32
  }
  func.func @transform_4(%arg0: i32, %arg1: i32) -> (i32, i32, i32) {
    %c0_i32 = arith.constant 0 : i32
    %c0_i32_0 = arith.constant 0 : i32
    %c0_i32_1 = arith.constant 0 : i32
    %c0_i32_2 = arith.constant 0 : i32
    return %c0_i32, %c0_i32_0, %c0_i32_1 : i32, i32, i32
  }
  func.func @transform_5(%arg0: i32, %arg1: i32) -> (i32, i32, i32) {
    %c0_i32 = arith.constant 0 : i32
    %c0_i32_0 = arith.constant 0 : i32
    %c0_i32_1 = arith.constant 0 : i32
    %c0_i32_2 = arith.constant 0 : i32
    return %c0_i32, %c0_i32_0, %c0_i32_1 : i32, i32, i32
  }
  func.func @transform_6(%arg0: i32, %arg1: i32) -> (i32, i32, i32, i32) {
    %c0_i32 = arith.constant 0 : i32
    %c0_i32_0 = arith.constant 0 : i32
    %c0_i32_1 = arith.constant 0 : i32
    return %arg0, %c0_i32, %arg1, %c0_i32_0 : i32, i32, i32, i32
  }
  func.func @transform_7(%arg0: i32, %arg1: i32) -> (i32, i32, i32, i32) {
    %c0_i32 = arith.constant 0 : i32
    %c0_i32_0 = arith.constant 0 : i32
    %c0_i32_1 = arith.constant 0 : i32
    return %arg0, %c0_i32, %arg1, %c0_i32_0 : i32, i32, i32, i32
  }
  func.func @transform_8(%arg0: i32, %arg1: i32) -> (i32, i32, i32, i32) {
    %c0_i32 = arith.constant 0 : i32
    %c0_i32_0 = arith.constant 0 : i32
    %c0_i32_1 = arith.constant 0 : i32
    return %arg0, %c0_i32, %arg1, %c0_i32_0 : i32, i32, i32, i32
  }
}

module attributes {stable_mosaic.version = 11 : i64} {
  func.func @_ln_qkv_kernel(%arg0: i32, %arg1: i32, %arg2: memref<1x8x32xf32, #tpu.memory_space<vmem>>, %arg3: memref<1x32xf32, #tpu.memory_space<vmem>>, %arg4: memref<1x32xf32, #tpu.memory_space<vmem>>, %arg5: memref<4x32x64xbf16, #tpu.memory_space<vmem>>, %arg6: memref<4x32x64xbf16, #tpu.memory_space<vmem>>, %arg7: memref<4x32x64xbf16, #tpu.memory_space<vmem>>, %arg8: memref<1x4x8x64xbf16, #tpu.memory_space<vmem>>, %arg9: memref<1x4x8x64xbf16, #tpu.memory_space<vmem>>, %arg10: memref<1x4x8x64xbf16, #tpu.memory_space<vmem>>) attributes {dimension_semantics = [#tpu.dimension_semantics<parallel>, #tpu.dimension_semantics<parallel>], iteration_bounds = array<i64: 2, 1>, scalar_prefetch = 0 : i64, scratch_operands = 0 : i64, tpu.core_type = #tpu.core_type<tc>, window_params = [{transform_indices = @transform_0, window_bounds = array<i64: 1, 8, 32>}, {pipeline_mode = #tpu.pipeline_mode<synchronous>, transform_indices = @transform_1, window_bounds = array<i64: 1, 32>}, {pipeline_mode = #tpu.pipeline_mode<synchronous>, transform_indices = @transform_2, window_bounds = array<i64: 1, 32>}, {pipeline_mode = #tpu.pipeline_mode<synchronous>, transform_indices = @transform_3, window_bounds = array<i64: 4, 32, 64>}, {pipeline_mode = #tpu.pipeline_mode<synchronous>, transform_indices = @transform_4, window_bounds = array<i64: 4, 32, 64>}, {pipeline_mode = #tpu.pipeline_mode<synchronous>, transform_indices = @transform_5, window_bounds = array<i64: 4, 32, 64>}, {transform_indices = @transform_6, window_bounds = array<i64: 1, 4, 8, 64>}, {transform_indices = @transform_7, window_bounds = array<i64: 1, 4, 8, 64>}, {transform_indices = @transform_8, window_bounds = array<i64: 1, 4, 8, 64>}]} {
    %c0 = arith.constant 0 : index
    %c0_0 = arith.constant 0 : index
    %c0_1 = arith.constant 0 : index
    %0 = vector.load %arg2[%c0, %c0_0, %c0_1] : memref<1x8x32xf32, #tpu.memory_space<vmem>>, vector<1x8x32xf32>
    %1 = vector.shape_cast %0 : vector<1x8x32xf32> to vector<8x32xf32>
    %cst = arith.constant dense<0.000000e+00> : vector<8xf32>
    %2 = vector.multi_reduction <add>, %1, %cst [1] : vector<8x32xf32> to vector<8xf32>
    %3 = vector.shape_cast %2 : vector<8xf32> to vector<8x1xf32>
    %cst_2 = arith.constant 3.200000e+01 : f32
    %4 = vector.broadcast %cst_2 : f32 to vector<8x1xf32>
    %5 = arith.divf %3, %4 : vector<8x1xf32>
    %6 = vector.broadcast %5 : vector<8x1xf32> to vector<8x32xf32>
    %7 = arith.subf %1, %6 : vector<8x32xf32>
    %8 = arith.mulf %7, %7 : vector<8x32xf32>
    %cst_3 = arith.constant dense<0.000000e+00> : vector<8xf32>
    %9 = vector.multi_reduction <add>, %8, %cst_3 [1] : vector<8x32xf32> to vector<8xf32>
    %10 = vector.shape_cast %9 : vector<8xf32> to vector<8x1xf32>
    %cst_4 = arith.constant 3.200000e+01 : f32
    %11 = vector.broadcast %cst_4 : f32 to vector<8x1xf32>
    %12 = arith.divf %10, %11 : vector<8x1xf32>
    %cst_5 = arith.constant 9.99999974E-6 : f32
    %13 = vector.broadcast %cst_5 : f32 to vector<8x1xf32>
    %14 = arith.addf %12, %13 : vector<8x1xf32>
    %15 = math.rsqrt %14 : vector<8x1xf32>
    %16 = vector.broadcast %15 : vector<8x1xf32> to vector<8x32xf32>
    %17 = arith.mulf %7, %16 : vector<8x32xf32>
    %c0_6 = arith.constant 0 : index
    %c0_7 = arith.constant 0 : index
    %18 = vector.load %arg3[%c0_6, %c0_7] : memref<1x32xf32, #tpu.memory_space<vmem>>, vector<1x32xf32>
    %19 = vector.broadcast %18 : vector<1x32xf32> to vector<8x32xf32>
    %20 = arith.mulf %17, %19 : vector<8x32xf32>
    %c0_8 = arith.constant 0 : index
    %c0_9 = arith.constant 0 : index
    %21 = vector.load %arg4[%c0_8, %c0_9] : memref<1x32xf32, #tpu.memory_space<vmem>>, vector<1x32xf32>
    %22 = vector.broadcast %21 : vector<1x32xf32> to vector<8x32xf32>
    %23 = arith.addf %20, %22 : vector<8x32xf32>
    %24 = arith.truncf %23 : vector<8x32xf32> to vector<8x32xbf16>
    %c0_10 = arith.constant 0 : index
    %c0_11 = arith.constant 0 : index
    %c0_12 = arith.constant 0 : index
    %25 = vector.load %arg5[%c0_10, %c0_11, %c0_12] : memref<4x32x64xbf16, #tpu.memory_space<vmem>>, vector<1x32x64xbf16>
    %26 = vector.shape_cast %25 : vector<1x32x64xbf16> to vector<32x64xbf16>
    %cst_13 = arith.constant dense<0.000000e+00> : vector<8x64xf32>
    %27 = tpu.matmul %24, %26, %cst_13 {dimension_numbers = #tpu.dot_dimension_numbers<[1], [0], [0], [1], [0, 0, 1, 1], [], []>} : vector<8x32xbf16>, vector<32x64xbf16>, vector<8x64xf32> -> vector<8x64xf32>
    %28 = arith.truncf %27 : vector<8x64xf32> to vector<8x64xbf16>
    %c0_14 = arith.constant 0 : index
    %c0_15 = arith.constant 0 : index
    %c0_16 = arith.constant 0 : index
    %c0_17 = arith.constant 0 : index
    %29 = vector.load %arg8[%c0_14, %c0_15, %c0_16, %c0_17] : memref<1x4x8x64xbf16, #tpu.memory_space<vmem>>, vector<1x1x8x64xbf16>
    %30 = vector.shape_cast %29 : vector<1x1x8x64xbf16> to vector<8x64xbf16>
    %31 = vector.shape_cast %28 : vector<8x64xbf16> to vector<1x1x8x64xbf16>
    tpu.vector_store %arg8[%c0_14, %c0_15, %c0_16, %c0_17], %31 {strides = array<i32>} : memref<1x4x8x64xbf16, #tpu.memory_space<vmem>>, vector<1x1x8x64xbf16>,
    %c0_18 = arith.constant 0 : index
    %c0_19 = arith.constant 0 : index
    %c0_20 = arith.constant 0 : index
    %32 = vector.load %arg6[%c0_18, %c0_19, %c0_20] : memref<4x32x64xbf16, #tpu.memory_space<vmem>>, vector<1x32x64xbf16>
    %33 = vector.shape_cast %32 : vector<1x32x64xbf16> to vector<32x64xbf16>
    %cst_21 = arith.constant dense<0.000000e+00> : vector<8x64xf32>
    %34 = tpu.matmul %24, %33, %cst_21 {dimension_numbers = #tpu.dot_dimension_numbers<[1], [0], [0], [1], [0, 0, 1, 1], [], []>} : vector<8x32xbf16>, vector<32x64xbf16>, vector<8x64xf32> -> vector<8x64xf32>
    %35 = arith.truncf %34 : vector<8x64xf32> to vector<8x64xbf16>
    %c0_22 = arith.constant 0 : index
    %c0_23 = arith.constant 0 : index
    %c0_24 = arith.constant 0 : index
    %c0_25 = arith.constant 0 : index
    %36 = vector.load %arg9[%c0_22, %c0_23, %c0_24, %c0_25] : memref<1x4x8x64xbf16, #tpu.memory_space<vmem>>, vector<1x1x8x64xbf16>
    %37 = vector.shape_cast %36 : vector<1x1x8x64xbf16> to vector<8x64xbf16>
    %38 = vector.shape_cast %35 : vector<8x64xbf16> to vector<1x1x8x64xbf16>
    tpu.vector_store %arg9[%c0_22, %c0_23, %c0_24, %c0_25], %38 {strides = array<i32>} : memref<1x4x8x64xbf16, #tpu.memory_space<vmem>>, vector<1x1x8x64xbf16>,
    %c0_26 = arith.constant 0 : index
    %c0_27 = arith.constant 0 : index
    %c0_28 = arith.constant 0 : index
    %39 = vector.load %arg7[%c0_26, %c0_27, %c0_28] : memref<4x32x64xbf16, #tpu.memory_space<vmem>>, vector<1x32x64xbf16>
    %40 = vector.shape_cast %39 : vector<1x32x64xbf16> to vector<32x64xbf16>
    %cst_29 = arith.constant dense<0.000000e+00> : vector<8x64xf32>
    %41 = tpu.matmul %24, %40, %cst_29 {dimension_numbers = #tpu.dot_dimension_numbers<[1], [0], [0], [1], [0, 0, 1, 1], [], []>} : vector<8x32xbf16>, vector<32x64xbf16>, vector<8x64xf32> -> vector<8x64xf32>
    %42 = arith.truncf %41 : vector<8x64xf32> to vector<8x64xbf16>
    %c0_30 = arith.constant 0 : index
    %c0_31 = arith.constant 0 : index
    %c0_32 = arith.constant 0 : index
    %c0_33 = arith.constant 0 : index
    %43 = vector.load %arg10[%c0_30, %c0_31, %c0_32, %c0_33] : memref<1x4x8x64xbf16, #tpu.memory_space<vmem>>, vector<1x1x8x64xbf16>
    %44 = vector.shape_cast %43 : vector<1x1x8x64xbf16> to vector<8x64xbf16>
    %45 = vector.shape_cast %42 : vector<8x64xbf16> to vector<1x1x8x64xbf16>
    tpu.vector_store %arg10[%c0_30, %c0_31, %c0_32, %c0_33], %45 {strides = array<i32>} : memref<1x4x8x64xbf16, #tpu.memory_space<vmem>>, vector<1x1x8x64xbf16>,
    %c1 = arith.constant 1 : index
    %c0_34 = arith.constant 0 : index
    %c0_35 = arith.constant 0 : index
    %46 = vector.load %arg5[%c1, %c0_34, %c0_35] : memref<4x32x64xbf16, #tpu.memory_space<vmem>>, vector<1x32x64xbf16>
    %47 = vector.shape_cast %46 : vector<1x32x64xbf16> to vector<32x64xbf16>
    %cst_36 = arith.constant dense<0.000000e+00> : vector<8x64xf32>
    %48 = tpu.matmul %24, %47, %cst_36 {dimension_numbers = #tpu.dot_dimension_numbers<[1], [0], [0], [1], [0, 0, 1, 1], [], []>} : vector<8x32xbf16>, vector<32x64xbf16>, vector<8x64xf32> -> vector<8x64xf32>
    %49 = arith.truncf %48 : vector<8x64xf32> to vector<8x64xbf16>
    %c0_37 = arith.constant 0 : index
    %c1_38 = arith.constant 1 : index
    %c0_39 = arith.constant 0 : index
    %c0_40 = arith.constant 0 : index
    %50 = vector.load %arg8[%c0_37, %c1_38, %c0_39, %c0_40] : memref<1x4x8x64xbf16, #tpu.memory_space<vmem>>, vector<1x1x8x64xbf16>
    %51 = vector.shape_cast %50 : vector<1x1x8x64xbf16> to vector<8x64xbf16>
    %52 = vector.shape_cast %49 : vector<8x64xbf16> to vector<1x1x8x64xbf16>
    tpu.vector_store %arg8[%c0_37, %c1_38, %c0_39, %c0_40], %52 {strides = array<i32>} : memref<1x4x8x64xbf16, #tpu.memory_space<vmem>>, vector<1x1x8x64xbf16>,
    %c1_41 = arith.constant 1 : index
    %c0_42 = arith.constant 0 : index
    %c0_43 = arith.constant 0 : index
    %53 = vector.load %arg6[%c1_41, %c0_42, %c0_43] : memref<4x32x64xbf16, #tpu.memory_space<vmem>>, vector<1x32x64xbf16>
    %54 = vector.shape_cast %53 : vector<1x32x64xbf16> to vector<32x64xbf16>
    %cst_44 = arith.constant dense<0.000000e+00> : vector<8x64xf32>
    %55 = tpu.matmul %24, %54, %cst_44 {dimension_numbers = #tpu.dot_dimension_numbers<[1], [0], [0], [1], [0, 0, 1, 1], [], []>} : vector<8x32xbf16>, vector<32x64xbf16>, vector<8x64xf32> -> vector<8x64xf32>
    %56 = arith.truncf %55 : vector<8x64xf32> to vector<8x64xbf16>
    %c0_45 = arith.constant 0 : index
    %c1_46 = arith.constant 1 : index
    %c0_47 = arith.constant 0 : index
    %c0_48 = arith.constant 0 : index
    %57 = vector.load %arg9[%c0_45, %c1_46, %c0_47, %c0_48] : memref<1x4x8x64xbf16, #tpu.memory_space<vmem>>, vector<1x1x8x64xbf16>
    %58 = vector.shape_cast %57 : vector<1x1x8x64xbf16> to vector<8x64xbf16>
    %59 = vector.shape_cast %56 : vector<8x64xbf16> to vector<1x1x8x64xbf16>
    tpu.vector_store %arg9[%c0_45, %c1_46, %c0_47, %c0_48], %59 {strides = array<i32>} : memref<1x4x8x64xbf16, #tpu.memory_space<vmem>>, vector<1x1x8x64xbf16>,
    %c1_49 = arith.constant 1 : index
    %c0_50 = arith.constant 0 : index
    %c0_51 = arith.constant 0 : index
    %60 = vector.load %arg7[%c1_49, %c0_50, %c0_51] : memref<4x32x64xbf16, #tpu.memory_space<vmem>>, vector<1x32x64xbf16>
    %61 = vector.shape_cast %60 : vector<1x32x64xbf16> to vector<32x64xbf16>
    %cst_52 = arith.constant dense<0.000000e+00> : vector<8x64xf32>
    %62 = tpu.matmul %24, %61, %cst_52 {dimension_numbers = #tpu.dot_dimension_numbers<[1], [0], [0], [1], [0, 0, 1, 1], [], []>} : vector<8x32xbf16>, vector<32x64xbf16>, vector<8x64xf32> -> vector<8x64xf32>
    %63 = arith.truncf %62 : vector<8x64xf32> to vector<8x64xbf16>
    %c0_53 = arith.constant 0 : index
    %c1_54 = arith.constant 1 : index
    %c0_55 = arith.constant 0 : index
    %c0_56 = arith.constant 0 : index
    %64 = vector.load %arg10[%c0_53, %c1_54, %c0_55, %c0_56] : memref<1x4x8x64xbf16, #tpu.memory_space<vmem>>, vector<1x1x8x64xbf16>
    %65 = vector.shape_cast %64 : vector<1x1x8x64xbf16> to vector<8x64xbf16>
    %66 = vector.shape_cast %63 : vector<8x64xbf16> to vector<1x1x8x64xbf16>
    tpu.vector_store %arg10[%c0_53, %c1_54, %c0_55, %c0_56], %66 {strides = array<i32>} : memref<1x4x8x64xbf16, #tpu.memory_space<vmem>>, vector<1x1x8x64xbf16>,
    %c2 = arith.constant 2 : index
    %c0_57 = arith.constant 0 : index
    %c0_58 = arith.constant 0 : index
    %67 = vector.load %arg5[%c2, %c0_57, %c0_58] : memref<4x32x64xbf16, #tpu.memory_space<vmem>>, vector<1x32x64xbf16>
    %68 = vector.shape_cast %67 : vector<1x32x64xbf16> to vector<32x64xbf16>
    %cst_59 = arith.constant dense<0.000000e+00> : vector<8x64xf32>
    %69 = tpu.matmul %24, %68, %cst_59 {dimension_numbers = #tpu.dot_dimension_numbers<[1], [0], [0], [1], [0, 0, 1, 1], [], []>} : vector<8x32xbf16>, vector<32x64xbf16>, vector<8x64xf32> -> vector<8x64xf32>
    %70 = arith.truncf %69 : vector<8x64xf32> to vector<8x64xbf16>
    %c0_60 = arith.constant 0 : index
    %c2_61 = arith.constant 2 : index
    %c0_62 = arith.constant 0 : index
    %c0_63 = arith.constant 0 : index
    %71 = vector.load %arg8[%c0_60, %c2_61, %c0_62, %c0_63] : memref<1x4x8x64xbf16, #tpu.memory_space<vmem>>, vector<1x1x8x64xbf16>
    %72 = vector.shape_cast %71 : vector<1x1x8x64xbf16> to vector<8x64xbf16>
    %73 = vector.shape_cast %70 : vector<8x64xbf16> to vector<1x1x8x64xbf16>
    tpu.vector_store %arg8[%c0_60, %c2_61, %c0_62, %c0_63], %73 {strides = array<i32>} : memref<1x4x8x64xbf16, #tpu.memory_space<vmem>>, vector<1x1x8x64xbf16>,
    %c2_64 = arith.constant 2 : index
    %c0_65 = arith.constant 0 : index
    %c0_66 = arith.constant 0 : index
    %74 = vector.load %arg6[%c2_64, %c0_65, %c0_66] : memref<4x32x64xbf16, #tpu.memory_space<vmem>>, vector<1x32x64xbf16>
    %75 = vector.shape_cast %74 : vector<1x32x64xbf16> to vector<32x64xbf16>
    %cst_67 = arith.constant dense<0.000000e+00> : vector<8x64xf32>
    %76 = tpu.matmul %24, %75, %cst_67 {dimension_numbers = #tpu.dot_dimension_numbers<[1], [0], [0], [1], [0, 0, 1, 1], [], []>} : vector<8x32xbf16>, vector<32x64xbf16>, vector<8x64xf32> -> vector<8x64xf32>
    %77 = arith.truncf %76 : vector<8x64xf32> to vector<8x64xbf16>
    %c0_68 = arith.constant 0 : index
    %c2_69 = arith.constant 2 : index
    %c0_70 = arith.constant 0 : index
    %c0_71 = arith.constant 0 : index
    %78 = vector.load %arg9[%c0_68, %c2_69, %c0_70, %c0_71] : memref<1x4x8x64xbf16, #tpu.memory_space<vmem>>, vector<1x1x8x64xbf16>
    %79 = vector.shape_cast %78 : vector<1x1x8x64xbf16> to vector<8x64xbf16>
    %80 = vector.shape_cast %77 : vector<8x64xbf16> to vector<1x1x8x64xbf16>
    tpu.vector_store %arg9[%c0_68, %c2_69, %c0_70, %c0_71], %80 {strides = array<i32>} : memref<1x4x8x64xbf16, #tpu.memory_space<vmem>>, vector<1x1x8x64xbf16>,
    %c2_72 = arith.constant 2 : index
    %c0_73 = arith.constant 0 : index
    %c0_74 = arith.constant 0 : index
    %81 = vector.load %arg7[%c2_72, %c0_73, %c0_74] : memref<4x32x64xbf16, #tpu.memory_space<vmem>>, vector<1x32x64xbf16>
    %82 = vector.shape_cast %81 : vector<1x32x64xbf16> to vector<32x64xbf16>
    %cst_75 = arith.constant dense<0.000000e+00> : vector<8x64xf32>
    %83 = tpu.matmul %24, %82, %cst_75 {dimension_numbers = #tpu.dot_dimension_numbers<[1], [0], [0], [1], [0, 0, 1, 1], [], []>} : vector<8x32xbf16>, vector<32x64xbf16>, vector<8x64xf32> -> vector<8x64xf32>
    %84 = arith.truncf %83 : vector<8x64xf32> to vector<8x64xbf16>
    %c0_76 = arith.constant 0 : index
    %c2_77 = arith.constant 2 : index
    %c0_78 = arith.constant 0 : index
    %c0_79 = arith.constant 0 : index
    %85 = vector.load %arg10[%c0_76, %c2_77, %c0_78, %c0_79] : memref<1x4x8x64xbf16, #tpu.memory_space<vmem>>, vector<1x1x8x64xbf16>
    %86 = vector.shape_cast %85 : vector<1x1x8x64xbf16> to vector<8x64xbf16>
    %87 = vector.shape_cast %84 : vector<8x64xbf16> to vector<1x1x8x64xbf16>
    tpu.vector_store %arg10[%c0_76, %c2_77, %c0_78, %c0_79], %87 {strides = array<i32>} : memref<1x4x8x64xbf16, #tpu.memory_space<vmem>>, vector<1x1x8x64xbf16>,
    %c3 = arith.constant 3 : index
    %c0_80 = arith.constant 0 : index
    %c0_81 = arith.constant 0 : index
    %88 = vector.load %arg5[%c3, %c0_80, %c0_81] : memref<4x32x64xbf16, #tpu.memory_space<vmem>>, vector<1x32x64xbf16>
    %89 = vector.shape_cast %88 : vector<1x32x64xbf16> to vector<32x64xbf16>
    %cst_82 = arith.constant dense<0.000000e+00> : vector<8x64xf32>
    %90 = tpu.matmul %24, %89, %cst_82 {dimension_numbers = #tpu.dot_dimension_numbers<[1], [0], [0], [1], [0, 0, 1, 1], [], []>} : vector<8x32xbf16>, vector<32x64xbf16>, vector<8x64xf32> -> vector<8x64xf32>
    %91 = arith.truncf %90 : vector<8x64xf32> to vector<8x64xbf16>
    %c0_83 = arith.constant 0 : index
    %c3_84 = arith.constant 3 : index
    %c0_85 = arith.constant 0 : index
    %c0_86 = arith.constant 0 : index
    %92 = vector.load %arg8[%c0_83, %c3_84, %c0_85, %c0_86] : memref<1x4x8x64xbf16, #tpu.memory_space<vmem>>, vector<1x1x8x64xbf16>
    %93 = vector.shape_cast %92 : vector<1x1x8x64xbf16> to vector<8x64xbf16>
    %94 = vector.shape_cast %91 : vector<8x64xbf16> to vector<1x1x8x64xbf16>
    tpu.vector_store %arg8[%c0_83, %c3_84, %c0_85, %c0_86], %94 {strides = array<i32>} : memref<1x4x8x64xbf16, #tpu.memory_space<vmem>>, vector<1x1x8x64xbf16>,
    %c3_87 = arith.constant 3 : index
    %c0_88 = arith.constant 0 : index
    %c0_89 = arith.constant 0 : index
    %95 = vector.load %arg6[%c3_87, %c0_88, %c0_89] : memref<4x32x64xbf16, #tpu.memory_space<vmem>>, vector<1x32x64xbf16>
    %96 = vector.shape_cast %95 : vector<1x32x64xbf16> to vector<32x64xbf16>
    %cst_90 = arith.constant dense<0.000000e+00> : vector<8x64xf32>
    %97 = tpu.matmul %24, %96, %cst_90 {dimension_numbers = #tpu.dot_dimension_numbers<[1], [0], [0], [1], [0, 0, 1, 1], [], []>} : vector<8x32xbf16>, vector<32x64xbf16>, vector<8x64xf32> -> vector<8x64xf32>
    %98 = arith.truncf %97 : vector<8x64xf32> to vector<8x64xbf16>
    %c0_91 = arith.constant 0 : index
    %c3_92 = arith.constant 3 : index
    %c0_93 = arith.constant 0 : index
    %c0_94 = arith.constant 0 : index
    %99 = vector.load %arg9[%c0_91, %c3_92, %c0_93, %c0_94] : memref<1x4x8x64xbf16, #tpu.memory_space<vmem>>, vector<1x1x8x64xbf16>
    %100 = vector.shape_cast %99 : vector<1x1x8x64xbf16> to vector<8x64xbf16>
    %101 = vector.shape_cast %98 : vector<8x64xbf16> to vector<1x1x8x64xbf16>
    tpu.vector_store %arg9[%c0_91, %c3_92, %c0_93, %c0_94], %101 {strides = array<i32>} : memref<1x4x8x64xbf16, #tpu.memory_space<vmem>>, vector<1x1x8x64xbf16>,
    %c3_95 = arith.constant 3 : index
    %c0_96 = arith.constant 0 : index
    %c0_97 = arith.constant 0 : index
    %102 = vector.load %arg7[%c3_95, %c0_96, %c0_97] : memref<4x32x64xbf16, #tpu.memory_space<vmem>>, vector<1x32x64xbf16>
    %103 = vector.shape_cast %102 : vector<1x32x64xbf16> to vector<32x64xbf16>
    %cst_98 = arith.constant dense<0.000000e+00> : vector<8x64xf32>
    %104 = tpu.matmul %24, %103, %cst_98 {dimension_numbers = #tpu.dot_dimension_numbers<[1], [0], [0], [1], [0, 0, 1, 1], [], []>} : vector<8x32xbf16>, vector<32x64xbf16>, vector<8x64xf32> -> vector<8x64xf32>
    %105 = arith.truncf %104 : vector<8x64xf32> to vector<8x64xbf16>
    %c0_99 = arith.constant 0 : index
    %c3_100 = arith.constant 3 : index
    %c0_101 = arith.constant 0 : index
    %c0_102 = arith.constant 0 : index
    %106 = vector.load %arg10[%c0_99, %c3_100, %c0_101, %c0_102] : memref<1x4x8x64xbf16, #tpu.memory_space<vmem>>, vector<1x1x8x64xbf16>
    %107 = vector.shape_cast %106 : vector<1x1x8x64xbf16> to vector<8x64xbf16>
    %108 = vector.shape_cast %105 : vector<8x64xbf16> to vector<1x1x8x64xbf16>
    tpu.vector_store %arg10[%c0_99, %c3_100, %c0_101, %c0_102], %108 {strides = array<i32>} : memref<1x4x8x64xbf16, #tpu.memory_space<vmem>>, vector<1x1x8x64xbf16>,
    return
  }
  func.func @transform_0(%arg0: i32, %arg1: i32) -> (i32, i32, i32) {
    %c0_i32 = arith.constant 0 : i32
    %c0_i32_0 = arith.constant 0 : i32
    return %arg0, %arg1, %c0_i32 : i32, i32, i32
  }
  func.func @transform_1(%arg0: i32, %arg1: i32) -> (i32, i32) {
    %c0_i32 = arith.constant 0 : i32
    %c0_i32_0 = arith.constant 0 : i32
    %c0_i32_1 = arith.constant 0 : i32
    return %c0_i32, %c0_i32_0 : i32, i32
  }
  func.func @transform_2(%arg0: i32, %arg1: i32) -> (i32, i32) {
    %c0_i32 = arith.constant 0 : i32
    %c0_i32_0 = arith.constant 0 : i32
    %c0_i32_1 = arith.constant 0 : i32
    return %c0_i32, %c0_i32_0 : i32, i32
  }
  func.func @transform_3(%arg0: i32, %arg1: i32) -> (i32, i32, i32) {
    %c0_i32 = arith.constant 0 : i32
    %c0_i32_0 = arith.constant 0 : i32
    %c0_i32_1 = arith.constant 0 : i32
    %c0_i32_2 = arith.constant 0 : i32
    return %c0_i32, %c0_i32_0, %c0_i32_1 : i32, i32, i32
  }
  func.func @transform_4(%arg0: i32, %arg1: i32) -> (i32, i32, i32) {
    %c0_i32 = arith.constant 0 : i32
    %c0_i32_0 = arith.constant 0 : i32
    %c0_i32_1 = arith.constant 0 : i32
    %c0_i32_2 = arith.constant 0 : i32
    return %c0_i32, %c0_i32_0, %c0_i32_1 : i32, i32, i32
  }
  func.func @transform_5(%arg0: i32, %arg1: i32) -> (i32, i32, i32) {
    %c0_i32 = arith.constant 0 : i32
    %c0_i32_0 = arith.constant 0 : i32
    %c0_i32_1 = arith.constant 0 : i32
    %c0_i32_2 = arith.constant 0 : i32
    return %c0_i32, %c0_i32_0, %c0_i32_1 : i32, i32, i32
  }
  func.func @transform_6(%arg0: i32, %arg1: i32) -> (i32, i32, i32, i32) {
    %c0_i32 = arith.constant 0 : i32
    %c0_i32_0 = arith.constant 0 : i32
    %c0_i32_1 = arith.constant 0 : i32
    return %arg0, %c0_i32, %arg1, %c0_i32_0 : i32, i32, i32, i32
  }
  func.func @transform_7(%arg0: i32, %arg1: i32) -> (i32, i32, i32, i32) {
    %c0_i32 = arith.constant 0 : i32
    %c0_i32_0 = arith.constant 0 : i32
    %c0_i32_1 = arith.constant 0 : i32
    return %arg0, %c0_i32, %arg1, %c0_i32_0 : i32, i32, i32, i32
  }
  func.func @transform_8(%arg0: i32, %arg1: i32) -> (i32, i32, i32, i32) {
    %c0_i32 = arith.constant 0 : i32
    %c0_i32_0 = arith.constant 0 : i32
    %c0_i32_1 = arith.constant 0 : i32
    return %arg0, %c0_i32, %arg1, %c0_i32_0 : i32, i32, i32, i32
  }
}

</mosaic_0001>

<llo_original>
// kernel: tpu_custom_call.1
$region0: #{tpu_custom_call.1}
  #allocation0 [shape = 'u32[]', space=smem, size = 0x4, offset = 0x4, fixed_abs, tag = 'smem constant byte address 0x4 - core index']
  #allocation1 [shape = 'u32[144,128]{1,0:T(1,128)}', space=vmem, size = 0x12000, scoped, tag = 'internal scratch']
  %s0 = inlined_call_operand.hbm [shape: f32[2,8,32], index: 0, kind: input, shape index: {}]
  %s1 = inlined_call_operand.vmem [shape: f32[1,32], index: 1, kind: input, shape index: {}]
  %s2 = inlined_call_operand.vmem [shape: f32[1,32], index: 2, kind: input, shape index: {}]
  %s3 = inlined_call_operand.hbm [shape: bf16[4,32,64], index: 3, kind: input, shape index: {}]
  %s4 = inlined_call_operand.hbm [shape: bf16[4,32,64], index: 4, kind: input, shape index: {}]
  %s5 = inlined_call_operand.hbm [shape: bf16[4,32,64], index: 5, kind: input, shape index: {}]
  %s6 = inlined_call_operand.hbm [shape: bf16[2,4,8,64], index: 6, kind: output, shape index: {0}]
  %s7 = inlined_call_operand.hbm [shape: bf16[2,4,8,64], index: 7, kind: output, shape index: {1}]
  %s8 = inlined_call_operand.hbm [shape: bf16[2,4,8,64], index: 8, kind: output, shape index: {2}]
  %9 = xla_tuple %s6, %s7, %s8
  %s10 = sld [smem:[#allocation0]]
  $region89: #{tpu_custom_call.1} parent=0
    _
  %s12 = ssub.s32 1, %s10
  %s13 = scalar_select 0, %s12, %s10
  $region1: #{tpu_custom_call.1} parent=0
    #allocation2 [shape = 'u8[8192]{0}', space=vmem, size = 0x2000, scoped, tag = 'input window, operand 0']
    #allocation3 [shape = 's32[2]{0}', space=sflag, size = 0x8, scoped, tag = 'scoped memory for tpu_custom_call.1']
    #allocation4 [shape = 's32[2]{0}', space=sflag, size = 0x8, scoped, tag = 'scoped memory for tpu_custom_call.1']
    #allocation5 [shape = 'u8[32768]{0}', space=vmem, size = 0x8000, scoped, tag = 'input window, operand 3, single buffered']
    #allocation6 [shape = 's32[1]{0}', space=sflag, size = 0x4, scoped, tag = 'scoped memory for tpu_custom_call.1']
    #allocation7 [shape = 'u8[32768]{0}', space=vmem, size = 0x8000, scoped, tag = 'input window, operand 4, single buffered']
    #allocation8 [shape = 'u8[32768]{0}', space=vmem, size = 0x8000, scoped, tag = 'input window, operand 5, single buffered']
    #allocation9 [shape = 's32[1]{0}', space=sflag, size = 0x4, scoped, tag = 'scoped memory for tpu_custom_call.1']
    #allocation10 [shape = 'u8[16384]{0}', space=vmem, size = 0x4000, scoped, tag = 'output window, operand 0']
    #allocation11 [shape = 'u8[16384]{0}', space=vmem, size = 0x4000, scoped, tag = 'output window, operand 1']
    #allocation12 [shape = 's32[2]{0}', space=sflag, size = 0x8, scoped, tag = 'scoped memory for tpu_custom_call.1']
    #allocation13 [shape = 'u8[16384]{0}', space=vmem, size = 0x4000, scoped, tag = 'output window, operand 2']
    %14 = vsyncpa [#allocation3], 0
    %s15 = scalar_lea.sflag [#allocation3], 1
    %16 = vsyncpa %s15, 0
    %17 = vsyncpa [#allocation6], 0
    %18 = vsyncpa [#allocation9], 0
    %19 = vsyncpa [#allocation4], 0
    %s20 = scalar_lea.sflag [#allocation4], 1
    %21 = vsyncpa %s20, 0
    %22 = vsyncpa [#allocation12], 0
    %s23 = scalar_lea.sflag [#allocation12], 1
    %24 = vsyncpa %s23, 0
    loop: start=0, step=1, limit=4
    $region2: #{tpu_custom_call.1} parent=1 // loop_pre_header
      _
    $region3: #{tpu_custom_call.1} parent=1 // loop_header
      %s26 = sphi 0, %s30
      %p27 = scmp.ge.s32.totalorder %s26, 4
      %s33 = sphi 0, %s45
      %s34 = sphi 0, %s41
      %s35 = sphi 0, %s33
      %s36 = sphi 0, %s34
      %s37 = sphi 0, %s35
      %s38 = sphi 0, %s36
      %s50 = sphi 0, %s52
      %s53 = sphi 0, %s50
      %s54 = sphi 0, %s53
      %s70 = sphi 0, %s54
      %s74 = sphi 0, %s74
      %s76 = sphi 0, %s74
      %s77 = sphi 0, %s76
      %s91 = sphi 0, %s77
      %s95 = sphi 0, %s95
      %s97 = sphi 0, %s95
      %s98 = sphi 0, %s97
      %s112 = sphi 0, %s98
      %s116 = sphi 0, %s116
      %s118 = sphi 0, %s116
      %s119 = sphi 0, %s118
      %s133 = sphi 0, %s119
      %s137 = sphi 0, %s137
      %s139 = sphi 0, %s137
      %s140 = sphi 0, %s139
      %s154 = sphi 0, %s140
      %s158 = sphi 0, %s158
      %s160 = sphi 0, %s158
      %s161 = sphi 0, %s160
      %s175 = sphi 0, %s161
      %s183 = sphi 0, %s185
      %s186 = sphi 0, %s183
      %s187 = sphi 0, %s186
      %s203 = sphi 0, %s187
      %s211 = sphi 0, %s213
      %s214 = sphi 0, %s211
      %s215 = sphi 0, %s214
      %s231 = sphi 0, %s215
      %s239 = sphi 0, %s241
      %s242 = sphi 0, %s239
      %s243 = sphi 0, %s242
      %s259 = sphi 0, %s243
    $region4: #{tpu_custom_call.1} parent=1 // loop_header_branch
      %29 = sbr.rel (%p27) target = $region8
    $region5: #{tpu_custom_call.1} parent=1 // loop_body
      %s31 = ssub.s32 %s26, 1
      %s32 = ssub.s32 %s26, 2
      %s39 = sadd.s32 1, %s34
      %p40 = scmp.ge.s32.totalorder %s39, 1
      %s41 = scalar_select %p40, 0, %s39
      %s42 = sadd.s32 1, %s33
      %s43 = scalar_select %p40, %s42, %s33
      %p44 = scmp.ge.s32.totalorder %s43, 2
      %s45 = scalar_select %p44, 0, %s43
      %s46 = ssub.s32 %s33, %s45
      %s47 = ssub.s32 %s34, %s41
      %s48 = sor.u32 %s46, %s47
      %p49 = scmp.eq.s32.totalorder %s48, 0
      %s51 = sadd.s32 %s50, 1
      %s52 = scalar_select %p49, %s50, %s51
      %p55 = pneg %p49
      %p56 = scmp.eq.s32.totalorder %s26, 1
      %p57 = por %p55, %p56
      %p58 = scmp.ne.s32.totalorder %s50, %s53
      %p59 = scmp.eq.s32.totalorder %s26, 0
      %p60 = por %p58, %p59
      %p61 = scmp.ne.s32.totalorder %s50, %s53
      %p62 = scmp.eq.s32.totalorder %s31, 1
      %p63 = por %p61, %p62
      %p64 = scmp.ne.s32.totalorder %s53, %s54
      %p65 = scmp.eq.s32.totalorder %s31, 0
      %p66 = por %p64, %p65
      %p67 = scmp.ne.s32.totalorder %s53, %s54
      %p68 = scmp.eq.s32.totalorder %s32, 1
      %p69 = por %p67, %p68
      %p71 = scmp.ne.s32.totalorder %s54, %s70
      %p72 = scmp.eq.s32.totalorder %s32, 0
      %p73 = por %p71, %p72
      %s75 = sadd.s32 %s74, 1
      %p78 = scmp.eq.s32.totalorder %s26, 1
      %p79 = scmp.ne.s32.totalorder %s74, %s76
      %p80 = scmp.eq.s32.totalorder %s26, 0
      %p81 = por %p79, %p80
      %p82 = scmp.ne.s32.totalorder %s74, %s76
      %p83 = scmp.eq.s32.totalorder %s31, 1
      %p84 = por %p82, %p83
      %p85 = scmp.ne.s32.totalorder %s76, %s77
      %p86 = scmp.eq.s32.totalorder %s31, 0
      %p87 = por %p85, %p86
      %p88 = scmp.ne.s32.totalorder %s76, %s77
      %p89 = scmp.eq.s32.totalorder %s32, 1
      %p90 = por %p88, %p89
      %p92 = scmp.ne.s32.totalorder %s77, %s91
      %p93 = scmp.eq.s32.totalorder %s32, 0
      %p94 = por %p92, %p93
      %s96 = sadd.s32 %s95, 1
      %p99 = scmp.eq.s32.totalorder %s26, 1
      %p100 = scmp.ne.s32.totalorder %s95, %s97
      %p101 = scmp.eq.s32.totalorder %s26, 0
      %p102 = por %p100, %p101
      %p103 = scmp.ne.s32.totalorder %s95, %s97
      %p104 = scmp.eq.s32.totalorder %s31, 1
      %p105 = por %p103, %p104
      %p106 = scmp.ne.s32.totalorder %s97, %s98
      %p107 = scmp.eq.s32.totalorder %s31, 0
      %p108 = por %p106, %p107
      %p109 = scmp.ne.s32.totalorder %s97, %s98
      %p110 = scmp.eq.s32.totalorder %s32, 1
      %p111 = por %p109, %p110
      %p113 = scmp.ne.s32.totalorder %s98, %s112
      %p114 = scmp.eq.s32.totalorder %s32, 0
      %p115 = por %p113, %p114
      %s117 = sadd.s32 %s116, 1
      %p120 = scmp.eq.s32.totalorder %s26, 1
      %p121 = scmp.ne.s32.totalorder %s116, %s118
      %p122 = scmp.eq.s32.totalorder %s26, 0
      %p123 = por %p121, %p122
      %p124 = scmp.ne.s32.totalorder %s116, %s118
      %p125 = scmp.eq.s32.totalorder %s31, 1
      %p126 = por %p124, %p125
      %p127 = scmp.ne.s32.totalorder %s118, %s119
      %p128 = scmp.eq.s32.totalorder %s31, 0
      %p129 = por %p127, %p128
      %p130 = scmp.ne.s32.totalorder %s118, %s119
      %p131 = scmp.eq.s32.totalorder %s32, 1
      %p132 = por %p130, %p131
      %p134 = scmp.ne.s32.totalorder %s119, %s133
      %p135 = scmp.eq.s32.totalorder %s32, 0
      %p136 = por %p134, %p135
      %s138 = sadd.s32 %s137, 1
      %p141 = scmp.eq.s32.totalorder %s26, 1
      %p142 = scmp.ne.s32.totalorder %s137, %s139
      %p143 = scmp.eq.s32.totalorder %s26, 0
      %p144 = por %p142, %p143
      %p145 = scmp.ne.s32.totalorder %s137, %s139
      %p146 = scmp.eq.s32.totalorder %s31, 1
      %p147 = por %p145, %p146
      %p148 = scmp.ne.s32.totalorder %s139, %s140
      %p149 = scmp.eq.s32.totalorder %s31, 0
      %p150 = por %p148, %p149
      %p151 = scmp.ne.s32.totalorder %s139, %s140
      %p152 = scmp.eq.s32.totalorder %s32, 1
      %p153 = por %p151, %p152
      %p155 = scmp.ne.s32.totalorder %s140, %s154
      %p156 = scmp.eq.s32.totalorder %s32, 0
      %p157 = por %p155, %p156
      %s159 = sadd.s32 %s158, 1
      %p162 = scmp.eq.s32.totalorder %s26, 1
      %p163 = scmp.ne.s32.totalorder %s158, %s160
      %p164 = scmp.eq.s32.totalorder %s26, 0
      %p165 = por %p163, %p164
      %p166 = scmp.ne.s32.totalorder %s158, %s160
      %p167 = scmp.eq.s32.totalorder %s31, 1
      %p168 = por %p166, %p167
      %p169 = scmp.ne.s32.totalorder %s160, %s161
      %p170 = scmp.eq.s32.totalorder %s31, 0
      %p171 = por %p169, %p170
      %p172 = scmp.ne.s32.totalorder %s160, %s161
      %p173 = scmp.eq.s32.totalorder %s32, 1
      %p174 = por %p172, %p173
      %p176 = scmp.ne.s32.totalorder %s161, %s175
      %p177 = scmp.eq.s32.totalorder %s32, 0
      %p178 = por %p176, %p177
      %s179 = ssub.s32 %s33, %s45
      %s180 = ssub.s32 %s34, %s41
      %s181 = sor.u32 %s179, %s180
      %p182 = scmp.eq.s32.totalorder %s181, 0
      %s184 = sadd.s32 %s183, 1
      %s185 = scalar_select %p182, %s183, %s184
      %p188 = pneg %p182
      %p189 = scmp.eq.s32.totalorder %s26, 1
      %p190 = por %p188, %p189
      %p191 = scmp.ne.s32.totalorder %s183, %s186
      %p192 = scmp.eq.s32.totalorder %s26, 0
      %p193 = por %p191, %p192
      %p194 = scmp.ne.s32.totalorder %s183, %s186
      %p195 = scmp.eq.s32.totalorder %s31, 1
      %p196 = por %p194, %p195
      %p197 = scmp.ne.s32.totalorder %s186, %s187
      %p198 = scmp.eq.s32.totalorder %s31, 0
      %p199 = por %p197, %p198
      %p200 = scmp.ne.s32.totalorder %s186, %s187
      %p201 = scmp.eq.s32.totalorder %s32, 1
      %p202 = por %p200, %p201
      %p204 = scmp.ne.s32.totalorder %s187, %s203
      %p205 = scmp.eq.s32.totalorder %s32, 0
      %p206 = por %p204, %p205
      %s207 = ssub.s32 %s33, %s45
      %s208 = ssub.s32 %s34, %s41
      %s209 = sor.u32 %s207, %s208
      %p210 = scmp.eq.s32.totalorder %s209, 0
      %s212 = sadd.s32 %s211, 1
      %s213 = scalar_select %p210, %s211, %s212
      %p216 = pneg %p210
      %p217 = scmp.eq.s32.totalorder %s26, 1
      %p218 = por %p216, %p217
      %p219 = scmp.ne.s32.totalorder %s211, %s214
      %p220 = scmp.eq.s32.totalorder %s26, 0
      %p221 = por %p219, %p220
      %p222 = scmp.ne.s32.totalorder %s211, %s214
      %p223 = scmp.eq.s32.totalorder %s31, 1
      %p224 = por %p222, %p223
      %p225 = scmp.ne.s32.totalorder %s214, %s215
      %p226 = scmp.eq.s32.totalorder %s31, 0
      %p227 = por %p225, %p226
      %p228 = scmp.ne.s32.totalorder %s214, %s215
      %p229 = scmp.eq.s32.totalorder %s32, 1
      %p230 = por %p228, %p229
      %p232 = scmp.ne.s32.totalorder %s215, %s231
      %p233 = scmp.eq.s32.totalorder %s32, 0
      %p234 = por %p232, %p233
      %s235 = ssub.s32 %s33, %s45
      %s236 = ssub.s32 %s34, %s41
      %s237 = sor.u32 %s235, %s236
      %p238 = scmp.eq.s32.totalorder %s237, 0
      %s240 = sadd.s32 %s239, 1
      %s241 = scalar_select %p238, %s239, %s240
      %p244 = pneg %p238
      %p245 = scmp.eq.s32.totalorder %s26, 1
      %p246 = por %p244, %p245
      %p247 = scmp.ne.s32.totalorder %s239, %s242
      %p248 = scmp.eq.s32.totalorder %s26, 0
      %p249 = por %p247, %p248
      %p250 = scmp.ne.s32.totalorder %s239, %s242
      %p251 = scmp.eq.s32.totalorder %s31, 1
      %p252 = por %p250, %p251
      %p253 = scmp.ne.s32.totalorder %s242, %s243
      %p254 = scmp.eq.s32.totalorder %s31, 0
      %p255 = por %p253, %p254
      %p256 = scmp.ne.s32.totalorder %s242, %s243
      %p257 = scmp.eq.s32.totalorder %s32, 1
      %p258 = por %p256, %p257
      %p260 = scmp.ne.s32.totalorder %s243, %s259
      %p261 = scmp.eq.s32.totalorder %s32, 0
      %p262 = por %p260, %p261
      %p263 = scmp.le.s32.totalorder 1, %s26
      %p264 = scmp.lt.s32.totalorder %s26, 3
      %p265 = pnand %p263, %p264
      %p266 = pneg %p265
      // Predicated region
      $region9: #{tpu_custom_call.1} parent=5 // pred_check
        _
      $region10: #{tpu_custom_call.1} parent=5 // pred_check_branch
        %268 = sbr.rel (%p265) target = $region12
      $region11: #{tpu_custom_call.1} parent=5 // pred_region
        %s269 = ssub.s32 %s26, 1
        // Predicated region
        $region13: #{tpu_custom_call.1} parent=11 // pred_check
          %p270 = pneg %p87
        $region14: #{tpu_custom_call.1} parent=11 // pred_check_branch
          %272 = sbr.rel (%p270) target = $region16
        $region15: #{tpu_custom_call.1} parent=11 // pred_region
          _
        $region16: #{tpu_custom_call.1} parent=11 // pred_fallthru
          _
        // Predicated region
        $region17: #{tpu_custom_call.1} parent=11 // pred_check
          %p273 = pneg %p108
        $region18: #{tpu_custom_call.1} parent=11 // pred_check_branch
          %275 = sbr.rel (%p273) target = $region20
        $region19: #{tpu_custom_call.1} parent=11 // pred_region
          _
        $region20: #{tpu_custom_call.1} parent=11 // pred_fallthru
          _
        // Predicated region
        $region21: #{tpu_custom_call.1} parent=11 // pred_check
          %p276 = pneg %p129
        $region22: #{tpu_custom_call.1} parent=11 // pred_check_branch
          %278 = sbr.rel (%p276) target = $region24
        $region23: #{tpu_custom_call.1} parent=11 // pred_region
          %s280 = ssub.s32 1024, 1024
          %281 = vsyncadd [#allocation6], %s280
          %s282 = sshll.u32 [#allocation5], 4
          %s283 = int_to_ptr.vmem [resolvable:$true] %s282
          %288 = dma.hbm_to_vmem [thread:$0]  %s3, 1024, %s283, [#allocation6], 64, 64, 4
        $region24: #{tpu_custom_call.1} parent=11 // pred_fallthru
          _
        // Predicated region
        $region25: #{tpu_custom_call.1} parent=11 // pred_check
          %p289 = pneg %p150
        $region26: #{tpu_custom_call.1} parent=11 // pred_check_branch
          %291 = sbr.rel (%p289) target = $region28
        $region27: #{tpu_custom_call.1} parent=11 // pred_region
          %s293 = ssub.s32 1024, 1024
          %294 = vsyncadd [#allocation6], %s293
          %s295 = sshll.u32 [#allocation7], 4
          %s296 = int_to_ptr.vmem [resolvable:$true] %s295
          %301 = dma.hbm_to_vmem [thread:$0]  %s4, 1024, %s296, [#allocation6], 64, 64, 4
        $region28: #{tpu_custom_call.1} parent=11 // pred_fallthru
          _
        // Predicated region
        $region29: #{tpu_custom_call.1} parent=11 // pred_check
          %p302 = pneg %p171
        $region30: #{tpu_custom_call.1} parent=11 // pred_check_branch
          %304 = sbr.rel (%p302) target = $region32
        $region31: #{tpu_custom_call.1} parent=11 // pred_region
          %s306 = ssub.s32 1024, 1024
          %307 = vsyncadd [#allocation9], %s306
          %s308 = sshll.u32 [#allocation8], 4
          %s309 = int_to_ptr.vmem [resolvable:$true] %s308
          %314 = dma.hbm_to_vmem [thread:$0]  %s5, 1024, %s309, [#allocation9], 64, 64, 4
        $region32: #{tpu_custom_call.1} parent=11 // pred_fallthru
          _
      $region12: #{tpu_custom_call.1} parent=5 // pred_fallthru
        _
      %p315 = scmp.lt.s32.totalorder %s26, 2
      // Predicated region
      $region33: #{tpu_custom_call.1} parent=5 // pred_check
        %p316 = pneg %p315
      $region34: #{tpu_custom_call.1} parent=5 // pred_check_branch
        %318 = sbr.rel (%p316) target = $region36
      $region35: #{tpu_custom_call.1} parent=5 // pred_region
        // Predicated region
        $region37: #{tpu_custom_call.1} parent=35 // pred_check
          %p319 = pneg %p60
        $region38: #{tpu_custom_call.1} parent=35 // pred_check_branch
          %321 = sbr.rel (%p319) target = $region40
        $region39: #{tpu_custom_call.1} parent=35 // pred_region
          %s322 = sand.u32 %s50, 1
          %s323 = scalar_lea.sflag [#allocation3], %s322
          %s324 = sand.u32 %s50, 1
          %s325 = smul.addr %s324, 8
          %s326 = scalar_lea.vmem [#allocation2], %s325
          %s328 = ssub.s32 128, 128
          %329 = vsyncadd %s323, %s328
          %s330 = sadd.s32 %s34, %s33
          %s331 = smul.addr %s330, 128
          %s332 = scalar_lea.hbm %s0, %s331
          %s334 = sshll.u32 %s326, 4
          %s335 = int_to_ptr.vmem [resolvable:$true] %s334
          %337 = dma.hbm_to_vmem [thread:$0]  %s332, 128, %s335, %s323
        $region40: #{tpu_custom_call.1} parent=35 // pred_fallthru
          _
      $region36: #{tpu_custom_call.1} parent=5 // pred_fallthru
        _
      %p338 = scmp.le.s32.totalorder 1, %s26
      %p339 = scmp.lt.s32.totalorder %s26, 3
      %p340 = pnand %p338, %p339
      %p341 = pneg %p340
      // Predicated region
      $region41: #{tpu_custom_call.1} parent=5 // pred_check
        _
      $region42: #{tpu_custom_call.1} parent=5 // pred_check_branch
        %343 = sbr.rel (%p340) target = $region44
      $region43: #{tpu_custom_call.1} parent=5 // pred_region
        %s344 = ssub.s32 %s26, 1
        %s345 = sand.u32 %s53, 1
        %s346 = scalar_lea.sflag [#allocation3], %s345
        %s347 = sand.u32 %s53, 1
        %s348 = smul.addr %s347, 8
        %s349 = scalar_lea.vmem [#allocation2], %s348
        // Predicated region
        $region45: #{tpu_custom_call.1} parent=43 // pred_check
          %p350 = pneg %p66
        $region46: #{tpu_custom_call.1} parent=43 // pred_check_branch
          %352 = sbr.rel (%p350) target = $region48
        $region47: #{tpu_custom_call.1} parent=43 // pred_region
          %353 = dma.done %s346, 128
        $region48: #{tpu_custom_call.1} parent=43 // pred_fallthru
          _
        // Predicated region
        $region49: #{tpu_custom_call.1} parent=43 // pred_check
          %p354 = pneg %p129
        $region50: #{tpu_custom_call.1} parent=43 // pred_check_branch
          %356 = sbr.rel (%p354) target = $region52
        $region51: #{tpu_custom_call.1} parent=43 // pred_region
          %357 = dma.done [#allocation6], 1024
        $region52: #{tpu_custom_call.1} parent=43 // pred_fallthru
          _
        // Predicated region
        $region53: #{tpu_custom_call.1} parent=43 // pred_check
          %p358 = pneg %p150
        $region54: #{tpu_custom_call.1} parent=43 // pred_check_branch
          %360 = sbr.rel (%p358) target = $region56
        $region55: #{tpu_custom_call.1} parent=43 // pred_region
          %361 = dma.done [#allocation6], 1024
        $region56: #{tpu_custom_call.1} parent=43 // pred_fallthru
          _
        // Predicated region
        $region57: #{tpu_custom_call.1} parent=43 // pred_check
          %p362 = pneg %p171
        $region58: #{tpu_custom_call.1} parent=43 // pred_check_branch
          %364 = sbr.rel (%p362) target = $region60
        $region59: #{tpu_custom_call.1} parent=43 // pred_region
          %365 = dma.done [#allocation9], 1024
        $region60: #{tpu_custom_call.1} parent=43 // pred_fallthru
          _
        %s366 = sand.u32 %s53, 1
        %s367 = scalar_lea.sflag [#allocation3], %s366
        %s368 = sand.u32 %s53, 1
        %s369 = smul.addr %s368, 8
        %s370 = scalar_lea.vmem [#allocation2], %s369
        %p371 = pneg %p66
        %p372 = pneg %p63
        %p373 = pneg %p87
        %p374 = pneg %p84
        %p375 = pneg %p108
        %p376 = pneg %p105
        %p377 = pneg %p129
        %p378 = pneg %p126
        %p379 = pneg %p150
        %p380 = pneg %p147
        %p381 = pneg %p171
        %p382 = pneg %p168
        %p383 = pneg %p199
        %p384 = pneg %p196
        %s385 = sand.u32 %s186, 1
        %s386 = scalar_lea.sflag [#allocation4], %s385
        %s387 = sand.u32 %s186, 1
        %s388 = smul.addr %s387, 16
        %s389 = scalar_lea.vmem [#allocation10], %s388
        %p390 = pneg %p227
        %p391 = pneg %p224
        %s392 = sand.u32 %s31, 1
        %s393 = scalar_lea.sflag [#allocation12], %s392
        %s394 = sand.u32 %s214, 1
        %s395 = smul.addr %s394, 16
        %s396 = scalar_lea.vmem [#allocation11], %s395
        %p397 = pneg %p255
        %p398 = pneg %p252
        %s399 = sand.u32 %s31, 1
        %s400 = scalar_lea.sflag [#allocation12], %s399
        %s401 = sand.u32 %s242, 1
        %s402 = smul.addr %s401, 16
        %s403 = scalar_lea.vmem [#allocation13], %s402
        %v405 = vld [vmem:[%s349] sm:$0xff]
        %vm406 = vcmask 261120
        %v407 = vsel %vm406, %v405, 0.0
        %408 = vadd.xlane.f32.xlu0 %v407
        %v409 = vpop.xlane.xlu0 %408
        %v410 = vrcp.pop 32.0
        %v411 = vmul.f32 %v409, %v410
        %v412 = vsub.f32 %v405, %v411
        %v413 = vmul.f32 %v412, %v412
        %v414 = vsel %vm406, %v413, 0.0
        %415 = vadd.xlane.f32.xlu0 %v414
        %v416 = vpop.xlane.xlu0 %415
        %v417 = vmul.f32 %v416, %v410
        %v418 = vadd.f32 %v417, 1e-05
        %v419 = vrsqrt.pop %v418
        %v420 = vmul.f32 %v412, %v419
        %v421 = vld [vmem:[%s1] sm:$0x1]
        %v423 = vlaneseq
        %v424 = vshrl.u32 %v423, 7
        %v425 = vsub.s32 0, %v424
        %v426 = vrot.slane %v421, %v425
        %v428 = vmul.f32 %v420, %v426
        %v429 = vld [vmem:[%s2] sm:$0x1]
        %v431 = vlaneseq
        %v432 = vshrl.u32 %v431, 7
        %v433 = vsub.s32 0, %v432
        %v434 = vrot.slane %v429, %v433
        %v436 = vadd.f32 %v428, %v434
        %v437 = vpack.c.bf16 %v436, %v436
        %v438 = vld [vmem:[#allocation5] sm:$0xf]
        %v439 = vld [vmem:[#allocation5 + $0x4] sm:$0xf]
        %v440 = vld [vmem:[#allocation5 + $0x8] sm:$0xf]
        %v441 = vld [vmem:[#allocation5 + $0xc] sm:$0xf]
        %v446 = vunpack.c.l.b16 %v438
        %v447 = vunpack.c.l.b16 %v439
        %v448 = vunpack.c.l.b16 %v440
        %v449 = vunpack.c.l.b16 %v441
        %v450 = vpack.c.b16 %v447, %v446
        %v451 = vpack.c.b16 %v449, %v448
        %v455 = vsel %vm406, %v437, 0
        %457 = vmatprep.subr.bf16.mxu0 0
        %458 = vmatpush1.bf16.msra.mxu0 %v450
        %459 = vmatprep.subr.bf16.mxu0 0
        %460 = vmatpush1.bf16.msra.mxu0 %v451
        %461 = vmatprep.subr.bf16.mxu0 0
        %462 = vmatpush1.bf16.msra.mxu0 0
        %463 = vmatprep.subr.bf16.mxu0 0
        %464 = vmatpush1.bf16.msra.mxu0 0
        %465 = vmatprep.subr.bf16.mxu0 0
        %466 = vmatpush1.bf16.msra.mxu0 0
        %467 = vmatprep.subr.bf16.mxu0 0
        %468 = vmatpush1.bf16.msra.mxu0 0
        %469 = vmatprep.subr.bf16.mxu0 0
        %470 = vmatpush1.bf16.msra.mxu0 0
        %471 = vmatprep.subr.bf16.mxu0 0
        %472 = vmatpush1.bf16.msra.mxu0 0
        %473 = vmatprep.subr.bf16.mxu0 0
        %474 = vmatpush1.bf16.msra.mxu0 0
        %475 = vmatprep.subr.bf16.mxu0 0
        %476 = vmatpush1.bf16.msra.mxu0 0
        %477 = vmatprep.subr.bf16.mxu0 0
        %478 = vmatpush1.bf16.msra.mxu0 0
        %479 = vmatprep.subr.bf16.mxu0 0
        %480 = vmatpush1.bf16.msra.mxu0 0
        %481 = vmatprep.subr.bf16.mxu0 0
        %482 = vmatpush1.bf16.msra.mxu0 0
        %483 = vmatprep.subr.bf16.mxu0 0
        %484 = vmatpush1.bf16.msra.mxu0 0
        %485 = vmatprep.subr.bf16.mxu0 0
        %486 = vmatpush1.bf16.msra.mxu0 0
        %487 = vmatprep.subr.bf16.mxu0 0
        %488 = vmatpush1.bf16.msra.mxu0 0
        %489 = vmatprep.mubr.bf16.mxu0 0
        %490 = vmatmul.mubr.bf16.gmra.mrb[0].mxu0 %v455
        %v491 = vpop.f32.mrb[0].mxu0
        %v492 = vadd.f32 0.0, %v491
        %v493 = vpop.f32.mrb[0].mxu0
        %v494 = vpop.f32.mrb[0].mxu0
        %v495 = vpop.f32.mrb[0].mxu0
        %496 = vdwg.mxu0
        %v497 = vpack.c.bf16 %v492, %v492
        %vm498 = vcmask 519168
        %499 = vst.msk [vmem:[%s389] sm:$0xf] %vm498, %v497
        %v500 = vld [vmem:[#allocation7] sm:$0xf]
        %v501 = vld [vmem:[#allocation7 + $0x4] sm:$0xf]
        %v502 = vld [vmem:[#allocation7 + $0x8] sm:$0xf]
        %v503 = vld [vmem:[#allocation7 + $0xc] sm:$0xf]
        %v508 = vunpack.c.l.b16 %v500
        %v509 = vunpack.c.l.b16 %v501
        %v510 = vunpack.c.l.b16 %v502
        %v511 = vunpack.c.l.b16 %v503
        %v512 = vpack.c.b16 %v509, %v508
        %v513 = vpack.c.b16 %v511, %v510
        %516 = vmatprep.subr.bf16.mxu0 0
        %517 = vmatpush1.bf16.msra.mxu0 %v512
        %518 = vmatprep.subr.bf16.mxu0 0
        %519 = vmatpush1.bf16.msra.mxu0 %v513
        %520 = vmatprep.subr.bf16.mxu0 0
        %521 = vmatpush1.bf16.msra.mxu0 0
        %522 = vmatprep.subr.bf16.mxu0 0
        %523 = vmatpush1.bf16.msra.mxu0 0
        %524 = vmatprep.subr.bf16.mxu0 0
        %525 = vmatpush1.bf16.msra.mxu0 0
        %526 = vmatprep.subr.bf16.mxu0 0
        %527 = vmatpush1.bf16.msra.mxu0 0
        %528 = vmatprep.subr.bf16.mxu0 0
        %529 = vmatpush1.bf16.msra.mxu0 0
        %530 = vmatprep.subr.bf16.mxu0 0
        %531 = vmatpush1.bf16.msra.mxu0 0
        %532 = vmatprep.subr.bf16.mxu0 0
        %533 = vmatpush1.bf16.msra.mxu0 0
        %534 = vmatprep.subr.bf16.mxu0 0
        %535 = vmatpush1.bf16.msra.mxu0 0
        %536 = vmatprep.subr.bf16.mxu0 0
        %537 = vmatpush1.bf16.msra.mxu0 0
        %538 = vmatprep.subr.bf16.mxu0 0
        %539 = vmatpush1.bf16.msra.mxu0 0
        %540 = vmatprep.subr.bf16.mxu0 0
        %541 = vmatpush1.bf16.msra.mxu0 0
        %542 = vmatprep.subr.bf16.mxu0 0
        %543 = vmatpush1.bf16.msra.mxu0 0
        %544 = vmatprep.subr.bf16.mxu0 0
        %545 = vmatpush1.bf16.msra.mxu0 0
        %546 = vmatprep.subr.bf16.mxu0 0
        %547 = vmatpush1.bf16.msra.mxu0 0
        %548 = vmatprep.mubr.bf16.mxu0 0
        %549 = vmatmul.mubr.bf16.gmra.mrb[0].mxu0 %v455
        %v550 = vpop.f32.mrb[0].mxu0
        %v551 = vadd.f32 0.0, %v550
        %v552 = vpop.f32.mrb[0].mxu0
        %v553 = vpop.f32.mrb[0].mxu0
        %v554 = vpop.f32.mrb[0].mxu0
        %555 = vdwg.mxu0
        %v556 = vpack.c.bf16 %v551, %v551
        %557 = vst.msk [vmem:[%s396] sm:$0xf] %vm498, %v556
        %v558 = vld [vmem:[#allocation8] sm:$0xf]
        %v559 = vld [vmem:[#allocation8 + $0x4] sm:$0xf]
        %v560 = vld [vmem:[#allocation8 + $0x8] sm:$0xf]
        %v561 = vld [vmem:[#allocation8 + $0xc] sm:$0xf]
        %v566 = vunpack.c.l.b16 %v558
        %v567 = vunpack.c.l.b16 %v559
        %v568 = vunpack.c.l.b16 %v560
        %v569 = vunpack.c.l.b16 %v561
        %v570 = vpack.c.b16 %v567, %v566
        %v571 = vpack.c.b16 %v569, %v568
        %574 = vmatprep.subr.bf16.mxu0 0
        %575 = vmatpush1.bf16.msra.mxu0 %v570
        %576 = vmatprep.subr.bf16.mxu0 0
        %577 = vmatpush1.bf16.msra.mxu0 %v571
        %578 = vmatprep.subr.bf16.mxu0 0
        %579 = vmatpush1.bf16.msra.mxu0 0
        %580 = vmatprep.subr.bf16.mxu0 0
        %581 = vmatpush1.bf16.msra.mxu0 0
        %582 = vmatprep.subr.bf16.mxu0 0
        %583 = vmatpush1.bf16.msra.mxu0 0
        %584 = vmatprep.subr.bf16.mxu0 0
        %585 = vmatpush1.bf16.msra.mxu0 0
        %586 = vmatprep.subr.bf16.mxu0 0
        %587 = vmatpush1.bf16.msra.mxu0 0
        %588 = vmatprep.subr.bf16.mxu0 0
        %589 = vmatpush1.bf16.msra.mxu0 0
        %590 = vmatprep.subr.bf16.mxu0 0
        %591 = vmatpush1.bf16.msra.mxu0 0
        %592 = vmatprep.subr.bf16.mxu0 0
        %593 = vmatpush1.bf16.msra.mxu0 0
        %594 = vmatprep.subr.bf16.mxu0 0
        %595 = vmatpush1.bf16.msra.mxu0 0
        %596 = vmatprep.subr.bf16.mxu0 0
        %597 = vmatpush1.bf16.msra.mxu0 0
        %598 = vmatprep.subr.bf16.mxu0 0
        %599 = vmatpush1.bf16.msra.mxu0 0
        %600 = vmatprep.subr.bf16.mxu0 0
        %601 = vmatpush1.bf16.msra.mxu0 0
        %602 = vmatprep.subr.bf16.mxu0 0
        %603 = vmatpush1.bf16.msra.mxu0 0
        %604 = vmatprep.subr.bf16.mxu0 0
        %605 = vmatpush1.bf16.msra.mxu0 0
        %606 = vmatprep.mubr.bf16.mxu0 0
        %607 = vmatmul.mubr.bf16.gmra.mrb[0].mxu0 %v455
        %v608 = vpop.f32.mrb[0].mxu0
        %v609 = vadd.f32 0.0, %v608
        %v610 = vpop.f32.mrb[0].mxu0
        %v611 = vpop.f32.mrb[0].mxu0
        %v612 = vpop.f32.mrb[0].mxu0
        %613 = vdwg.mxu0
        %v614 = vpack.c.bf16 %v609, %v609
        %615 = vst.msk [vmem:[%s403] sm:$0xf] %vm498, %v614
        %s616 = scalar_lea.vmem [#allocation5], 16
        %v617 = vld [vmem:[%s616] sm:$0xf]
        %v618 = vld [vmem:[%s616 + $0x4] sm:$0xf]
        %v619 = vld [vmem:[%s616 + $0x8] sm:$0xf]
        %v620 = vld [vmem:[%s616 + $0xc] sm:$0xf]
        %v625 = vunpack.c.l.b16 %v617
        %v626 = vunpack.c.l.b16 %v618
        %v627 = vunpack.c.l.b16 %v619
        %v628 = vunpack.c.l.b16 %v620
        %v629 = vpack.c.b16 %v626, %v625
        %v630 = vpack.c.b16 %v628, %v627
        %633 = vmatprep.subr.bf16.mxu0 0
        %634 = vmatpush1.bf16.msra.mxu0 %v629
        %635 = vmatprep.subr.bf16.mxu0 0
        %636 = vmatpush1.bf16.msra.mxu0 %v630
        %637 = vmatprep.subr.bf16.mxu0 0
        %638 = vmatpush1.bf16.msra.mxu0 0
        %639 = vmatprep.subr.bf16.mxu0 0
        %640 = vmatpush1.bf16.msra.mxu0 0
        %641 = vmatprep.subr.bf16.mxu0 0
        %642 = vmatpush1.bf16.msra.mxu0 0
        %643 = vmatprep.subr.bf16.mxu0 0
        %644 = vmatpush1.bf16.msra.mxu0 0
        %645 = vmatprep.subr.bf16.mxu0 0
        %646 = vmatpush1.bf16.msra.mxu0 0
        %647 = vmatprep.subr.bf16.mxu0 0
        %648 = vmatpush1.bf16.msra.mxu0 0
        %649 = vmatprep.subr.bf16.mxu0 0
        %650 = vmatpush1.bf16.msra.mxu0 0
        %651 = vmatprep.subr.bf16.mxu0 0
        %652 = vmatpush1.bf16.msra.mxu0 0
        %653 = vmatprep.subr.bf16.mxu0 0
        %654 = vmatpush1.bf16.msra.mxu0 0
        %655 = vmatprep.subr.bf16.mxu0 0
        %656 = vmatpush1.bf16.msra.mxu0 0
        %657 = vmatprep.subr.bf16.mxu0 0
        %658 = vmatpush1.bf16.msra.mxu0 0
        %659 = vmatprep.subr.bf16.mxu0 0
        %660 = vmatpush1.bf16.msra.mxu0 0
        %661 = vmatprep.subr.bf16.mxu0 0
        %662 = vmatpush1.bf16.msra.mxu0 0
        %663 = vmatprep.subr.bf16.mxu0 0
        %664 = vmatpush1.bf16.msra.mxu0 0
        %665 = vmatprep.mubr.bf16.mxu0 0
        %666 = vmatmul.mubr.bf16.gmra.mrb[0].mxu0 %v455
        %v667 = vpop.f32.mrb[0].mxu0
        %v668 = vadd.f32 0.0, %v667
        %v669 = vpop.f32.mrb[0].mxu0
        %v670 = vpop.f32.mrb[0].mxu0
        %v671 = vpop.f32.mrb[0].mxu0
        %672 = vdwg.mxu0
        %v673 = vpack.c.bf16 %v668, %v668
        %s674 = scalar_lea.vmem %s389, 4 [#allocation10]
        %675 = vst.msk [vmem:[%s674] sm:$0xf] %vm498, %v673
        %s676 = scalar_lea.vmem [#allocation7], 16
        %v677 = vld [vmem:[%s676] sm:$0xf]
        %v678 = vld [vmem:[%s676 + $0x4] sm:$0xf]
        %v679 = vld [vmem:[%s676 + $0x8] sm:$0xf]
        %v680 = vld [vmem:[%s676 + $0xc] sm:$0xf]
        %v685 = vunpack.c.l.b16 %v677
        %v686 = vunpack.c.l.b16 %v678
        %v687 = vunpack.c.l.b16 %v679
        %v688 = vunpack.c.l.b16 %v680
        %v689 = vpack.c.b16 %v686, %v685
        %v690 = vpack.c.b16 %v688, %v687
        %693 = vmatprep.subr.bf16.mxu0 0
        %694 = vmatpush1.bf16.msra.mxu0 %v689
        %695 = vmatprep.subr.bf16.mxu0 0
        %696 = vmatpush1.bf16.msra.mxu0 %v690
        %697 = vmatprep.subr.bf16.mxu0 0
        %698 = vmatpush1.bf16.msra.mxu0 0
        %699 = vmatprep.subr.bf16.mxu0 0
        %700 = vmatpush1.bf16.msra.mxu0 0
        %701 = vmatprep.subr.bf16.mxu0 0
        %702 = vmatpush1.bf16.msra.mxu0 0
        %703 = vmatprep.subr.bf16.mxu0 0
        %704 = vmatpush1.bf16.msra.mxu0 0
        %705 = vmatprep.subr.bf16.mxu0 0
        %706 = vmatpush1.bf16.msra.mxu0 0
        %707 = vmatprep.subr.bf16.mxu0 0
        %708 = vmatpush1.bf16.msra.mxu0 0
        %709 = vmatprep.subr.bf16.mxu0 0
        %710 = vmatpush1.bf16.msra.mxu0 0
        %711 = vmatprep.subr.bf16.mxu0 0
        %712 = vmatpush1.bf16.msra.mxu0 0
        %713 = vmatprep.subr.bf16.mxu0 0
        %714 = vmatpush1.bf16.msra.mxu0 0
        %715 = vmatprep.subr.bf16.mxu0 0
        %716 = vmatpush1.bf16.msra.mxu0 0
        %717 = vmatprep.subr.bf16.mxu0 0
        %718 = vmatpush1.bf16.msra.mxu0 0
        %719 = vmatprep.subr.bf16.mxu0 0
        %720 = vmatpush1.bf16.msra.mxu0 0
        %721 = vmatprep.subr.bf16.mxu0 0
        %722 = vmatpush1.bf16.msra.mxu0 0
        %723 = vmatprep.subr.bf16.mxu0 0
        %724 = vmatpush1.bf16.msra.mxu0 0
        %725 = vmatprep.mubr.bf16.mxu0 0
        %726 = vmatmul.mubr.bf16.gmra.mrb[0].mxu0 %v455
        %v727 = vpop.f32.mrb[0].mxu0
        %v728 = vadd.f32 0.0, %v727
        %v729 = vpop.f32.mrb[0].mxu0
        %v730 = vpop.f32.mrb[0].mxu0
        %v731 = vpop.f32.mrb[0].mxu0
        %732 = vdwg.mxu0
        %v733 = vpack.c.bf16 %v728, %v728
        %s734 = scalar_lea.vmem %s396, 4 [#allocation11]
        %735 = vst.msk [vmem:[%s734] sm:$0xf] %vm498, %v733
        %s736 = scalar_lea.vmem [#allocation8], 16
        %v737 = vld [vmem:[%s736] sm:$0xf]
        %v738 = vld [vmem:[%s736 + $0x4] sm:$0xf]
        %v739 = vld [vmem:[%s736 + $0x8] sm:$0xf]
        %v740 = vld [vmem:[%s736 + $0xc] sm:$0xf]
        %v745 = vunpack.c.l.b16 %v737
        %v746 = vunpack.c.l.b16 %v738
        %v747 = vunpack.c.l.b16 %v739
        %v748 = vunpack.c.l.b16 %v740
        %v749 = vpack.c.b16 %v746, %v745
        %v750 = vpack.c.b16 %v748, %v747
        %753 = vmatprep.subr.bf16.mxu0 0
        %754 = vmatpush1.bf16.msra.mxu0 %v749
        %755 = vmatprep.subr.bf16.mxu0 0
        %756 = vmatpush1.bf16.msra.mxu0 %v750
        %757 = vmatprep.subr.bf16.mxu0 0
        %758 = vmatpush1.bf16.msra.mxu0 0
        %759 = vmatprep.subr.bf16.mxu0 0
        %760 = vmatpush1.bf16.msra.mxu0 0
        %761 = vmatprep.subr.bf16.mxu0 0
        %762 = vmatpush1.bf16.msra.mxu0 0
        %763 = vmatprep.subr.bf16.mxu0 0
        %764 = vmatpush1.bf16.msra.mxu0 0
        %765 = vmatprep.subr.bf16.mxu0 0
        %766 = vmatpush1.bf16.msra.mxu0 0
        %767 = vmatprep.subr.bf16.mxu0 0
        %768 = vmatpush1.bf16.msra.mxu0 0
        %769 = vmatprep.subr.bf16.mxu0 0
        %770 = vmatpush1.bf16.msra.mxu0 0
        %771 = vmatprep.subr.bf16.mxu0 0
        %772 = vmatpush1.bf16.msra.mxu0 0
        %773 = vmatprep.subr.bf16.mxu0 0
        %774 = vmatpush1.bf16.msra.mxu0 0
        %775 = vmatprep.subr.bf16.mxu0 0
        %776 = vmatpush1.bf16.msra.mxu0 0
        %777 = vmatprep.subr.bf16.mxu0 0
        %778 = vmatpush1.bf16.msra.mxu0 0
        %779 = vmatprep.subr.bf16.mxu0 0
        %780 = vmatpush1.bf16.msra.mxu0 0
        %781 = vmatprep.subr.bf16.mxu0 0
        %782 = vmatpush1.bf16.msra.mxu0 0
        %783 = vmatprep.subr.bf16.mxu0 0
        %784 = vmatpush1.bf16.msra.mxu0 0
        %785 = vmatprep.mubr.bf16.mxu0 0
        %786 = vmatmul.mubr.bf16.gmra.mrb[0].mxu0 %v455
        %v787 = vpop.f32.mrb[0].mxu0
        %v788 = vadd.f32 0.0, %v787
        %v789 = vpop.f32.mrb[0].mxu0
        %v790 = vpop.f32.mrb[0].mxu0
        %v791 = vpop.f32.mrb[0].mxu0
        %792 = vdwg.mxu0
        %v793 = vpack.c.bf16 %v788, %v788
        %s794 = scalar_lea.vmem %s403, 4 [#allocation13]
        %795 = vst.msk [vmem:[%s794] sm:$0xf] %vm498, %v793
        %s796 = scalar_lea.vmem [#allocation5], 32
        %v797 = vld [vmem:[%s796] sm:$0xf]
        %v798 = vld [vmem:[%s796 + $0x4] sm:$0xf]
        %v799 = vld [vmem:[%s796 + $0x8] sm:$0xf]
        %v800 = vld [vmem:[%s796 + $0xc] sm:$0xf]
        %v805 = vunpack.c.l.b16 %v797
        %v806 = vunpack.c.l.b16 %v798
        %v807 = vunpack.c.l.b16 %v799
        %v808 = vunpack.c.l.b16 %v800
        %v809 = vpack.c.b16 %v806, %v805
        %v810 = vpack.c.b16 %v808, %v807
        %813 = vmatprep.subr.bf16.mxu0 0
        %814 = vmatpush1.bf16.msra.mxu0 %v809
        %815 = vmatprep.subr.bf16.mxu0 0
        %816 = vmatpush1.bf16.msra.mxu0 %v810
        %817 = vmatprep.subr.bf16.mxu0 0
        %818 = vmatpush1.bf16.msra.mxu0 0
        %819 = vmatprep.subr.bf16.mxu0 0
        %820 = vmatpush1.bf16.msra.mxu0 0
        %821 = vmatprep.subr.bf16.mxu0 0
        %822 = vmatpush1.bf16.msra.mxu0 0
        %823 = vmatprep.subr.bf16.mxu0 0
        %824 = vmatpush1.bf16.msra.mxu0 0
        %825 = vmatprep.subr.bf16.mxu0 0
        %826 = vmatpush1.bf16.msra.mxu0 0
        %827 = vmatprep.subr.bf16.mxu0 0
        %828 = vmatpush1.bf16.msra.mxu0 0
        %829 = vmatprep.subr.bf16.mxu0 0
        %830 = vmatpush1.bf16.msra.mxu0 0
        %831 = vmatprep.subr.bf16.mxu0 0
        %832 = vmatpush1.bf16.msra.mxu0 0
        %833 = vmatprep.subr.bf16.mxu0 0
        %834 = vmatpush1.bf16.msra.mxu0 0
        %835 = vmatprep.subr.bf16.mxu0 0
        %836 = vmatpush1.bf16.msra.mxu0 0
        %837 = vmatprep.subr.bf16.mxu0 0
        %838 = vmatpush1.bf16.msra.mxu0 0
        %839 = vmatprep.subr.bf16.mxu0 0
        %840 = vmatpush1.bf16.msra.mxu0 0
        %841 = vmatprep.subr.bf16.mxu0 0
        %842 = vmatpush1.bf16.msra.mxu0 0
        %843 = vmatprep.subr.bf16.mxu0 0
        %844 = vmatpush1.bf16.msra.mxu0 0
        %845 = vmatprep.mubr.bf16.mxu0 0
        %846 = vmatmul.mubr.bf16.gmra.mrb[0].mxu0 %v455
        %v847 = vpop.f32.mrb[0].mxu0
        %v848 = vadd.f32 0.0, %v847
        %v849 = vpop.f32.mrb[0].mxu0
        %v850 = vpop.f32.mrb[0].mxu0
        %v851 = vpop.f32.mrb[0].mxu0
        %852 = vdwg.mxu0
        %v853 = vpack.c.bf16 %v848, %v848
        %s854 = scalar_lea.vmem %s389, 8 [#allocation10]
        %855 = vst.msk [vmem:[%s854] sm:$0xf] %vm498, %v853
        %s856 = scalar_lea.vmem [#allocation7], 32
        %v857 = vld [vmem:[%s856] sm:$0xf]
        %v858 = vld [vmem:[%s856 + $0x4] sm:$0xf]
        %v859 = vld [vmem:[%s856 + $0x8] sm:$0xf]
        %v860 = vld [vmem:[%s856 + $0xc] sm:$0xf]
        %v865 = vunpack.c.l.b16 %v857
        %v866 = vunpack.c.l.b16 %v858
        %v867 = vunpack.c.l.b16 %v859
        %v868 = vunpack.c.l.b16 %v860
        %v869 = vpack.c.b16 %v866, %v865
        %v870 = vpack.c.b16 %v868, %v867
        %873 = vmatprep.subr.bf16.mxu0 0
        %874 = vmatpush1.bf16.msra.mxu0 %v869
        %875 = vmatprep.subr.bf16.mxu0 0
        %876 = vmatpush1.bf16.msra.mxu0 %v870
        %877 = vmatprep.subr.bf16.mxu0 0
        %878 = vmatpush1.bf16.msra.mxu0 0
        %879 = vmatprep.subr.bf16.mxu0 0
        %880 = vmatpush1.bf16.msra.mxu0 0
        %881 = vmatprep.subr.bf16.mxu0 0
        %882 = vmatpush1.bf16.msra.mxu0 0
        %883 = vmatprep.subr.bf16.mxu0 0
        %884 = vmatpush1.bf16.msra.mxu0 0
        %885 = vmatprep.subr.bf16.mxu0 0
        %886 = vmatpush1.bf16.msra.mxu0 0
        %887 = vmatprep.subr.bf16.mxu0 0
        %888 = vmatpush1.bf16.msra.mxu0 0
        %889 = vmatprep.subr.bf16.mxu0 0
        %890 = vmatpush1.bf16.msra.mxu0 0
        %891 = vmatprep.subr.bf16.mxu0 0
        %892 = vmatpush1.bf16.msra.mxu0 0
        %893 = vmatprep.subr.bf16.mxu0 0
        %894 = vmatpush1.bf16.msra.mxu0 0
        %895 = vmatprep.subr.bf16.mxu0 0
        %896 = vmatpush1.bf16.msra.mxu0 0
        %897 = vmatprep.subr.bf16.mxu0 0
        %898 = vmatpush1.bf16.msra.mxu0 0
        %899 = vmatprep.subr.bf16.mxu0 0
        %900 = vmatpush1.bf16.msra.mxu0 0
        %901 = vmatprep.subr.bf16.mxu0 0
        %902 = vmatpush1.bf16.msra.mxu0 0
        %903 = vmatprep.subr.bf16.mxu0 0
        %904 = vmatpush1.bf16.msra.mxu0 0
        %905 = vmatprep.mubr.bf16.mxu0 0
        %906 = vmatmul.mubr.bf16.gmra.mrb[0].mxu0 %v455
        %v907 = vpop.f32.mrb[0].mxu0
        %v908 = vadd.f32 0.0, %v907
        %v909 = vpop.f32.mrb[0].mxu0
        %v910 = vpop.f32.mrb[0].mxu0
        %v911 = vpop.f32.mrb[0].mxu0
        %912 = vdwg.mxu0
        %v913 = vpack.c.bf16 %v908, %v908
        %s914 = scalar_lea.vmem %s396, 8 [#allocation11]
        %915 = vst.msk [vmem:[%s914] sm:$0xf] %vm498, %v913
        %s916 = scalar_lea.vmem [#allocation8], 32
        %v917 = vld [vmem:[%s916] sm:$0xf]
        %v918 = vld [vmem:[%s916 + $0x4] sm:$0xf]
        %v919 = vld [vmem:[%s916 + $0x8] sm:$0xf]
        %v920 = vld [vmem:[%s916 + $0xc] sm:$0xf]
        %v925 = vunpack.c.l.b16 %v917
        %v926 = vunpack.c.l.b16 %v918
        %v927 = vunpack.c.l.b16 %v919
        %v928 = vunpack.c.l.b16 %v920
        %v929 = vpack.c.b16 %v926, %v925
        %v930 = vpack.c.b16 %v928, %v927
        %933 = vmatprep.subr.bf16.mxu0 0
        %934 = vmatpush1.bf16.msra.mxu0 %v929
        %935 = vmatprep.subr.bf16.mxu0 0
        %936 = vmatpush1.bf16.msra.mxu0 %v930
        %937 = vmatprep.subr.bf16.mxu0 0
        %938 = vmatpush1.bf16.msra.mxu0 0
        %939 = vmatprep.subr.bf16.mxu0 0
        %940 = vmatpush1.bf16.msra.mxu0 0
        %941 = vmatprep.subr.bf16.mxu0 0
        %942 = vmatpush1.bf16.msra.mxu0 0
        %943 = vmatprep.subr.bf16.mxu0 0
        %944 = vmatpush1.bf16.msra.mxu0 0
        %945 = vmatprep.subr.bf16.mxu0 0
        %946 = vmatpush1.bf16.msra.mxu0 0
        %947 = vmatprep.subr.bf16.mxu0 0
        %948 = vmatpush1.bf16.msra.mxu0 0
        %949 = vmatprep.subr.bf16.mxu0 0
        %950 = vmatpush1.bf16.msra.mxu0 0
        %951 = vmatprep.subr.bf16.mxu0 0
        %952 = vmatpush1.bf16.msra.mxu0 0
        %953 = vmatprep.subr.bf16.mxu0 0
        %954 = vmatpush1.bf16.msra.mxu0 0
        %955 = vmatprep.subr.bf16.mxu0 0
        %956 = vmatpush1.bf16.msra.mxu0 0
        %957 = vmatprep.subr.bf16.mxu0 0
        %958 = vmatpush1.bf16.msra.mxu0 0
        %959 = vmatprep.subr.bf16.mxu0 0
        %960 = vmatpush1.bf16.msra.mxu0 0
        %961 = vmatprep.subr.bf16.mxu0 0
        %962 = vmatpush1.bf16.msra.mxu0 0
        %963 = vmatprep.subr.bf16.mxu0 0
        %964 = vmatpush1.bf16.msra.mxu0 0
        %965 = vmatprep.mubr.bf16.mxu0 0
        %966 = vmatmul.mubr.bf16.gmra.mrb[0].mxu0 %v455
        %v967 = vpop.f32.mrb[0].mxu0
        %v968 = vadd.f32 0.0, %v967
        %v969 = vpop.f32.mrb[0].mxu0
        %v970 = vpop.f32.mrb[0].mxu0
        %v971 = vpop.f32.mrb[0].mxu0
        %972 = vdwg.mxu0
        %v973 = vpack.c.bf16 %v968, %v968
        %s974 = scalar_lea.vmem %s403, 8 [#allocation13]
        %975 = vst.msk [vmem:[%s974] sm:$0xf] %vm498, %v973
        %s976 = scalar_lea.vmem [#allocation5], 48
        %v977 = vld [vmem:[%s976] sm:$0xf]
        %v978 = vld [vmem:[%s976 + $0x4] sm:$0xf]
        %v979 = vld [vmem:[%s976 + $0x8] sm:$0xf]
        %v980 = vld [vmem:[%s976 + $0xc] sm:$0xf]
        %v985 = vunpack.c.l.b16 %v977
        %v986 = vunpack.c.l.b16 %v978
        %v987 = vunpack.c.l.b16 %v979
        %v988 = vunpack.c.l.b16 %v980
        %v989 = vpack.c.b16 %v986, %v985
        %v990 = vpack.c.b16 %v988, %v987
        %993 = vmatprep.subr.bf16.mxu0 0
        %994 = vmatpush1.bf16.msra.mxu0 %v989
        %995 = vmatprep.subr.bf16.mxu0 0
        %996 = vmatpush1.bf16.msra.mxu0 %v990
        %997 = vmatprep.subr.bf16.mxu0 0
        %998 = vmatpush1.bf16.msra.mxu0 0
        %999 = vmatprep.subr.bf16.mxu0 0
        %1000 = vmatpush1.bf16.msra.mxu0 0
        %1001 = vmatprep.subr.bf16.mxu0 0
        %1002 = vmatpush1.bf16.msra.mxu0 0
        %1003 = vmatprep.subr.bf16.mxu0 0
        %1004 = vmatpush1.bf16.msra.mxu0 0
        %1005 = vmatprep.subr.bf16.mxu0 0
        %1006 = vmatpush1.bf16.msra.mxu0 0
        %1007 = vmatprep.subr.bf16.mxu0 0
        %1008 = vmatpush1.bf16.msra.mxu0 0
        %1009 = vmatprep.subr.bf16.mxu0 0
        %1010 = vmatpush1.bf16.msra.mxu0 0
        %1011 = vmatprep.subr.bf16.mxu0 0
        %1012 = vmatpush1.bf16.msra.mxu0 0
        %1013 = vmatprep.subr.bf16.mxu0 0
        %1014 = vmatpush1.bf16.msra.mxu0 0
        %1015 = vmatprep.subr.bf16.mxu0 0
        %1016 = vmatpush1.bf16.msra.mxu0 0
        %1017 = vmatprep.subr.bf16.mxu0 0
        %1018 = vmatpush1.bf16.msra.mxu0 0
        %1019 = vmatprep.subr.bf16.mxu0 0
        %1020 = vmatpush1.bf16.msra.mxu0 0
        %1021 = vmatprep.subr.bf16.mxu0 0
        %1022 = vmatpush1.bf16.msra.mxu0 0
        %1023 = vmatprep.subr.bf16.mxu0 0
        %1024 = vmatpush1.bf16.msra.mxu0 0
        %1025 = vmatprep.mubr.bf16.mxu0 0
        %1026 = vmatmul.mubr.bf16.gmra.mrb[0].mxu0 %v455
        %v1027 = vpop.f32.mrb[0].mxu0
        %v1028 = vadd.f32 0.0, %v1027
        %v1029 = vpop.f32.mrb[0].mxu0
        %v1030 = vpop.f32.mrb[0].mxu0
        %v1031 = vpop.f32.mrb[0].mxu0
        %1032 = vdwg.mxu0
        %v1033 = vpack.c.bf16 %v1028, %v1028
        %s1034 = scalar_lea.vmem %s389, 12 [#allocation10]
        %1035 = vst.msk [vmem:[%s1034] sm:$0xf] %vm498, %v1033
        %s1036 = scalar_lea.vmem [#allocation7], 48
        %v1037 = vld [vmem:[%s1036] sm:$0xf]
        %v1038 = vld [vmem:[%s1036 + $0x4] sm:$0xf]
        %v1039 = vld [vmem:[%s1036 + $0x8] sm:$0xf]
        %v1040 = vld [vmem:[%s1036 + $0xc] sm:$0xf]
        %v1045 = vunpack.c.l.b16 %v1037
        %v1046 = vunpack.c.l.b16 %v1038
        %v1047 = vunpack.c.l.b16 %v1039
        %v1048 = vunpack.c.l.b16 %v1040
        %v1049 = vpack.c.b16 %v1046, %v1045
        %v1050 = vpack.c.b16 %v1048, %v1047
        %1053 = vmatprep.subr.bf16.mxu0 0
        %1054 = vmatpush1.bf16.msra.mxu0 %v1049
        %1055 = vmatprep.subr.bf16.mxu0 0
        %1056 = vmatpush1.bf16.msra.mxu0 %v1050
        %1057 = vmatprep.subr.bf16.mxu0 0
        %1058 = vmatpush1.bf16.msra.mxu0 0
        %1059 = vmatprep.subr.bf16.mxu0 0
        %1060 = vmatpush1.bf16.msra.mxu0 0
        %1061 = vmatprep.subr.bf16.mxu0 0
        %1062 = vmatpush1.bf16.msra.mxu0 0
        %1063 = vmatprep.subr.bf16.mxu0 0
        %1064 = vmatpush1.bf16.msra.mxu0 0
        %1065 = vmatprep.subr.bf16.mxu0 0
        %1066 = vmatpush1.bf16.msra.mxu0 0
        %1067 = vmatprep.subr.bf16.mxu0 0
        %1068 = vmatpush1.bf16.msra.mxu0 0
        %1069 = vmatprep.subr.bf16.mxu0 0
        %1070 = vmatpush1.bf16.msra.mxu0 0
        %1071 = vmatprep.subr.bf16.mxu0 0
        %1072 = vmatpush1.bf16.msra.mxu0 0
        %1073 = vmatprep.subr.bf16.mxu0 0
        %1074 = vmatpush1.bf16.msra.mxu0 0
        %1075 = vmatprep.subr.bf16.mxu0 0
        %1076 = vmatpush1.bf16.msra.mxu0 0
        %1077 = vmatprep.subr.bf16.mxu0 0
        %1078 = vmatpush1.bf16.msra.mxu0 0
        %1079 = vmatprep.subr.bf16.mxu0 0
        %1080 = vmatpush1.bf16.msra.mxu0 0
        %1081 = vmatprep.subr.bf16.mxu0 0
        %1082 = vmatpush1.bf16.msra.mxu0 0
        %1083 = vmatprep.subr.bf16.mxu0 0
        %1084 = vmatpush1.bf16.msra.mxu0 0
        %1085 = vmatprep.mubr.bf16.mxu0 0
        %1086 = vmatmul.mubr.bf16.gmra.mrb[0].mxu0 %v455
        %v1087 = vpop.f32.mrb[0].mxu0
        %v1088 = vadd.f32 0.0, %v1087
        %v1089 = vpop.f32.mrb[0].mxu0
        %v1090 = vpop.f32.mrb[0].mxu0
        %v1091 = vpop.f32.mrb[0].mxu0
        %1092 = vdwg.mxu0
        %v1093 = vpack.c.bf16 %v1088, %v1088
        %s1094 = scalar_lea.vmem %s396, 12 [#allocation11]
        %1095 = vst.msk [vmem:[%s1094] sm:$0xf] %vm498, %v1093
        %s1096 = scalar_lea.vmem [#allocation8], 48
        %v1097 = vld [vmem:[%s1096] sm:$0xf]
        %v1098 = vld [vmem:[%s1096 + $0x4] sm:$0xf]
        %v1099 = vld [vmem:[%s1096 + $0x8] sm:$0xf]
        %v1100 = vld [vmem:[%s1096 + $0xc] sm:$0xf]
        %v1105 = vunpack.c.l.b16 %v1097
        %v1106 = vunpack.c.l.b16 %v1098
        %v1107 = vunpack.c.l.b16 %v1099
        %v1108 = vunpack.c.l.b16 %v1100
        %v1109 = vpack.c.b16 %v1106, %v1105
        %v1110 = vpack.c.b16 %v1108, %v1107
        %1113 = vmatprep.subr.bf16.mxu0 0
        %1114 = vmatpush1.bf16.msra.mxu0 %v1109
        %1115 = vmatprep.subr.bf16.mxu0 0
        %1116 = vmatpush1.bf16.msra.mxu0 %v1110
        %1117 = vmatprep.subr.bf16.mxu0 0
        %1118 = vmatpush1.bf16.msra.mxu0 0
        %1119 = vmatprep.subr.bf16.mxu0 0
        %1120 = vmatpush1.bf16.msra.mxu0 0
        %1121 = vmatprep.subr.bf16.mxu0 0
        %1122 = vmatpush1.bf16.msra.mxu0 0
        %1123 = vmatprep.subr.bf16.mxu0 0
        %1124 = vmatpush1.bf16.msra.mxu0 0
        %1125 = vmatprep.subr.bf16.mxu0 0
        %1126 = vmatpush1.bf16.msra.mxu0 0
        %1127 = vmatprep.subr.bf16.mxu0 0
        %1128 = vmatpush1.bf16.msra.mxu0 0
        %1129 = vmatprep.subr.bf16.mxu0 0
        %1130 = vmatpush1.bf16.msra.mxu0 0
        %1131 = vmatprep.subr.bf16.mxu0 0
        %1132 = vmatpush1.bf16.msra.mxu0 0
        %1133 = vmatprep.subr.bf16.mxu0 0
        %1134 = vmatpush1.bf16.msra.mxu0 0
        %1135 = vmatprep.subr.bf16.mxu0 0
        %1136 = vmatpush1.bf16.msra.mxu0 0
        %1137 = vmatprep.subr.bf16.mxu0 0
        %1138 = vmatpush1.bf16.msra.mxu0 0
        %1139 = vmatprep.subr.bf16.mxu0 0
        %1140 = vmatpush1.bf16.msra.mxu0 0
        %1141 = vmatprep.subr.bf16.mxu0 0
        %1142 = vmatpush1.bf16.msra.mxu0 0
        %1143 = vmatprep.subr.bf16.mxu0 0
        %1144 = vmatpush1.bf16.msra.mxu0 0
        %1145 = vmatprep.mubr.bf16.mxu0 0
        %1146 = vmatmul.mubr.bf16.gmra.mrb[0].mxu0 %v455
        %v1147 = vpop.f32.mrb[0].mxu0
        %v1148 = vadd.f32 0.0, %v1147
        %v1149 = vpop.f32.mrb[0].mxu0
        %v1150 = vpop.f32.mrb[0].mxu0
        %v1151 = vpop.f32.mrb[0].mxu0
        %1152 = vdwg.mxu0
        %v1153 = vpack.c.bf16 %v1148, %v1148
        %s1154 = scalar_lea.vmem %s403, 12 [#allocation13]
        %1155 = vst.msk [vmem:[%s1154] sm:$0xf] %vm498, %v1153
        %s1156 = sand.u32 %s186, 1
        %s1157 = scalar_lea.sflag [#allocation4], %s1156
        %s1158 = sand.u32 %s186, 1
        %s1159 = smul.addr %s1158, 16
        %s1160 = scalar_lea.vmem [#allocation10], %s1159
        %s1161 = sand.u32 %s31, 1
        %s1162 = scalar_lea.sflag [#allocation12], %s1161
        %s1163 = sand.u32 %s214, 1
        %s1164 = smul.addr %s1163, 16
        %s1165 = scalar_lea.vmem [#allocation11], %s1164
        %s1166 = sand.u32 %s31, 1
        %s1167 = scalar_lea.sflag [#allocation12], %s1166
        %s1168 = sand.u32 %s242, 1
        %s1169 = smul.addr %s1168, 16
        %s1170 = scalar_lea.vmem [#allocation13], %s1169
        // Predicated region
        $region61: #{tpu_custom_call.1} parent=43 // pred_check
          %p1171 = pneg %p196
        $region62: #{tpu_custom_call.1} parent=43 // pred_check_branch
          %1173 = sbr.rel (%p1171) target = $region64
        $region63: #{tpu_custom_call.1} parent=43 // pred_region
          %s1175 = ssub.s32 256, 256
          %1176 = vsyncadd %s1157, %s1175
          %s1177 = smul.addr %s35, 4
          %s1178 = sadd.s32 %s36, %s1177
          %s1179 = smul.addr %s1178, 64
          %s1180 = scalar_lea.hbm %s6, %s1179
          %s1181 = sshll.u32 %s1160, 4
          %s1182 = int_to_ptr.vmem [resolvable:$true] %s1181
          %1187 = dma.vmem_to_hbm [thread:$0]  %s1182, 256, %s1180, %s1157, 64, 64, 4
        $region64: #{tpu_custom_call.1} parent=43 // pred_fallthru
          _
        // Predicated region
        $region65: #{tpu_custom_call.1} parent=43 // pred_check
          %p1188 = pneg %p224
        $region66: #{tpu_custom_call.1} parent=43 // pred_check_branch
          %1190 = sbr.rel (%p1188) target = $region68
        $region67: #{tpu_custom_call.1} parent=43 // pred_region
          %s1192 = ssub.s32 256, 256
          %1193 = vsyncadd %s1162, %s1192
          %s1194 = smul.addr %s35, 4
          %s1195 = sadd.s32 %s36, %s1194
          %s1196 = smul.addr %s1195, 64
          %s1197 = scalar_lea.hbm %s7, %s1196
          %s1198 = sshll.u32 %s1165, 4
          %s1199 = int_to_ptr.vmem [resolvable:$true] %s1198
          %1204 = dma.vmem_to_hbm [thread:$0]  %s1199, 256, %s1197, %s1162, 64, 64, 4
        $region68: #{tpu_custom_call.1} parent=43 // pred_fallthru
          _
        // Predicated region
        $region69: #{tpu_custom_call.1} parent=43 // pred_check
          %p1205 = pneg %p252
        $region70: #{tpu_custom_call.1} parent=43 // pred_check_branch
          %1207 = sbr.rel (%p1205) target = $region72
        $region71: #{tpu_custom_call.1} parent=43 // pred_region
          %s1209 = ssub.s32 256, 256
          %1210 = vsyncadd %s1167, %s1209
          %s1211 = smul.addr %s35, 4
          %s1212 = sadd.s32 %s36, %s1211
          %s1213 = smul.addr %s1212, 64
          %s1214 = scalar_lea.hbm %s8, %s1213
          %s1215 = sshll.u32 %s1170, 4
          %s1216 = int_to_ptr.vmem [resolvable:$true] %s1215
          %1221 = dma.vmem_to_hbm [thread:$0]  %s1216, 256, %s1214, %s1167, 64, 64, 4
        $region72: #{tpu_custom_call.1} parent=43 // pred_fallthru
          _
      $region44: #{tpu_custom_call.1} parent=5 // pred_fallthru
        _
      %p1222 = scmp.le.s32.totalorder 2, %s26
      // Predicated region
      $region73: #{tpu_custom_call.1} parent=5 // pred_check
        %p1223 = pneg %p1222
      $region74: #{tpu_custom_call.1} parent=5 // pred_check_branch
        %1225 = sbr.rel (%p1223) target = $region76
      $region75: #{tpu_custom_call.1} parent=5 // pred_region
        %s1226 = ssub.s32 %s26, 2
        // Predicated region
        $region77: #{tpu_custom_call.1} parent=75 // pred_check
          %p1227 = pneg %p202
        $region78: #{tpu_custom_call.1} parent=75 // pred_check_branch
          %1229 = sbr.rel (%p1227) target = $region80
        $region79: #{tpu_custom_call.1} parent=75 // pred_region
          %s1230 = sand.u32 %s187, 1
          %s1231 = scalar_lea.sflag [#allocation4], %s1230
          %s1232 = sand.u32 %s187, 1
          %s1233 = smul.addr %s1232, 16
          %s1234 = scalar_lea.vmem [#allocation10], %s1233
          %1235 = dma.done %s1231, 256
        $region80: #{tpu_custom_call.1} parent=75 // pred_fallthru
          _
        // Predicated region
        $region81: #{tpu_custom_call.1} parent=75 // pred_check
          %p1236 = pneg %p230
        $region82: #{tpu_custom_call.1} parent=75 // pred_check_branch
          %1238 = sbr.rel (%p1236) target = $region84
        $region83: #{tpu_custom_call.1} parent=75 // pred_region
          %s1239 = sand.u32 %s32, 1
          %s1240 = scalar_lea.sflag [#allocation12], %s1239
          %s1241 = sand.u32 %s215, 1
          %s1242 = smul.addr %s1241, 16
          %s1243 = scalar_lea.vmem [#allocation11], %s1242
          %1244 = dma.done %s1240, 256
        $region84: #{tpu_custom_call.1} parent=75 // pred_fallthru
          _
        // Predicated region
        $region85: #{tpu_custom_call.1} parent=75 // pred_check
          %p1245 = pneg %p258
        $region86: #{tpu_custom_call.1} parent=75 // pred_check_branch
          %1247 = sbr.rel (%p1245) target = $region88
        $region87: #{tpu_custom_call.1} parent=75 // pred_region
          %s1248 = sand.u32 %s32, 1
          %s1249 = scalar_lea.sflag [#allocation12], %s1248
          %s1250 = sand.u32 %s243, 1
          %s1251 = smul.addr %s1250, 16
          %s1252 = scalar_lea.vmem [#allocation13], %s1251
          %1253 = dma.done %s1249, 256
        $region88: #{tpu_custom_call.1} parent=75 // pred_fallthru
          _
      $region76: #{tpu_custom_call.1} parent=5 // pred_fallthru
        _
    $region6: #{tpu_custom_call.1} parent=1 // loop_footer
      %s30 = sadd.s32 1, %s26
    $region7: #{tpu_custom_call.1} parent=1 // loop_footer_branch
      %25 = sbr.rel target = $region3
    $region8: #{tpu_custom_call.1} parent=1 // loop_exit
      _
    %1254 = vsyncpa [#allocation3], 1
    %s1255 = scalar_lea.sflag [#allocation3], 1
    %1256 = vsyncpa %s1255, 1
    %1257 = vsyncpa [#allocation6], 1
    %1258 = vsyncpa [#allocation9], 1
    %1259 = vsyncpa [#allocation4], 1
    %s1260 = scalar_lea.sflag [#allocation4], 1
    %1261 = vsyncpa %s1260, 1
    %1262 = vsyncpa [#allocation12], 1
    %s1263 = scalar_lea.sflag [#allocation12], 1
    %1264 = vsyncpa %s1263, 1

// kernel: tpu_custom_call.1
$region0: #{tpu_custom_call.1}
  #allocation0 [shape = 'u32[]', space=smem, size = 0x4, offset = 0x4, fixed_abs, tag = 'smem constant byte address 0x4 - core index']
  #allocation1 [shape = 'u32[144,128]{1,0:T(1,128)}', space=vmem, size = 0x12000, scoped, tag = 'internal scratch']
  %s0 = inlined_call_operand.hbm [shape: f32[2,8,32], index: 0, kind: input, shape index: {}]
  %s1 = inlined_call_operand.vmem [shape: f32[1,32], index: 1, kind: input, shape index: {}]
  %s2 = inlined_call_operand.vmem [shape: f32[1,32], index: 2, kind: input, shape index: {}]
  %s3 = inlined_call_operand.hbm [shape: bf16[4,32,64], index: 3, kind: input, shape index: {}]
  %s4 = inlined_call_operand.hbm [shape: bf16[4,32,64], index: 4, kind: input, shape index: {}]
  %s5 = inlined_call_operand.hbm [shape: bf16[4,32,64], index: 5, kind: input, shape index: {}]
  %s6 = inlined_call_operand.hbm [shape: bf16[2,4,8,64], index: 6, kind: output, shape index: {0}]
  %s7 = inlined_call_operand.hbm [shape: bf16[2,4,8,64], index: 7, kind: output, shape index: {1}]
  %s8 = inlined_call_operand.hbm [shape: bf16[2,4,8,64], index: 8, kind: output, shape index: {2}]
  %9 = xla_tuple %s6, %s7, %s8
  %s10 = sld [smem:[#allocation0]]
  $region89: #{tpu_custom_call.1} parent=0
    _
  %s12 = ssub.s32 1, %s10
  %s13 = scalar_select 0, %s12, %s10
  $region1: #{tpu_custom_call.1} parent=0
    #allocation2 [shape = 'u8[8192]{0}', space=vmem, size = 0x2000, scoped, tag = 'input window, operand 0']
    #allocation3 [shape = 's32[2]{0}', space=sflag, size = 0x8, scoped, tag = 'scoped memory for tpu_custom_call.1']
    #allocation4 [shape = 's32[2]{0}', space=sflag, size = 0x8, scoped, tag = 'scoped memory for tpu_custom_call.1']
    #allocation5 [shape = 'u8[32768]{0}', space=vmem, size = 0x8000, scoped, tag = 'input window, operand 3, single buffered']
    #allocation6 [shape = 's32[1]{0}', space=sflag, size = 0x4, scoped, tag = 'scoped memory for tpu_custom_call.1']
    #allocation7 [shape = 'u8[32768]{0}', space=vmem, size = 0x8000, scoped, tag = 'input window, operand 4, single buffered']
    #allocation8 [shape = 'u8[32768]{0}', space=vmem, size = 0x8000, scoped, tag = 'input window, operand 5, single buffered']
    #allocation9 [shape = 's32[1]{0}', space=sflag, size = 0x4, scoped, tag = 'scoped memory for tpu_custom_call.1']
    #allocation10 [shape = 'u8[16384]{0}', space=vmem, size = 0x4000, scoped, tag = 'output window, operand 0']
    #allocation11 [shape = 'u8[16384]{0}', space=vmem, size = 0x4000, scoped, tag = 'output window, operand 1']
    #allocation12 [shape = 's32[2]{0}', space=sflag, size = 0x8, scoped, tag = 'scoped memory for tpu_custom_call.1']
    #allocation13 [shape = 'u8[16384]{0}', space=vmem, size = 0x4000, scoped, tag = 'output window, operand 2']
    %14 = vsyncpa [#allocation3], 0
    %s15 = scalar_lea.sflag [#allocation3], 1
    %16 = vsyncpa %s15, 0
    %17 = vsyncpa [#allocation6], 0
    %18 = vsyncpa [#allocation9], 0
    %19 = vsyncpa [#allocation4], 0
    %s20 = scalar_lea.sflag [#allocation4], 1
    %21 = vsyncpa %s20, 0
    %22 = vsyncpa [#allocation12], 0
    %s23 = scalar_lea.sflag [#allocation12], 1
    %24 = vsyncpa %s23, 0
    loop: start=0, step=1, limit=4
    $region2: #{tpu_custom_call.1} parent=1 // loop_pre_header
      _
    $region3: #{tpu_custom_call.1} parent=1 // loop_header
      %s26 = sphi 0, %s30
      %p27 = scmp.ge.s32.totalorder %s26, 4
      %s33 = sphi 0, %s45
      %s34 = sphi 0, %s41
      %s35 = sphi 0, %s33
      %s36 = sphi 0, %s34
      %s37 = sphi 0, %s35
      %s38 = sphi 0, %s36
      %s50 = sphi 0, %s52
      %s53 = sphi 0, %s50
      %s54 = sphi 0, %s53
      %s70 = sphi 0, %s54
      %s74 = sphi 0, %s74
      %s76 = sphi 0, %s74
      %s77 = sphi 0, %s76
      %s91 = sphi 0, %s77
      %s95 = sphi 0, %s95
      %s97 = sphi 0, %s95
      %s98 = sphi 0, %s97
      %s112 = sphi 0, %s98
      %s116 = sphi 0, %s116
      %s118 = sphi 0, %s116
      %s119 = sphi 0, %s118
      %s133 = sphi 0, %s119
      %s137 = sphi 0, %s137
      %s139 = sphi 0, %s137
      %s140 = sphi 0, %s139
      %s154 = sphi 0, %s140
      %s158 = sphi 0, %s158
      %s160 = sphi 0, %s158
      %s161 = sphi 0, %s160
      %s175 = sphi 0, %s161
      %s183 = sphi 0, %s185
      %s186 = sphi 0, %s183
      %s187 = sphi 0, %s186
      %s203 = sphi 0, %s187
      %s211 = sphi 0, %s213
      %s214 = sphi 0, %s211
      %s215 = sphi 0, %s214
      %s231 = sphi 0, %s215
      %s239 = sphi 0, %s241
      %s242 = sphi 0, %s239
      %s243 = sphi 0, %s242
      %s259 = sphi 0, %s243
    $region4: #{tpu_custom_call.1} parent=1 // loop_header_branch
      %29 = sbr.rel (%p27) target = $region8
    $region5: #{tpu_custom_call.1} parent=1 // loop_body
      %s31 = ssub.s32 %s26, 1
      %s32 = ssub.s32 %s26, 2
      %s39 = sadd.s32 1, %s34
      %p40 = scmp.ge.s32.totalorder %s39, 1
      %s41 = scalar_select %p40, 0, %s39
      %s42 = sadd.s32 1, %s33
      %s43 = scalar_select %p40, %s42, %s33
      %p44 = scmp.ge.s32.totalorder %s43, 2
      %s45 = scalar_select %p44, 0, %s43
      %s46 = ssub.s32 %s33, %s45
      %s47 = ssub.s32 %s34, %s41
      %s48 = sor.u32 %s46, %s47
      %p49 = scmp.eq.s32.totalorder %s48, 0
      %s51 = sadd.s32 %s50, 1
      %s52 = scalar_select %p49, %s50, %s51
      %p55 = pneg %p49
      %p56 = scmp.eq.s32.totalorder %s26, 1
      %p57 = por %p55, %p56
      %p58 = scmp.ne.s32.totalorder %s50, %s53
      %p59 = scmp.eq.s32.totalorder %s26, 0
      %p60 = por %p58, %p59
      %p61 = scmp.ne.s32.totalorder %s50, %s53
      %p62 = scmp.eq.s32.totalorder %s31, 1
      %p63 = por %p61, %p62
      %p64 = scmp.ne.s32.totalorder %s53, %s54
      %p65 = scmp.eq.s32.totalorder %s31, 0
      %p66 = por %p64, %p65
      %p67 = scmp.ne.s32.totalorder %s53, %s54
      %p68 = scmp.eq.s32.totalorder %s32, 1
      %p69 = por %p67, %p68
      %p71 = scmp.ne.s32.totalorder %s54, %s70
      %p72 = scmp.eq.s32.totalorder %s32, 0
      %p73 = por %p71, %p72
      %s75 = sadd.s32 %s74, 1
      %p78 = scmp.eq.s32.totalorder %s26, 1
      %p79 = scmp.ne.s32.totalorder %s74, %s76
      %p80 = scmp.eq.s32.totalorder %s26, 0
      %p81 = por %p79, %p80
      %p82 = scmp.ne.s32.totalorder %s74, %s76
      %p83 = scmp.eq.s32.totalorder %s31, 1
      %p84 = por %p82, %p83
      %p85 = scmp.ne.s32.totalorder %s76, %s77
      %p86 = scmp.eq.s32.totalorder %s31, 0
      %p87 = por %p85, %p86
      %p88 = scmp.ne.s32.totalorder %s76, %s77
      %p89 = scmp.eq.s32.totalorder %s32, 1
      %p90 = por %p88, %p89
      %p92 = scmp.ne.s32.totalorder %s77, %s91
      %p93 = scmp.eq.s32.totalorder %s32, 0
      %p94 = por %p92, %p93
      %s96 = sadd.s32 %s95, 1
      %p99 = scmp.eq.s32.totalorder %s26, 1
      %p100 = scmp.ne.s32.totalorder %s95, %s97
      %p101 = scmp.eq.s32.totalorder %s26, 0
      %p102 = por %p100, %p101
      %p103 = scmp.ne.s32.totalorder %s95, %s97
      %p104 = scmp.eq.s32.totalorder %s31, 1
      %p105 = por %p103, %p104
      %p106 = scmp.ne.s32.totalorder %s97, %s98
      %p107 = scmp.eq.s32.totalorder %s31, 0
      %p108 = por %p106, %p107
      %p109 = scmp.ne.s32.totalorder %s97, %s98
      %p110 = scmp.eq.s32.totalorder %s32, 1
      %p111 = por %p109, %p110
      %p113 = scmp.ne.s32.totalorder %s98, %s112
      %p114 = scmp.eq.s32.totalorder %s32, 0
      %p115 = por %p113, %p114
      %s117 = sadd.s32 %s116, 1
      %p120 = scmp.eq.s32.totalorder %s26, 1
      %p121 = scmp.ne.s32.totalorder %s116, %s118
      %p122 = scmp.eq.s32.totalorder %s26, 0
      %p123 = por %p121, %p122
      %p124 = scmp.ne.s32.totalorder %s116, %s118
      %p125 = scmp.eq.s32.totalorder %s31, 1
      %p126 = por %p124, %p125
      %p127 = scmp.ne.s32.totalorder %s118, %s119
      %p128 = scmp.eq.s32.totalorder %s31, 0
      %p129 = por %p127, %p128
      %p130 = scmp.ne.s32.totalorder %s118, %s119
      %p131 = scmp.eq.s32.totalorder %s32, 1
      %p132 = por %p130, %p131
      %p134 = scmp.ne.s32.totalorder %s119, %s133
      %p135 = scmp.eq.s32.totalorder %s32, 0
      %p136 = por %p134, %p135
      %s138 = sadd.s32 %s137, 1
      %p141 = scmp.eq.s32.totalorder %s26, 1
      %p142 = scmp.ne.s32.totalorder %s137, %s139
      %p143 = scmp.eq.s32.totalorder %s26, 0
      %p144 = por %p142, %p143
      %p145 = scmp.ne.s32.totalorder %s137, %s139
      %p146 = scmp.eq.s32.totalorder %s31, 1
      %p147 = por %p145, %p146
      %p148 = scmp.ne.s32.totalorder %s139, %s140
      %p149 = scmp.eq.s32.totalorder %s31, 0
      %p150 = por %p148, %p149
      %p151 = scmp.ne.s32.totalorder %s139, %s140
      %p152 = scmp.eq.s32.totalorder %s32, 1
      %p153 = por %p151, %p152
      %p155 = scmp.ne.s32.totalorder %s140, %s154
      %p156 = scmp.eq.s32.totalorder %s32, 0
      %p157 = por %p155, %p156
      %s159 = sadd.s32 %s158, 1
      %p162 = scmp.eq.s32.totalorder %s26, 1
      %p163 = scmp.ne.s32.totalorder %s158, %s160
      %p164 = scmp.eq.s32.totalorder %s26, 0
      %p165 = por %p163, %p164
      %p166 = scmp.ne.s32.totalorder %s158, %s160
      %p167 = scmp.eq.s32.totalorder %s31, 1
      %p168 = por %p166, %p167
      %p169 = scmp.ne.s32.totalorder %s160, %s161
      %p170 = scmp.eq.s32.totalorder %s31, 0
      %p171 = por %p169, %p170
      %p172 = scmp.ne.s32.totalorder %s160, %s161
      %p173 = scmp.eq.s32.totalorder %s32, 1
      %p174 = por %p172, %p173
      %p176 = scmp.ne.s32.totalorder %s161, %s175
      %p177 = scmp.eq.s32.totalorder %s32, 0
      %p178 = por %p176, %p177
      %s179 = ssub.s32 %s33, %s45
      %s180 = ssub.s32 %s34, %s41
      %s181 = sor.u32 %s179, %s180
      %p182 = scmp.eq.s32.totalorder %s181, 0
      %s184 = sadd.s32 %s183, 1
      %s185 = scalar_select %p182, %s183, %s184
      %p188 = pneg %p182
      %p189 = scmp.eq.s32.totalorder %s26, 1
      %p190 = por %p188, %p189
      %p191 = scmp.ne.s32.totalorder %s183, %s186
      %p192 = scmp.eq.s32.totalorder %s26, 0
      %p193 = por %p191, %p192
      %p194 = scmp.ne.s32.totalorder %s183, %s186
      %p195 = scmp.eq.s32.totalorder %s31, 1
      %p196 = por %p194, %p195
      %p197 = scmp.ne.s32.totalorder %s186, %s187
      %p198 = scmp.eq.s32.totalorder %s31, 0
      %p199 = por %p197, %p198
      %p200 = scmp.ne.s32.totalorder %s186, %s187
      %p201 = scmp.eq.s32.totalorder %s32, 1
      %p202 = por %p200, %p201
      %p204 = scmp.ne.s32.totalorder %s187, %s203
      %p205 = scmp.eq.s32.totalorder %s32, 0
      %p206 = por %p204, %p205
      %s207 = ssub.s32 %s33, %s45
      %s208 = ssub.s32 %s34, %s41
      %s209 = sor.u32 %s207, %s208
      %p210 = scmp.eq.s32.totalorder %s209, 0
      %s212 = sadd.s32 %s211, 1
      %s213 = scalar_select %p210, %s211, %s212
      %p216 = pneg %p210
      %p217 = scmp.eq.s32.totalorder %s26, 1
      %p218 = por %p216, %p217
      %p219 = scmp.ne.s32.totalorder %s211, %s214
      %p220 = scmp.eq.s32.totalorder %s26, 0
      %p221 = por %p219, %p220
      %p222 = scmp.ne.s32.totalorder %s211, %s214
      %p223 = scmp.eq.s32.totalorder %s31, 1
      %p224 = por %p222, %p223
      %p225 = scmp.ne.s32.totalorder %s214, %s215
      %p226 = scmp.eq.s32.totalorder %s31, 0
      %p227 = por %p225, %p226
      %p228 = scmp.ne.s32.totalorder %s214, %s215
      %p229 = scmp.eq.s32.totalorder %s32, 1
      %p230 = por %p228, %p229
      %p232 = scmp.ne.s32.totalorder %s215, %s231
      %p233 = scmp.eq.s32.totalorder %s32, 0
      %p234 = por %p232, %p233
      %s235 = ssub.s32 %s33, %s45
      %s236 = ssub.s32 %s34, %s41
      %s237 = sor.u32 %s235, %s236
      %p238 = scmp.eq.s32.totalorder %s237, 0
      %s240 = sadd.s32 %s239, 1
      %s241 = scalar_select %p238, %s239, %s240
      %p244 = pneg %p238
      %p245 = scmp.eq.s32.totalorder %s26, 1
      %p246 = por %p244, %p245
      %p247 = scmp.ne.s32.totalorder %s239, %s242
      %p248 = scmp.eq.s32.totalorder %s26, 0
      %p249 = por %p247, %p248
      %p250 = scmp.ne.s32.totalorder %s239, %s242
      %p251 = scmp.eq.s32.totalorder %s31, 1
      %p252 = por %p250, %p251
      %p253 = scmp.ne.s32.totalorder %s242, %s243
      %p254 = scmp.eq.s32.totalorder %s31, 0
      %p255 = por %p253, %p254
      %p256 = scmp.ne.s32.totalorder %s242, %s243
      %p257 = scmp.eq.s32.totalorder %s32, 1
      %p258 = por %p256, %p257
      %p260 = scmp.ne.s32.totalorder %s243, %s259
      %p261 = scmp.eq.s32.totalorder %s32, 0
      %p262 = por %p260, %p261
      %p263 = scmp.le.s32.totalorder 1, %s26
      %p264 = scmp.lt.s32.totalorder %s26, 3
      %p265 = pnand %p263, %p264
      %p266 = pneg %p265
      // Predicated region
      $region9: #{tpu_custom_call.1} parent=5 // pred_check
        _
      $region10: #{tpu_custom_call.1} parent=5 // pred_check_branch
        %268 = sbr.rel (%p265) target = $region12
      $region11: #{tpu_custom_call.1} parent=5 // pred_region
        %s269 = ssub.s32 %s26, 1
        // Predicated region
        $region13: #{tpu_custom_call.1} parent=11 // pred_check
          %p270 = pneg %p87
        $region14: #{tpu_custom_call.1} parent=11 // pred_check_branch
          %272 = sbr.rel (%p270) target = $region16
        $region15: #{tpu_custom_call.1} parent=11 // pred_region
          _
        $region16: #{tpu_custom_call.1} parent=11 // pred_fallthru
          _
        // Predicated region
        $region17: #{tpu_custom_call.1} parent=11 // pred_check
          %p273 = pneg %p108
        $region18: #{tpu_custom_call.1} parent=11 // pred_check_branch
          %275 = sbr.rel (%p273) target = $region20
        $region19: #{tpu_custom_call.1} parent=11 // pred_region
          _
        $region20: #{tpu_custom_call.1} parent=11 // pred_fallthru
          _
        // Predicated region
        $region21: #{tpu_custom_call.1} parent=11 // pred_check
          %p276 = pneg %p129
        $region22: #{tpu_custom_call.1} parent=11 // pred_check_branch
          %278 = sbr.rel (%p276) target = $region24
        $region23: #{tpu_custom_call.1} parent=11 // pred_region
          %s280 = ssub.s32 1024, 1024
          %281 = vsyncadd [#allocation6], %s280
          %s282 = sshll.u32 [#allocation5], 4
          %s283 = int_to_ptr.vmem [resolvable:$true] %s282
          %288 = dma.hbm_to_vmem [thread:$0]  %s3, 1024, %s283, [#allocation6], 64, 64, 4
        $region24: #{tpu_custom_call.1} parent=11 // pred_fallthru
          _
        // Predicated region
        $region25: #{tpu_custom_call.1} parent=11 // pred_check
          %p289 = pneg %p150
        $region26: #{tpu_custom_call.1} parent=11 // pred_check_branch
          %291 = sbr.rel (%p289) target = $region28
        $region27: #{tpu_custom_call.1} parent=11 // pred_region
          %s293 = ssub.s32 1024, 1024
          %294 = vsyncadd [#allocation6], %s293
          %s295 = sshll.u32 [#allocation7], 4
          %s296 = int_to_ptr.vmem [resolvable:$true] %s295
          %301 = dma.hbm_to_vmem [thread:$0]  %s4, 1024, %s296, [#allocation6], 64, 64, 4
        $region28: #{tpu_custom_call.1} parent=11 // pred_fallthru
          _
        // Predicated region
        $region29: #{tpu_custom_call.1} parent=11 // pred_check
          %p302 = pneg %p171
        $region30: #{tpu_custom_call.1} parent=11 // pred_check_branch
          %304 = sbr.rel (%p302) target = $region32
        $region31: #{tpu_custom_call.1} parent=11 // pred_region
          %s306 = ssub.s32 1024, 1024
          %307 = vsyncadd [#allocation9], %s306
          %s308 = sshll.u32 [#allocation8], 4
          %s309 = int_to_ptr.vmem [resolvable:$true] %s308
          %314 = dma.hbm_to_vmem [thread:$0]  %s5, 1024, %s309, [#allocation9], 64, 64, 4
        $region32: #{tpu_custom_call.1} parent=11 // pred_fallthru
          _
      $region12: #{tpu_custom_call.1} parent=5 // pred_fallthru
        _
      %p315 = scmp.lt.s32.totalorder %s26, 2
      // Predicated region
      $region33: #{tpu_custom_call.1} parent=5 // pred_check
        %p316 = pneg %p315
      $region34: #{tpu_custom_call.1} parent=5 // pred_check_branch
        %318 = sbr.rel (%p316) target = $region36
      $region35: #{tpu_custom_call.1} parent=5 // pred_region
        // Predicated region
        $region37: #{tpu_custom_call.1} parent=35 // pred_check
          %p319 = pneg %p60
        $region38: #{tpu_custom_call.1} parent=35 // pred_check_branch
          %321 = sbr.rel (%p319) target = $region40
        $region39: #{tpu_custom_call.1} parent=35 // pred_region
          %s322 = sand.u32 %s50, 1
          %s323 = scalar_lea.sflag [#allocation3], %s322
          %s324 = sand.u32 %s50, 1
          %s325 = smul.addr %s324, 8
          %s326 = scalar_lea.vmem [#allocation2], %s325
          %s328 = ssub.s32 128, 128
          %329 = vsyncadd %s323, %s328
          %s330 = sadd.s32 %s34, %s33
          %s331 = smul.addr %s330, 128
          %s332 = scalar_lea.hbm %s0, %s331
          %s334 = sshll.u32 %s326, 4
          %s335 = int_to_ptr.vmem [resolvable:$true] %s334
          %337 = dma.hbm_to_vmem [thread:$0]  %s332, 128, %s335, %s323
        $region40: #{tpu_custom_call.1} parent=35 // pred_fallthru
          _
      $region36: #{tpu_custom_call.1} parent=5 // pred_fallthru
        _
      %p338 = scmp.le.s32.totalorder 1, %s26
      %p339 = scmp.lt.s32.totalorder %s26, 3
      %p340 = pnand %p338, %p339
      %p341 = pneg %p340
      // Predicated region
      $region41: #{tpu_custom_call.1} parent=5 // pred_check
        _
      $region42: #{tpu_custom_call.1} parent=5 // pred_check_branch
        %343 = sbr.rel (%p340) target = $region44
      $region43: #{tpu_custom_call.1} parent=5 // pred_region
        %s344 = ssub.s32 %s26, 1
        %s345 = sand.u32 %s53, 1
        %s346 = scalar_lea.sflag [#allocation3], %s345
        %s347 = sand.u32 %s53, 1
        %s348 = smul.addr %s347, 8
        %s349 = scalar_lea.vmem [#allocation2], %s348
        // Predicated region
        $region45: #{tpu_custom_call.1} parent=43 // pred_check
          %p350 = pneg %p66
        $region46: #{tpu_custom_call.1} parent=43 // pred_check_branch
          %352 = sbr.rel (%p350) target = $region48
        $region47: #{tpu_custom_call.1} parent=43 // pred_region
          %353 = dma.done %s346, 128
        $region48: #{tpu_custom_call.1} parent=43 // pred_fallthru
          _
        // Predicated region
        $region49: #{tpu_custom_call.1} parent=43 // pred_check
          %p354 = pneg %p129
        $region50: #{tpu_custom_call.1} parent=43 // pred_check_branch
          %356 = sbr.rel (%p354) target = $region52
        $region51: #{tpu_custom_call.1} parent=43 // pred_region
          %357 = dma.done [#allocation6], 1024
        $region52: #{tpu_custom_call.1} parent=43 // pred_fallthru
          _
        // Predicated region
        $region53: #{tpu_custom_call.1} parent=43 // pred_check
          %p358 = pneg %p150
        $region54: #{tpu_custom_call.1} parent=43 // pred_check_branch
          %360 = sbr.rel (%p358) target = $region56
        $region55: #{tpu_custom_call.1} parent=43 // pred_region
          %361 = dma.done [#allocation6], 1024
        $region56: #{tpu_custom_call.1} parent=43 // pred_fallthru
          _
        // Predicated region
        $region57: #{tpu_custom_call.1} parent=43 // pred_check
          %p362 = pneg %p171
        $region58: #{tpu_custom_call.1} parent=43 // pred_check_branch
          %364 = sbr.rel (%p362) target = $region60
        $region59: #{tpu_custom_call.1} parent=43 // pred_region
          %365 = dma.done [#allocation9], 1024
        $region60: #{tpu_custom_call.1} parent=43 // pred_fallthru
          _
        %s366 = sand.u32 %s53, 1
        %s367 = scalar_lea.sflag [#allocation3], %s366
        %s368 = sand.u32 %s53, 1
        %s369 = smul.addr %s368, 8
        %s370 = scalar_lea.vmem [#allocation2], %s369
        %p371 = pneg %p66
        %p372 = pneg %p63
        %p373 = pneg %p87
        %p374 = pneg %p84
        %p375 = pneg %p108
        %p376 = pneg %p105
        %p377 = pneg %p129
        %p378 = pneg %p126
        %p379 = pneg %p150
        %p380 = pneg %p147
        %p381 = pneg %p171
        %p382 = pneg %p168
        %p383 = pneg %p199
        %p384 = pneg %p196
        %s385 = sand.u32 %s186, 1
        %s386 = scalar_lea.sflag [#allocation4], %s385
        %s387 = sand.u32 %s186, 1
        %s388 = smul.addr %s387, 16
        %s389 = scalar_lea.vmem [#allocation10], %s388
        %p390 = pneg %p227
        %p391 = pneg %p224
        %s392 = sand.u32 %s31, 1
        %s393 = scalar_lea.sflag [#allocation12], %s392
        %s394 = sand.u32 %s214, 1
        %s395 = smul.addr %s394, 16
        %s396 = scalar_lea.vmem [#allocation11], %s395
        %p397 = pneg %p255
        %p398 = pneg %p252
        %s399 = sand.u32 %s31, 1
        %s400 = scalar_lea.sflag [#allocation12], %s399
        %s401 = sand.u32 %s242, 1
        %s402 = smul.addr %s401, 16
        %s403 = scalar_lea.vmem [#allocation13], %s402
        %v405 = vld [vmem:[%s349] sm:$0xff]
        %vm406 = vcmask 261120
        %v407 = vsel %vm406, %v405, 0.0
        %408 = vadd.xlane.f32.xlu0 %v407
        %v409 = vpop.xlane.xlu0 %408
        %v410 = vrcp.pop 32.0
        %v411 = vmul.f32 %v409, %v410
        %v412 = vsub.f32 %v405, %v411
        %v413 = vmul.f32 %v412, %v412
        %v414 = vsel %vm406, %v413, 0.0
        %415 = vadd.xlane.f32.xlu0 %v414
        %v416 = vpop.xlane.xlu0 %415
        %v417 = vmul.f32 %v416, %v410
        %v418 = vadd.f32 %v417, 1e-05
        %v419 = vrsqrt.pop %v418
        %v420 = vmul.f32 %v412, %v419
        %v421 = vld [vmem:[%s1] sm:$0x1]
        %v423 = vlaneseq
        %v424 = vshrl.u32 %v423, 7
        %v425 = vsub.s32 0, %v424
        %v426 = vrot.slane %v421, %v425
        %v428 = vmul.f32 %v420, %v426
        %v429 = vld [vmem:[%s2] sm:$0x1]
        %v431 = vlaneseq
        %v432 = vshrl.u32 %v431, 7
        %v433 = vsub.s32 0, %v432
        %v434 = vrot.slane %v429, %v433
        %v436 = vadd.f32 %v428, %v434
        %v437 = vpack.c.bf16 %v436, %v436
        %v438 = vld [vmem:[#allocation5] sm:$0xf]
        %v439 = vld [vmem:[#allocation5 + $0x4] sm:$0xf]
        %v440 = vld [vmem:[#allocation5 + $0x8] sm:$0xf]
        %v441 = vld [vmem:[#allocation5 + $0xc] sm:$0xf]
        %v446 = vunpack.c.l.b16 %v438
        %v447 = vunpack.c.l.b16 %v439
        %v448 = vunpack.c.l.b16 %v440
        %v449 = vunpack.c.l.b16 %v441
        %v450 = vpack.c.b16 %v447, %v446
        %v451 = vpack.c.b16 %v449, %v448
        %v455 = vsel %vm406, %v437, 0
        %457 = vmatprep.subr.bf16.mxu0 0
        %458 = vmatpush1.bf16.msra.mxu0 %v450
        %459 = vmatprep.subr.bf16.mxu0 0
        %460 = vmatpush1.bf16.msra.mxu0 %v451
        %461 = vmatprep.subr.bf16.mxu0 0
        %462 = vmatpush1.bf16.msra.mxu0 0
        %463 = vmatprep.subr.bf16.mxu0 0
        %464 = vmatpush1.bf16.msra.mxu0 0
        %465 = vmatprep.subr.bf16.mxu0 0
        %466 = vmatpush1.bf16.msra.mxu0 0
        %467 = vmatprep.subr.bf16.mxu0 0
        %468 = vmatpush1.bf16.msra.mxu0 0
        %469 = vmatprep.subr.bf16.mxu0 0
        %470 = vmatpush1.bf16.msra.mxu0 0
        %471 = vmatprep.subr.bf16.mxu0 0
        %472 = vmatpush1.bf16.msra.mxu0 0
        %473 = vmatprep.subr.bf16.mxu0 0
        %474 = vmatpush1.bf16.msra.mxu0 0
        %475 = vmatprep.subr.bf16.mxu0 0
        %476 = vmatpush1.bf16.msra.mxu0 0
        %477 = vmatprep.subr.bf16.mxu0 0
        %478 = vmatpush1.bf16.msra.mxu0 0
        %479 = vmatprep.subr.bf16.mxu0 0
        %480 = vmatpush1.bf16.msra.mxu0 0
        %481 = vmatprep.subr.bf16.mxu0 0
        %482 = vmatpush1.bf16.msra.mxu0 0
        %483 = vmatprep.subr.bf16.mxu0 0
        %484 = vmatpush1.bf16.msra.mxu0 0
        %485 = vmatprep.subr.bf16.mxu0 0
        %486 = vmatpush1.bf16.msra.mxu0 0
        %487 = vmatprep.subr.bf16.mxu0 0
        %488 = vmatpush1.bf16.msra.mxu0 0
        %489 = vmatprep.mubr.bf16.mxu0 0
        %490 = vmatmul.mubr.bf16.gmra.mrb[0].mxu0 %v455
        %v491 = vpop.f32.mrb[0].mxu0
        %v492 = vadd.f32 0.0, %v491
        %v493 = vpop.f32.mrb[0].mxu0
        %v494 = vpop.f32.mrb[0].mxu0
        %v495 = vpop.f32.mrb[0].mxu0
        %496 = vdwg.mxu0
        %v497 = vpack.c.bf16 %v492, %v492
        %vm498 = vcmask 519168
        %499 = vst.msk [vmem:[%s389] sm:$0xf] %vm498, %v497
        %v500 = vld [vmem:[#allocation7] sm:$0xf]
        %v501 = vld [vmem:[#allocation7 + $0x4] sm:$0xf]
        %v502 = vld [vmem:[#allocation7 + $0x8] sm:$0xf]
        %v503 = vld [vmem:[#allocation7 + $0xc] sm:$0xf]
        %v508 = vunpack.c.l.b16 %v500
        %v509 = vunpack.c.l.b16 %v501
        %v510 = vunpack.c.l.b16 %v502
        %v511 = vunpack.c.l.b16 %v503
        %v512 = vpack.c.b16 %v509, %v508
        %v513 = vpack.c.b16 %v511, %v510
        %516 = vmatprep.subr.bf16.mxu0 0
        %517 = vmatpush1.bf16.msra.mxu0 %v512
        %518 = vmatprep.subr.bf16.mxu0 0
        %519 = vmatpush1.bf16.msra.mxu0 %v513
        %520 = vmatprep.subr.bf16.mxu0 0
        %521 = vmatpush1.bf16.msra.mxu0 0
        %522 = vmatprep.subr.bf16.mxu0 0
        %523 = vmatpush1.bf16.msra.mxu0 0
        %524 = vmatprep.subr.bf16.mxu0 0
        %525 = vmatpush1.bf16.msra.mxu0 0
        %526 = vmatprep.subr.bf16.mxu0 0
        %527 = vmatpush1.bf16.msra.mxu0 0
        %528 = vmatprep.subr.bf16.mxu0 0
        %529 = vmatpush1.bf16.msra.mxu0 0
        %530 = vmatprep.subr.bf16.mxu0 0
        %531 = vmatpush1.bf16.msra.mxu0 0
        %532 = vmatprep.subr.bf16.mxu0 0
        %533 = vmatpush1.bf16.msra.mxu0 0
        %534 = vmatprep.subr.bf16.mxu0 0
        %535 = vmatpush1.bf16.msra.mxu0 0
        %536 = vmatprep.subr.bf16.mxu0 0
        %537 = vmatpush1.bf16.msra.mxu0 0
        %538 = vmatprep.subr.bf16.mxu0 0
        %539 = vmatpush1.bf16.msra.mxu0 0
        %540 = vmatprep.subr.bf16.mxu0 0
        %541 = vmatpush1.bf16.msra.mxu0 0
        %542 = vmatprep.subr.bf16.mxu0 0
        %543 = vmatpush1.bf16.msra.mxu0 0
        %544 = vmatprep.subr.bf16.mxu0 0
        %545 = vmatpush1.bf16.msra.mxu0 0
        %546 = vmatprep.subr.bf16.mxu0 0
        %547 = vmatpush1.bf16.msra.mxu0 0
        %548 = vmatprep.mubr.bf16.mxu0 0
        %549 = vmatmul.mubr.bf16.gmra.mrb[0].mxu0 %v455
        %v550 = vpop.f32.mrb[0].mxu0
        %v551 = vadd.f32 0.0, %v550
        %v552 = vpop.f32.mrb[0].mxu0
        %v553 = vpop.f32.mrb[0].mxu0
        %v554 = vpop.f32.mrb[0].mxu0
        %555 = vdwg.mxu0
        %v556 = vpack.c.bf16 %v551, %v551
        %557 = vst.msk [vmem:[%s396] sm:$0xf] %vm498, %v556
        %v558 = vld [vmem:[#allocation8] sm:$0xf]
        %v559 = vld [vmem:[#allocation8 + $0x4] sm:$0xf]
        %v560 = vld [vmem:[#allocation8 + $0x8] sm:$0xf]
        %v561 = vld [vmem:[#allocation8 + $0xc] sm:$0xf]
        %v566 = vunpack.c.l.b16 %v558
        %v567 = vunpack.c.l.b16 %v559
        %v568 = vunpack.c.l.b16 %v560
        %v569 = vunpack.c.l.b16 %v561
        %v570 = vpack.c.b16 %v567, %v566
        %v571 = vpack.c.b16 %v569, %v568
        %574 = vmatprep.subr.bf16.mxu0 0
        %575 = vmatpush1.bf16.msra.mxu0 %v570
        %576 = vmatprep.subr.bf16.mxu0 0
        %577 = vmatpush1.bf16.msra.mxu0 %v571
        %578 = vmatprep.subr.bf16.mxu0 0
        %579 = vmatpush1.bf16.msra.mxu0 0
        %580 = vmatprep.subr.bf16.mxu0 0
        %581 = vmatpush1.bf16.msra.mxu0 0
        %582 = vmatprep.subr.bf16.mxu0 0
        %583 = vmatpush1.bf16.msra.mxu0 0
        %584 = vmatprep.subr.bf16.mxu0 0
        %585 = vmatpush1.bf16.msra.mxu0 0
        %586 = vmatprep.subr.bf16.mxu0 0
        %587 = vmatpush1.bf16.msra.mxu0 0
        %588 = vmatprep.subr.bf16.mxu0 0
        %589 = vmatpush1.bf16.msra.mxu0 0
        %590 = vmatprep.subr.bf16.mxu0 0
        %591 = vmatpush1.bf16.msra.mxu0 0
        %592 = vmatprep.subr.bf16.mxu0 0
        %593 = vmatpush1.bf16.msra.mxu0 0
        %594 = vmatprep.subr.bf16.mxu0 0
        %595 = vmatpush1.bf16.msra.mxu0 0
        %596 = vmatprep.subr.bf16.mxu0 0
        %597 = vmatpush1.bf16.msra.mxu0 0
        %598 = vmatprep.subr.bf16.mxu0 0
        %599 = vmatpush1.bf16.msra.mxu0 0
        %600 = vmatprep.subr.bf16.mxu0 0
        %601 = vmatpush1.bf16.msra.mxu0 0
        %602 = vmatprep.subr.bf16.mxu0 0
        %603 = vmatpush1.bf16.msra.mxu0 0
        %604 = vmatprep.subr.bf16.mxu0 0
        %605 = vmatpush1.bf16.msra.mxu0 0
        %606 = vmatprep.mubr.bf16.mxu0 0
        %607 = vmatmul.mubr.bf16.gmra.mrb[0].mxu0 %v455
        %v608 = vpop.f32.mrb[0].mxu0
        %v609 = vadd.f32 0.0, %v608
        %v610 = vpop.f32.mrb[0].mxu0
        %v611 = vpop.f32.mrb[0].mxu0
        %v612 = vpop.f32.mrb[0].mxu0
        %613 = vdwg.mxu0
        %v614 = vpack.c.bf16 %v609, %v609
        %615 = vst.msk [vmem:[%s403] sm:$0xf] %vm498, %v614
        %s616 = scalar_lea.vmem [#allocation5], 16
        %v617 = vld [vmem:[%s616] sm:$0xf]
        %v618 = vld [vmem:[%s616 + $0x4] sm:$0xf]
        %v619 = vld [vmem:[%s616 + $0x8] sm:$0xf]
        %v620 = vld [vmem:[%s616 + $0xc] sm:$0xf]
        %v625 = vunpack.c.l.b16 %v617
        %v626 = vunpack.c.l.b16 %v618
        %v627 = vunpack.c.l.b16 %v619
        %v628 = vunpack.c.l.b16 %v620
        %v629 = vpack.c.b16 %v626, %v625
        %v630 = vpack.c.b16 %v628, %v627
        %633 = vmatprep.subr.bf16.mxu0 0
        %634 = vmatpush1.bf16.msra.mxu0 %v629
        %635 = vmatprep.subr.bf16.mxu0 0
        %636 = vmatpush1.bf16.msra.mxu0 %v630
        %637 = vmatprep.subr.bf16.mxu0 0
        %638 = vmatpush1.bf16.msra.mxu0 0
        %639 = vmatprep.subr.bf16.mxu0 0
        %640 = vmatpush1.bf16.msra.mxu0 0
        %641 = vmatprep.subr.bf16.mxu0 0
        %642 = vmatpush1.bf16.msra.mxu0 0
        %643 = vmatprep.subr.bf16.mxu0 0
        %644 = vmatpush1.bf16.msra.mxu0 0
        %645 = vmatprep.subr.bf16.mxu0 0
        %646 = vmatpush1.bf16.msra.mxu0 0
        %647 = vmatprep.subr.bf16.mxu0 0
        %648 = vmatpush1.bf16.msra.mxu0 0
        %649 = vmatprep.subr.bf16.mxu0 0
        %650 = vmatpush1.bf16.msra.mxu0 0
        %651 = vmatprep.subr.bf16.mxu0 0
        %652 = vmatpush1.bf16.msra.mxu0 0
        %653 = vmatprep.subr.bf16.mxu0 0
        %654 = vmatpush1.bf16.msra.mxu0 0
        %655 = vmatprep.subr.bf16.mxu0 0
        %656 = vmatpush1.bf16.msra.mxu0 0
        %657 = vmatprep.subr.bf16.mxu0 0
        %658 = vmatpush1.bf16.msra.mxu0 0
        %659 = vmatprep.subr.bf16.mxu0 0
        %660 = vmatpush1.bf16.msra.mxu0 0
        %661 = vmatprep.subr.bf16.mxu0 0
        %662 = vmatpush1.bf16.msra.mxu0 0
        %663 = vmatprep.subr.bf16.mxu0 0
        %664 = vmatpush1.bf16.msra.mxu0 0
        %665 = vmatprep.mubr.bf16.mxu0 0
        %666 = vmatmul.mubr.bf16.gmra.mrb[0].mxu0 %v455
        %v667 = vpop.f32.mrb[0].mxu0
        %v668 = vadd.f32 0.0, %v667
        %v669 = vpop.f32.mrb[0].mxu0
        %v670 = vpop.f32.mrb[0].mxu0
        %v671 = vpop.f32.mrb[0].mxu0
        %672 = vdwg.mxu0
        %v673 = vpack.c.bf16 %v668, %v668
        %s674 = scalar_lea.vmem %s389, 4 [#allocation10]
        %675 = vst.msk [vmem:[%s674] sm:$0xf] %vm498, %v673
        %s676 = scalar_lea.vmem [#allocation7], 16
        %v677 = vld [vmem:[%s676] sm:$0xf]
        %v678 = vld [vmem:[%s676 + $0x4] sm:$0xf]
        %v679 = vld [vmem:[%s676 + $0x8] sm:$0xf]
        %v680 = vld [vmem:[%s676 + $0xc] sm:$0xf]
        %v685 = vunpack.c.l.b16 %v677
        %v686 = vunpack.c.l.b16 %v678
        %v687 = vunpack.c.l.b16 %v679
        %v688 = vunpack.c.l.b16 %v680
        %v689 = vpack.c.b16 %v686, %v685
        %v690 = vpack.c.b16 %v688, %v687
        %693 = vmatprep.subr.bf16.mxu0 0
        %694 = vmatpush1.bf16.msra.mxu0 %v689
        %695 = vmatprep.subr.bf16.mxu0 0
        %696 = vmatpush1.bf16.msra.mxu0 %v690
        %697 = vmatprep.subr.bf16.mxu0 0
        %698 = vmatpush1.bf16.msra.mxu0 0
        %699 = vmatprep.subr.bf16.mxu0 0
        %700 = vmatpush1.bf16.msra.mxu0 0
        %701 = vmatprep.subr.bf16.mxu0 0
        %702 = vmatpush1.bf16.msra.mxu0 0
        %703 = vmatprep.subr.bf16.mxu0 0
        %704 = vmatpush1.bf16.msra.mxu0 0
        %705 = vmatprep.subr.bf16.mxu0 0
        %706 = vmatpush1.bf16.msra.mxu0 0
        %707 = vmatprep.subr.bf16.mxu0 0
        %708 = vmatpush1.bf16.msra.mxu0 0
        %709 = vmatprep.subr.bf16.mxu0 0
        %710 = vmatpush1.bf16.msra.mxu0 0
        %711 = vmatprep.subr.bf16.mxu0 0
        %712 = vmatpush1.bf16.msra.mxu0 0
        %713 = vmatprep.subr.bf16.mxu0 0
        %714 = vmatpush1.bf16.msra.mxu0 0
        %715 = vmatprep.subr.bf16.mxu0 0
        %716 = vmatpush1.bf16.msra.mxu0 0
        %717 = vmatprep.subr.bf16.mxu0 0
        %718 = vmatpush1.bf16.msra.mxu0 0
        %719 = vmatprep.subr.bf16.mxu0 0
        %720 = vmatpush1.bf16.msra.mxu0 0
        %721 = vmatprep.subr.bf16.mxu0 0
        %722 = vmatpush1.bf16.msra.mxu0 0
        %723 = vmatprep.subr.bf16.mxu0 0
        %724 = vmatpush1.bf16.msra.mxu0 0
        %725 = vmatprep.mubr.bf16.mxu0 0
        %726 = vmatmul.mubr.bf16.gmra.mrb[0].mxu0 %v455
        %v727 = vpop.f32.mrb[0].mxu0
        %v728 = vadd.f32 0.0, %v727
        %v729 = vpop.f32.mrb[0].mxu0
        %v730 = vpop.f32.mrb[0].mxu0
        %v731 = vpop.f32.mrb[0].mxu0
        %732 = vdwg.mxu0
        %v733 = vpack.c.bf16 %v728, %v728
        %s734 = scalar_lea.vmem %s396, 4 [#allocation11]
        %735 = vst.msk [vmem:[%s734] sm:$0xf] %vm498, %v733
        %s736 = scalar_lea.vmem [#allocation8], 16
        %v737 = vld [vmem:[%s736] sm:$0xf]
        %v738 = vld [vmem:[%s736 + $0x4] sm:$0xf]
        %v739 = vld [vmem:[%s736 + $0x8] sm:$0xf]
        %v740 = vld [vmem:[%s736 + $0xc] sm:$0xf]
        %v745 = vunpack.c.l.b16 %v737
        %v746 = vunpack.c.l.b16 %v738
        %v747 = vunpack.c.l.b16 %v739
        %v748 = vunpack.c.l.b16 %v740
        %v749 = vpack.c.b16 %v746, %v745
        %v750 = vpack.c.b16 %v748, %v747
        %753 = vmatprep.subr.bf16.mxu0 0
        %754 = vmatpush1.bf16.msra.mxu0 %v749
        %755 = vmatprep.subr.bf16.mxu0 0
        %756 = vmatpush1.bf16.msra.mxu0 %v750
        %757 = vmatprep.subr.bf16.mxu0 0
        %758 = vmatpush1.bf16.msra.mxu0 0
        %759 = vmatprep.subr.bf16.mxu0 0
        %760 = vmatpush1.bf16.msra.mxu0 0
        %761 = vmatprep.subr.bf16.mxu0 0
        %762 = vmatpush1.bf16.msra.mxu0 0
        %763 = vmatprep.subr.bf16.mxu0 0
        %764 = vmatpush1.bf16.msra.mxu0 0
        %765 = vmatprep.subr.bf16.mxu0 0
        %766 = vmatpush1.bf16.msra.mxu0 0
        %767 = vmatprep.subr.bf16.mxu0 0
        %768 = vmatpush1.bf16.msra.mxu0 0
        %769 = vmatprep.subr.bf16.mxu0 0
        %770 = vmatpush1.bf16.msra.mxu0 0
        %771 = vmatprep.subr.bf16.mxu0 0
        %772 = vmatpush1.bf16.msra.mxu0 0
        %773 = vmatprep.subr.bf16.mxu0 0
        %774 = vmatpush1.bf16.msra.mxu0 0
        %775 = vmatprep.subr.bf16.mxu0 0
        %776 = vmatpush1.bf16.msra.mxu0 0
        %777 = vmatprep.subr.bf16.mxu0 0
        %778 = vmatpush1.bf16.msra.mxu0 0
        %779 = vmatprep.subr.bf16.mxu0 0
        %780 = vmatpush1.bf16.msra.mxu0 0
        %781 = vmatprep.subr.bf16.mxu0 0
        %782 = vmatpush1.bf16.msra.mxu0 0
        %783 = vmatprep.subr.bf16.mxu0 0
        %784 = vmatpush1.bf16.msra.mxu0 0
        %785 = vmatprep.mubr.bf16.mxu0 0
        %786 = vmatmul.mubr.bf16.gmra.mrb[0].mxu0 %v455
        %v787 = vpop.f32.mrb[0].mxu0
        %v788 = vadd.f32 0.0, %v787
        %v789 = vpop.f32.mrb[0].mxu0
        %v790 = vpop.f32.mrb[0].mxu0
        %v791 = vpop.f32.mrb[0].mxu0
        %792 = vdwg.mxu0
        %v793 = vpack.c.bf16 %v788, %v788
        %s794 = scalar_lea.vmem %s403, 4 [#allocation13]
        %795 = vst.msk [vmem:[%s794] sm:$0xf] %vm498, %v793
        %s796 = scalar_lea.vmem [#allocation5], 32
        %v797 = vld [vmem:[%s796] sm:$0xf]
        %v798 = vld [vmem:[%s796 + $0x4] sm:$0xf]
        %v799 = vld [vmem:[%s796 + $0x8] sm:$0xf]
        %v800 = vld [vmem:[%s796 + $0xc] sm:$0xf]
        %v805 = vunpack.c.l.b16 %v797
        %v806 = vunpack.c.l.b16 %v798
        %v807 = vunpack.c.l.b16 %v799
        %v808 = vunpack.c.l.b16 %v800
        %v809 = vpack.c.b16 %v806, %v805
        %v810 = vpack.c.b16 %v808, %v807
        %813 = vmatprep.subr.bf16.mxu0 0
        %814 = vmatpush1.bf16.msra.mxu0 %v809
        %815 = vmatprep.subr.bf16.mxu0 0
        %816 = vmatpush1.bf16.msra.mxu0 %v810
        %817 = vmatprep.subr.bf16.mxu0 0
        %818 = vmatpush1.bf16.msra.mxu0 0
        %819 = vmatprep.subr.bf16.mxu0 0
        %820 = vmatpush1.bf16.msra.mxu0 0
        %821 = vmatprep.subr.bf16.mxu0 0
        %822 = vmatpush1.bf16.msra.mxu0 0
        %823 = vmatprep.subr.bf16.mxu0 0
        %824 = vmatpush1.bf16.msra.mxu0 0
        %825 = vmatprep.subr.bf16.mxu0 0
        %826 = vmatpush1.bf16.msra.mxu0 0
        %827 = vmatprep.subr.bf16.mxu0 0
        %828 = vmatpush1.bf16.msra.mxu0 0
        %829 = vmatprep.subr.bf16.mxu0 0
        %830 = vmatpush1.bf16.msra.mxu0 0
        %831 = vmatprep.subr.bf16.mxu0 0
        %832 = vmatpush1.bf16.msra.mxu0 0
        %833 = vmatprep.subr.bf16.mxu0 0
        %834 = vmatpush1.bf16.msra.mxu0 0
        %835 = vmatprep.subr.bf16.mxu0 0
        %836 = vmatpush1.bf16.msra.mxu0 0
        %837 = vmatprep.subr.bf16.mxu0 0
        %838 = vmatpush1.bf16.msra.mxu0 0
        %839 = vmatprep.subr.bf16.mxu0 0
        %840 = vmatpush1.bf16.msra.mxu0 0
        %841 = vmatprep.subr.bf16.mxu0 0
        %842 = vmatpush1.bf16.msra.mxu0 0
        %843 = vmatprep.subr.bf16.mxu0 0
        %844 = vmatpush1.bf16.msra.mxu0 0
        %845 = vmatprep.mubr.bf16.mxu0 0
        %846 = vmatmul.mubr.bf16.gmra.mrb[0].mxu0 %v455
        %v847 = vpop.f32.mrb[0].mxu0
        %v848 = vadd.f32 0.0, %v847
        %v849 = vpop.f32.mrb[0].mxu0
        %v850 = vpop.f32.mrb[0].mxu0
        %v851 = vpop.f32.mrb[0].mxu0
        %852 = vdwg.mxu0
        %v853 = vpack.c.bf16 %v848, %v848
        %s854 = scalar_lea.vmem %s389, 8 [#allocation10]
        %855 = vst.msk [vmem:[%s854] sm:$0xf] %vm498, %v853
        %s856 = scalar_lea.vmem [#allocation7], 32
        %v857 = vld [vmem:[%s856] sm:$0xf]
        %v858 = vld [vmem:[%s856 + $0x4] sm:$0xf]
        %v859 = vld [vmem:[%s856 + $0x8] sm:$0xf]
        %v860 = vld [vmem:[%s856 + $0xc] sm:$0xf]
        %v865 = vunpack.c.l.b16 %v857
        %v866 = vunpack.c.l.b16 %v858
        %v867 = vunpack.c.l.b16 %v859
        %v868 = vunpack.c.l.b16 %v860
        %v869 = vpack.c.b16 %v866, %v865
        %v870 = vpack.c.b16 %v868, %v867
        %873 = vmatprep.subr.bf16.mxu0 0
        %874 = vmatpush1.bf16.msra.mxu0 %v869
        %875 = vmatprep.subr.bf16.mxu0 0
        %876 = vmatpush1.bf16.msra.mxu0 %v870
        %877 = vmatprep.subr.bf16.mxu0 0
        %878 = vmatpush1.bf16.msra.mxu0 0
        %879 = vmatprep.subr.bf16.mxu0 0
        %880 = vmatpush1.bf16.msra.mxu0 0
        %881 = vmatprep.subr.bf16.mxu0 0
        %882 = vmatpush1.bf16.msra.mxu0 0
        %883 = vmatprep.subr.bf16.mxu0 0
        %884 = vmatpush1.bf16.msra.mxu0 0
        %885 = vmatprep.subr.bf16.mxu0 0
        %886 = vmatpush1.bf16.msra.mxu0 0
        %887 = vmatprep.subr.bf16.mxu0 0
        %888 = vmatpush1.bf16.msra.mxu0 0
        %889 = vmatprep.subr.bf16.mxu0 0
        %890 = vmatpush1.bf16.msra.mxu0 0
        %891 = vmatprep.subr.bf16.mxu0 0
        %892 = vmatpush1.bf16.msra.mxu0 0
        %893 = vmatprep.subr.bf16.mxu0 0
        %894 = vmatpush1.bf16.msra.mxu0 0
        %895 = vmatprep.subr.bf16.mxu0 0
        %896 = vmatpush1.bf16.msra.mxu0 0
        %897 = vmatprep.subr.bf16.mxu0 0
        %898 = vmatpush1.bf16.msra.mxu0 0
        %899 = vmatprep.subr.bf16.mxu0 0
        %900 = vmatpush1.bf16.msra.mxu0 0
        %901 = vmatprep.subr.bf16.mxu0 0
        %902 = vmatpush1.bf16.msra.mxu0 0
        %903 = vmatprep.subr.bf16.mxu0 0
        %904 = vmatpush1.bf16.msra.mxu0 0
        %905 = vmatprep.mubr.bf16.mxu0 0
        %906 = vmatmul.mubr.bf16.gmra.mrb[0].mxu0 %v455
        %v907 = vpop.f32.mrb[0].mxu0
        %v908 = vadd.f32 0.0, %v907
        %v909 = vpop.f32.mrb[0].mxu0
        %v910 = vpop.f32.mrb[0].mxu0
        %v911 = vpop.f32.mrb[0].mxu0
        %912 = vdwg.mxu0
        %v913 = vpack.c.bf16 %v908, %v908
        %s914 = scalar_lea.vmem %s396, 8 [#allocation11]
        %915 = vst.msk [vmem:[%s914] sm:$0xf] %vm498, %v913
        %s916 = scalar_lea.vmem [#allocation8], 32
        %v917 = vld [vmem:[%s916] sm:$0xf]
        %v918 = vld [vmem:[%s916 + $0x4] sm:$0xf]
        %v919 = vld [vmem:[%s916 + $0x8] sm:$0xf]
        %v920 = vld [vmem:[%s916 + $0xc] sm:$0xf]
        %v925 = vunpack.c.l.b16 %v917
        %v926 = vunpack.c.l.b16 %v918
        %v927 = vunpack.c.l.b16 %v919
        %v928 = vunpack.c.l.b16 %v920
        %v929 = vpack.c.b16 %v926, %v925
        %v930 = vpack.c.b16 %v928, %v927
        %933 = vmatprep.subr.bf16.mxu0 0
        %934 = vmatpush1.bf16.msra.mxu0 %v929
        %935 = vmatprep.subr.bf16.mxu0 0
        %936 = vmatpush1.bf16.msra.mxu0 %v930
        %937 = vmatprep.subr.bf16.mxu0 0
        %938 = vmatpush1.bf16.msra.mxu0 0
        %939 = vmatprep.subr.bf16.mxu0 0
        %940 = vmatpush1.bf16.msra.mxu0 0
        %941 = vmatprep.subr.bf16.mxu0 0
        %942 = vmatpush1.bf16.msra.mxu0 0
        %943 = vmatprep.subr.bf16.mxu0 0
        %944 = vmatpush1.bf16.msra.mxu0 0
        %945 = vmatprep.subr.bf16.mxu0 0
        %946 = vmatpush1.bf16.msra.mxu0 0
        %947 = vmatprep.subr.bf16.mxu0 0
        %948 = vmatpush1.bf16.msra.mxu0 0
        %949 = vmatprep.subr.bf16.mxu0 0
        %950 = vmatpush1.bf16.msra.mxu0 0
        %951 = vmatprep.subr.bf16.mxu0 0
        %952 = vmatpush1.bf16.msra.mxu0 0
        %953 = vmatprep.subr.bf16.mxu0 0
        %954 = vmatpush1.bf16.msra.mxu0 0
        %955 = vmatprep.subr.bf16.mxu0 0
        %956 = vmatpush1.bf16.msra.mxu0 0
        %957 = vmatprep.subr.bf16.mxu0 0
        %958 = vmatpush1.bf16.msra.mxu0 0
        %959 = vmatprep.subr.bf16.mxu0 0
        %960 = vmatpush1.bf16.msra.mxu0 0
        %961 = vmatprep.subr.bf16.mxu0 0
        %962 = vmatpush1.bf16.msra.mxu0 0
        %963 = vmatprep.subr.bf16.mxu0 0
        %964 = vmatpush1.bf16.msra.mxu0 0
        %965 = vmatprep.mubr.bf16.mxu0 0
        %966 = vmatmul.mubr.bf16.gmra.mrb[0].mxu0 %v455
        %v967 = vpop.f32.mrb[0].mxu0
        %v968 = vadd.f32 0.0, %v967
        %v969 = vpop.f32.mrb[0].mxu0
        %v970 = vpop.f32.mrb[0].mxu0
        %v971 = vpop.f32.mrb[0].mxu0
        %972 = vdwg.mxu0
        %v973 = vpack.c.bf16 %v968, %v968
        %s974 = scalar_lea.vmem %s403, 8 [#allocation13]
        %975 = vst.msk [vmem:[%s974] sm:$0xf] %vm498, %v973
        %s976 = scalar_lea.vmem [#allocation5], 48
        %v977 = vld [vmem:[%s976] sm:$0xf]
        %v978 = vld [vmem:[%s976 + $0x4] sm:$0xf]
        %v979 = vld [vmem:[%s976 + $0x8] sm:$0xf]
        %v980 = vld [vmem:[%s976 + $0xc] sm:$0xf]
        %v985 = vunpack.c.l.b16 %v977
        %v986 = vunpack.c.l.b16 %v978
        %v987 = vunpack.c.l.b16 %v979
        %v988 = vunpack.c.l.b16 %v980
        %v989 = vpack.c.b16 %v986, %v985
        %v990 = vpack.c.b16 %v988, %v987
        %993 = vmatprep.subr.bf16.mxu0 0
        %994 = vmatpush1.bf16.msra.mxu0 %v989
        %995 = vmatprep.subr.bf16.mxu0 0
        %996 = vmatpush1.bf16.msra.mxu0 %v990
        %997 = vmatprep.subr.bf16.mxu0 0
        %998 = vmatpush1.bf16.msra.mxu0 0
        %999 = vmatprep.subr.bf16.mxu0 0
        %1000 = vmatpush1.bf16.msra.mxu0 0
        %1001 = vmatprep.subr.bf16.mxu0 0
        %1002 = vmatpush1.bf16.msra.mxu0 0
        %1003 = vmatprep.subr.bf16.mxu0 0
        %1004 = vmatpush1.bf16.msra.mxu0 0
        %1005 = vmatprep.subr.bf16.mxu0 0
        %1006 = vmatpush1.bf16.msra.mxu0 0
        %1007 = vmatprep.subr.bf16.mxu0 0
        %1008 = vmatpush1.bf16.msra.mxu0 0
        %1009 = vmatprep.subr.bf16.mxu0 0
        %1010 = vmatpush1.bf16.msra.mxu0 0
        %1011 = vmatprep.subr.bf16.mxu0 0
        %1012 = vmatpush1.bf16.msra.mxu0 0
        %1013 = vmatprep.subr.bf16.mxu0 0
        %1014 = vmatpush1.bf16.msra.mxu0 0
        %1015 = vmatprep.subr.bf16.mxu0 0
        %1016 = vmatpush1.bf16.msra.mxu0 0
        %1017 = vmatprep.subr.bf16.mxu0 0
        %1018 = vmatpush1.bf16.msra.mxu0 0
        %1019 = vmatprep.subr.bf16.mxu0 0
        %1020 = vmatpush1.bf16.msra.mxu0 0
        %1021 = vmatprep.subr.bf16.mxu0 0
        %1022 = vmatpush1.bf16.msra.mxu0 0
        %1023 = vmatprep.subr.bf16.mxu0 0
        %1024 = vmatpush1.bf16.msra.mxu0 0
        %1025 = vmatprep.mubr.bf16.mxu0 0
        %1026 = vmatmul.mubr.bf16.gmra.mrb[0].mxu0 %v455
        %v1027 = vpop.f32.mrb[0].mxu0
        %v1028 = vadd.f32 0.0, %v1027
        %v1029 = vpop.f32.mrb[0].mxu0
        %v1030 = vpop.f32.mrb[0].mxu0
        %v1031 = vpop.f32.mrb[0].mxu0
        %1032 = vdwg.mxu0
        %v1033 = vpack.c.bf16 %v1028, %v1028
        %s1034 = scalar_lea.vmem %s389, 12 [#allocation10]
        %1035 = vst.msk [vmem:[%s1034] sm:$0xf] %vm498, %v1033
        %s1036 = scalar_lea.vmem [#allocation7], 48
        %v1037 = vld [vmem:[%s1036] sm:$0xf]
        %v1038 = vld [vmem:[%s1036 + $0x4] sm:$0xf]
        %v1039 = vld [vmem:[%s1036 + $0x8] sm:$0xf]
        %v1040 = vld [vmem:[%s1036 + $0xc] sm:$0xf]
        %v1045 = vunpack.c.l.b16 %v1037
        %v1046 = vunpack.c.l.b16 %v1038
        %v1047 = vunpack.c.l.b16 %v1039
        %v1048 = vunpack.c.l.b16 %v1040
        %v1049 = vpack.c.b16 %v1046, %v1045
        %v1050 = vpack.c.b16 %v1048, %v1047
        %1053 = vmatprep.subr.bf16.mxu0 0
        %1054 = vmatpush1.bf16.msra.mxu0 %v1049
        %1055 = vmatprep.subr.bf16.mxu0 0
        %1056 = vmatpush1.bf16.msra.mxu0 %v1050
        %1057 = vmatprep.subr.bf16.mxu0 0
        %1058 = vmatpush1.bf16.msra.mxu0 0
        %1059 = vmatprep.subr.bf16.mxu0 0
        %1060 = vmatpush1.bf16.msra.mxu0 0
        %1061 = vmatprep.subr.bf16.mxu0 0
        %1062 = vmatpush1.bf16.msra.mxu0 0
        %1063 = vmatprep.subr.bf16.mxu0 0
        %1064 = vmatpush1.bf16.msra.mxu0 0
        %1065 = vmatprep.subr.bf16.mxu0 0
        %1066 = vmatpush1.bf16.msra.mxu0 0
        %1067 = vmatprep.subr.bf16.mxu0 0
        %1068 = vmatpush1.bf16.msra.mxu0 0
        %1069 = vmatprep.subr.bf16.mxu0 0
        %1070 = vmatpush1.bf16.msra.mxu0 0
        %1071 = vmatprep.subr.bf16.mxu0 0
        %1072 = vmatpush1.bf16.msra.mxu0 0
        %1073 = vmatprep.subr.bf16.mxu0 0
        %1074 = vmatpush1.bf16.msra.mxu0 0
        %1075 = vmatprep.subr.bf16.mxu0 0
        %1076 = vmatpush1.bf16.msra.mxu0 0
        %1077 = vmatprep.subr.bf16.mxu0 0
        %1078 = vmatpush1.bf16.msra.mxu0 0
        %1079 = vmatprep.subr.bf16.mxu0 0
        %1080 = vmatpush1.bf16.msra.mxu0 0
        %1081 = vmatprep.subr.bf16.mxu0 0
        %1082 = vmatpush1.bf16.msra.mxu0 0
        %1083 = vmatprep.subr.bf16.mxu0 0
        %1084 = vmatpush1.bf16.msra.mxu0 0
        %1085 = vmatprep.mubr.bf16.mxu0 0
        %1086 = vmatmul.mubr.bf16.gmra.mrb[0].mxu0 %v455
        %v1087 = vpop.f32.mrb[0].mxu0
        %v1088 = vadd.f32 0.0, %v1087
        %v1089 = vpop.f32.mrb[0].mxu0
        %v1090 = vpop.f32.mrb[0].mxu0
        %v1091 = vpop.f32.mrb[0].mxu0
        %1092 = vdwg.mxu0
        %v1093 = vpack.c.bf16 %v1088, %v1088
        %s1094 = scalar_lea.vmem %s396, 12 [#allocation11]
        %1095 = vst.msk [vmem:[%s1094] sm:$0xf] %vm498, %v1093
        %s1096 = scalar_lea.vmem [#allocation8], 48
        %v1097 = vld [vmem:[%s1096] sm:$0xf]
        %v1098 = vld [vmem:[%s1096 + $0x4] sm:$0xf]
        %v1099 = vld [vmem:[%s1096 + $0x8] sm:$0xf]
        %v1100 = vld [vmem:[%s1096 + $0xc] sm:$0xf]
        %v1105 = vunpack.c.l.b16 %v1097
        %v1106 = vunpack.c.l.b16 %v1098
        %v1107 = vunpack.c.l.b16 %v1099
        %v1108 = vunpack.c.l.b16 %v1100
        %v1109 = vpack.c.b16 %v1106, %v1105
        %v1110 = vpack.c.b16 %v1108, %v1107
        %1113 = vmatprep.subr.bf16.mxu0 0
        %1114 = vmatpush1.bf16.msra.mxu0 %v1109
        %1115 = vmatprep.subr.bf16.mxu0 0
        %1116 = vmatpush1.bf16.msra.mxu0 %v1110
        %1117 = vmatprep.subr.bf16.mxu0 0
        %1118 = vmatpush1.bf16.msra.mxu0 0
        %1119 = vmatprep.subr.bf16.mxu0 0
        %1120 = vmatpush1.bf16.msra.mxu0 0
        %1121 = vmatprep.subr.bf16.mxu0 0
        %1122 = vmatpush1.bf16.msra.mxu0 0
        %1123 = vmatprep.subr.bf16.mxu0 0
        %1124 = vmatpush1.bf16.msra.mxu0 0
        %1125 = vmatprep.subr.bf16.mxu0 0
        %1126 = vmatpush1.bf16.msra.mxu0 0
        %1127 = vmatprep.subr.bf16.mxu0 0
        %1128 = vmatpush1.bf16.msra.mxu0 0
        %1129 = vmatprep.subr.bf16.mxu0 0
        %1130 = vmatpush1.bf16.msra.mxu0 0
        %1131 = vmatprep.subr.bf16.mxu0 0
        %1132 = vmatpush1.bf16.msra.mxu0 0
        %1133 = vmatprep.subr.bf16.mxu0 0
        %1134 = vmatpush1.bf16.msra.mxu0 0
        %1135 = vmatprep.subr.bf16.mxu0 0
        %1136 = vmatpush1.bf16.msra.mxu0 0
        %1137 = vmatprep.subr.bf16.mxu0 0
        %1138 = vmatpush1.bf16.msra.mxu0 0
        %1139 = vmatprep.subr.bf16.mxu0 0
        %1140 = vmatpush1.bf16.msra.mxu0 0
        %1141 = vmatprep.subr.bf16.mxu0 0
        %1142 = vmatpush1.bf16.msra.mxu0 0
        %1143 = vmatprep.subr.bf16.mxu0 0
        %1144 = vmatpush1.bf16.msra.mxu0 0
        %1145 = vmatprep.mubr.bf16.mxu0 0
        %1146 = vmatmul.mubr.bf16.gmra.mrb[0].mxu0 %v455
        %v1147 = vpop.f32.mrb[0].mxu0
        %v1148 = vadd.f32 0.0, %v1147
        %v1149 = vpop.f32.mrb[0].mxu0
        %v1150 = vpop.f32.mrb[0].mxu0
        %v1151 = vpop.f32.mrb[0].mxu0
        %1152 = vdwg.mxu0
        %v1153 = vpack.c.bf16 %v1148, %v1148
        %s1154 = scalar_lea.vmem %s403, 12 [#allocation13]
        %1155 = vst.msk [vmem:[%s1154] sm:$0xf] %vm498, %v1153
        %s1156 = sand.u32 %s186, 1
        %s1157 = scalar_lea.sflag [#allocation4], %s1156
        %s1158 = sand.u32 %s186, 1
        %s1159 = smul.addr %s1158, 16
        %s1160 = scalar_lea.vmem [#allocation10], %s1159
        %s1161 = sand.u32 %s31, 1
        %s1162 = scalar_lea.sflag [#allocation12], %s1161
        %s1163 = sand.u32 %s214, 1
        %s1164 = smul.addr %s1163, 16
        %s1165 = scalar_lea.vmem [#allocation11], %s1164
        %s1166 = sand.u32 %s31, 1
        %s1167 = scalar_lea.sflag [#allocation12], %s1166
        %s1168 = sand.u32 %s242, 1
        %s1169 = smul.addr %s1168, 16
        %s1170 = scalar_lea.vmem [#allocation13], %s1169
        // Predicated region
        $region61: #{tpu_custom_call.1} parent=43 // pred_check
          %p1171 = pneg %p196
        $region62: #{tpu_custom_call.1} parent=43 // pred_check_branch
          %1173 = sbr.rel (%p1171) target = $region64
        $region63: #{tpu_custom_call.1} parent=43 // pred_region
          %s1175 = ssub.s32 256, 256
          %1176 = vsyncadd %s1157, %s1175
          %s1177 = smul.addr %s35, 4
          %s1178 = sadd.s32 %s36, %s1177
          %s1179 = smul.addr %s1178, 64
          %s1180 = scalar_lea.hbm %s6, %s1179
          %s1181 = sshll.u32 %s1160, 4
          %s1182 = int_to_ptr.vmem [resolvable:$true] %s1181
          %1187 = dma.vmem_to_hbm [thread:$0]  %s1182, 256, %s1180, %s1157, 64, 64, 4
        $region64: #{tpu_custom_call.1} parent=43 // pred_fallthru
          _
        // Predicated region
        $region65: #{tpu_custom_call.1} parent=43 // pred_check
          %p1188 = pneg %p224
        $region66: #{tpu_custom_call.1} parent=43 // pred_check_branch
          %1190 = sbr.rel (%p1188) target = $region68
        $region67: #{tpu_custom_call.1} parent=43 // pred_region
          %s1192 = ssub.s32 256, 256
          %1193 = vsyncadd %s1162, %s1192
          %s1194 = smul.addr %s35, 4
          %s1195 = sadd.s32 %s36, %s1194
          %s1196 = smul.addr %s1195, 64
          %s1197 = scalar_lea.hbm %s7, %s1196
          %s1198 = sshll.u32 %s1165, 4
          %s1199 = int_to_ptr.vmem [resolvable:$true] %s1198
          %1204 = dma.vmem_to_hbm [thread:$0]  %s1199, 256, %s1197, %s1162, 64, 64, 4
        $region68: #{tpu_custom_call.1} parent=43 // pred_fallthru
          _
        // Predicated region
        $region69: #{tpu_custom_call.1} parent=43 // pred_check
          %p1205 = pneg %p252
        $region70: #{tpu_custom_call.1} parent=43 // pred_check_branch
          %1207 = sbr.rel (%p1205) target = $region72
        $region71: #{tpu_custom_call.1} parent=43 // pred_region
          %s1209 = ssub.s32 256, 256
          %1210 = vsyncadd %s1167, %s1209
          %s1211 = smul.addr %s35, 4
          %s1212 = sadd.s32 %s36, %s1211
          %s1213 = smul.addr %s1212, 64
          %s1214 = scalar_lea.hbm %s8, %s1213
          %s1215 = sshll.u32 %s1170, 4
          %s1216 = int_to_ptr.vmem [resolvable:$true] %s1215
          %1221 = dma.vmem_to_hbm [thread:$0]  %s1216, 256, %s1214, %s1167, 64, 64, 4
        $region72: #{tpu_custom_call.1} parent=43 // pred_fallthru
          _
      $region44: #{tpu_custom_call.1} parent=5 // pred_fallthru
        _
      %p1222 = scmp.le.s32.totalorder 2, %s26
      // Predicated region
      $region73: #{tpu_custom_call.1} parent=5 // pred_check
        %p1223 = pneg %p1222
      $region74: #{tpu_custom_call.1} parent=5 // pred_check_branch
        %1225 = sbr.rel (%p1223) target = $region76
      $region75: #{tpu_custom_call.1} parent=5 // pred_region
        %s1226 = ssub.s32 %s26, 2
        // Predicated region
        $region77: #{tpu_custom_call.1} parent=75 // pred_check
          %p1227 = pneg %p202
        $region78: #{tpu_custom_call.1} parent=75 // pred_check_branch
          %1229 = sbr.rel (%p1227) target = $region80
        $region79: #{tpu_custom_call.1} parent=75 // pred_region
          %s1230 = sand.u32 %s187, 1
          %s1231 = scalar_lea.sflag [#allocation4], %s1230
          %s1232 = sand.u32 %s187, 1
          %s1233 = smul.addr %s1232, 16
          %s1234 = scalar_lea.vmem [#allocation10], %s1233
          %1235 = dma.done %s1231, 256
        $region80: #{tpu_custom_call.1} parent=75 // pred_fallthru
          _
        // Predicated region
        $region81: #{tpu_custom_call.1} parent=75 // pred_check
          %p1236 = pneg %p230
        $region82: #{tpu_custom_call.1} parent=75 // pred_check_branch
          %1238 = sbr.rel (%p1236) target = $region84
        $region83: #{tpu_custom_call.1} parent=75 // pred_region
          %s1239 = sand.u32 %s32, 1
          %s1240 = scalar_lea.sflag [#allocation12], %s1239
          %s1241 = sand.u32 %s215, 1
          %s1242 = smul.addr %s1241, 16
          %s1243 = scalar_lea.vmem [#allocation11], %s1242
          %1244 = dma.done %s1240, 256
        $region84: #{tpu_custom_call.1} parent=75 // pred_fallthru
          _
        // Predicated region
        $region85: #{tpu_custom_call.1} parent=75 // pred_check
          %p1245 = pneg %p258
        $region86: #{tpu_custom_call.1} parent=75 // pred_check_branch
          %1247 = sbr.rel (%p1245) target = $region88
        $region87: #{tpu_custom_call.1} parent=75 // pred_region
          %s1248 = sand.u32 %s32, 1
          %s1249 = scalar_lea.sflag [#allocation12], %s1248
          %s1250 = sand.u32 %s243, 1
          %s1251 = smul.addr %s1250, 16
          %s1252 = scalar_lea.vmem [#allocation13], %s1251
          %1253 = dma.done %s1249, 256
        $region88: #{tpu_custom_call.1} parent=75 // pred_fallthru
          _
      $region76: #{tpu_custom_call.1} parent=5 // pred_fallthru
        _
    $region6: #{tpu_custom_call.1} parent=1 // loop_footer
      %s30 = sadd.s32 1, %s26
    $region7: #{tpu_custom_call.1} parent=1 // loop_footer_branch
      %25 = sbr.rel target = $region3
    $region8: #{tpu_custom_call.1} parent=1 // loop_exit
      _
    %1254 = vsyncpa [#allocation3], 1
    %s1255 = scalar_lea.sflag [#allocation3], 1
    %1256 = vsyncpa %s1255, 1
    %1257 = vsyncpa [#allocation6], 1
    %1258 = vsyncpa [#allocation9], 1
    %1259 = vsyncpa [#allocation4], 1
    %s1260 = scalar_lea.sflag [#allocation4], 1
    %1261 = vsyncpa %s1260, 1
    %1262 = vsyncpa [#allocation12], 1
    %s1263 = scalar_lea.sflag [#allocation12], 1
    %1264 = vsyncpa %s1263, 1

</llo_original>
